<compile_context>
chip_gen: v7x
topology: tpu7x:2x2x1
jax: 0.10.0
libtpu: 0.0.40
codegen_flags: <defaults>
</compile_context>

<pallas_src>
import math

import jax
import jax.numpy as jnp
from jax import lax
from jax.experimental import pallas as pl
from jax.experimental.pallas import tpu as pltpu

EPS = 1e-5
VMEM_LIMIT = 64 * 1024 * 1024


def _layernorm(x, g, b):
    mu = jnp.mean(x, axis=-1, keepdims=True)
    var = jnp.mean((x - mu) ** 2, axis=-1, keepdims=True)
    return (x - mu) * lax.rsqrt(var + EPS) * g + b


def _wspec(shape):
    # shared weight: same block for every grid point.
    n = len(shape)
    return pl.BlockSpec(shape, lambda *args: (0,) * n)


def _bwspec(shape):
    # per-branch stacked weight (leading axis 2), indexed by the branch grid axis.
    n = len(shape)
    return pl.BlockSpec((None,) + tuple(shape[1:]),
                        lambda br, b: (br,) + (0,) * (n - 1))


def _pick_chunk(L):
    for t in (8, 4, 2, 1):
        if L % t == 0:
            return t
    return 1


def _pick_seq_tile(L, cap=512):
    for t in range(min(L, cap), 7, -1):
        if L % t == 0 and t % 8 == 0:
            return t
    return L


# --------------- kernel 1: fused pre-stage + Mamba branch (grid = (2, B)) ----
def _branch_kernel(x_ref, ln_g_ref, ln_b_ref, wmT_ref, bm_ref,
                   wbrT_ref, bbr_ref, winT_ref, wconv_ref, bconv_ref,
                   wxT_ref, wdtT_ref, bdt_ref, alogT_ref, dvec_ref, woutT_ref,
                   o_ref,
                   xp_s, xc_s, dt_s, bc_s, zs_s, y_s, dbx_s, hall_s):
    L, H = x_ref.shape
    d_conv, d_inner = wconv_ref.shape
    d_state = alogT_ref.shape[0]
    dt_rank = wdtT_ref.shape[0]
    T = dbx_s.shape[0]
    nch = L // T

    # ----- fused "pre" stage: LayerNorm -> lin_mamba -> branch 1x1 conv + SiLU
    xn = _layernorm(x_ref[...], ln_g_ref[...], ln_b_ref[...])
    m = jnp.dot(xn, wmT_ref[...], preferred_element_type=jnp.float32) + bm_ref[...]
    u = jax.nn.silu(
        jnp.dot(m, wbrT_ref[...], preferred_element_type=jnp.float32) + bbr_ref[...])

    # ----- Mamba in_proj: one wide matmul producing [x | z] -------------------
    xz = jnp.dot(u, winT_ref[...], preferred_element_type=jnp.float32)  # (L, 2*d_inner)
    x_in = xz[:, :d_inner]
    zs_s[...] = jax.nn.silu(xz[:, d_inner:])

    # ----- causal depthwise conv1d (left zero padding) + SiLU -----------------
    xp_s[0:d_conv - 1, :] = jnp.zeros((d_conv - 1, d_inner), jnp.float32)
    xp_s[d_conv - 1:, :] = x_in
    xc = x_in * wconv_ref[d_conv - 1:d_conv, :]
    for k in range(d_conv - 1):
        xc = xc + xp_s[k:k + L, :] * wconv_ref[k:k + 1, :]
    xc = jax.nn.silu(xc + bconv_ref[...])
    xc_s[...] = xc

    # ----- SSM parameter projections: one wide matmul for [dt_lo | B | C] -----
    xpar = jnp.dot(xc, wxT_ref[...], preferred_element_type=jnp.float32)
    dt_lo = xpar[:, :dt_rank]
    bc_s[...] = xpar[:, dt_rank:]
    dt_s[...] = jax.nn.softplus(
        jnp.dot(dt_lo, wdtT_ref[...], preferred_element_type=jnp.float32) + bdt_ref[...])

    # ----- chunked selective scan ---------------------------------------------
    AT = -jnp.exp(alogT_ref[...])                      # (d_state, d_inner)

    def chunk_body(c, h):
        base = c * T
        if not isinstance(base, int):
            base = pl.multiple_of(base, T)
        dt_c = dt_s[pl.ds(base, T), :]                 # (T, d_inner)
        xc_c = xc_s[pl.ds(base, T), :]                 # (T, d_inner)
        bc_c = bc_s[pl.ds(base, T), :]                 # (T, 2*d_state)
        dtx_c = dt_c * xc_c

        # per-chunk dBx (lane-broadcast builds, no transposes, only 128 KiB):
        # dbx_s[t, s, :] = B[t, s] * dt[t, :] * xc[t, :]
        for s in range(d_state):
            dbx_s[:, s, :] = bc_c[:, s:s + 1] * dtx_c

        # recurrence: only the (d_state, d_inner) h update is serial; the exp
        # does not depend on h, so it pipelines across the unrolled steps.
        for t in range(T):
            dA_t = jnp.exp(AT * dt_c[t:t + 1, :])      # (d_state, d_inner)
            h = dA_t * h + dbx_s[t]
            hall_s[:, t, :] = h                        # state history for C.h

        # batched y for the whole chunk: y[t, :] = sum_s C[t, s] * h_t[s, :]
        y_c = jnp.zeros((T, d_inner), jnp.float32)
        for s in range(d_state):
            y_c = y_c + bc_c[:, d_state + s:d_state + s + 1] * hall_s[s]
        y_s[pl.ds(base, T), :] = y_c
        return h

    h0 = jnp.zeros((d_state, d_inner), jnp.float32)
    if nch == 1:
        chunk_body(0, h0)
    else:
        lax.fori_loop(0, nch, chunk_body, h0, unroll=2)

    # ----- epilogue: D skip, silu(z) gate, out_proj as one big matmul ---------
    fullv = (y_s[...] + xc_s[...] * dvec_ref[...]) * zs_s[...]
    o_ref[...] = jnp.dot(fullv, woutT_ref[...], preferred_element_type=jnp.float32)


def _mamba_branches_call(x_blh, pp):
    B, L, H = x_blh.shape
    d_conv, d_inner = pp["wconv"].shape[1:]
    d_state = pp["alogT"].shape[1]
    T = _pick_chunk(L)

    xspec = pl.BlockSpec((None, L, H), lambda br, b: (b, 0, 0))
    ospec = pl.BlockSpec((None, None, L, H), lambda br, b: (br, b, 0, 0))

    return pl.pallas_call(
        _branch_kernel,
        out_shape=jax.ShapeDtypeStruct((2, B, L, H), jnp.float32),
        grid=(2, B),
        in_specs=[
            xspec,
            _wspec(pp["ln_g"].shape), _wspec(pp["ln_b"].shape),
            _wspec(pp["wmT"].shape), _wspec(pp["bm"].shape),
            _bwspec(pp["wbrT"].shape), _bwspec(pp["bbr"].shape),
            _bwspec(pp["winT"].shape),
            _bwspec(pp["wconv"].shape), _bwspec(pp["bconv"].shape),
            _bwspec(pp["wxT"].shape),
            _bwspec(pp["wdtT"].shape), _bwspec(pp["bdt"].shape),
            _bwspec(pp["alogT"].shape), _bwspec(pp["dvec"].shape),
            _bwspec(pp["woutT"].shape),
        ],
        out_specs=ospec,
        scratch_shapes=[
            pltpu.VMEM((L + d_conv - 1, d_inner), jnp.float32),   # xp_s (conv pad)
            pltpu.VMEM((L, d_inner), jnp.float32),                # xc_s
            pltpu.VMEM((L, d_inner), jnp.float32),                # dt_s
            pltpu.VMEM((L, 2 * d_state), jnp.float32),            # bc_s  [B | C]
            pltpu.VMEM((L, d_inner), jnp.float32),                # zs_s  silu(z)
            pltpu.VMEM((L, d_inner), jnp.float32),                # y_s
            pltpu.VMEM((T, d_state, d_inner), jnp.float32),       # dbx_s (per chunk)
            pltpu.VMEM((d_state, T, d_inner), jnp.float32),       # hall_s (per chunk)
        ],
        compiler_params=pltpu.CompilerParams(
            dimension_semantics=("parallel", "parallel"),
            vmem_limit_bytes=VMEM_LIMIT),
    )(x_blh, pp["ln_g"], pp["ln_b"], pp["wmT"], pp["bm"],
      pp["wbrT"], pp["bbr"], pp["winT"], pp["wconv"], pp["bconv"],
      pp["wxT"], pp["wdtT"], pp["bdt"], pp["alogT"], pp["dvec"], pp["woutT"])


# --------------- kernel 2: gate + merge branches (with in-VMEM flip) + out ----
def _post_kernel(x_ref, mf_ref, mb_ref, wgT_ref, bg_ref, woT_ref, bo_ref,
                 ln_g_ref, ln_b_ref, o_ref):
    Tc = mb_ref.shape[0]
    # reverse the backward-branch rows (sequence flip) with a tiny anti-identity
    # matmul; the mirrored sequence tile is already selected by the index_map.
    ridx = lax.broadcasted_iota(jnp.int32, (Tc, Tc), 0)
    cidx = lax.broadcasted_iota(jnp.int32, (Tc, Tc), 1)
    rev = (ridx + cidx == Tc - 1).astype(jnp.float32)
    mb_rev = jnp.dot(rev, mb_ref[...], preferred_element_type=jnp.float32)

    xn = _layernorm(x_ref[...], ln_g_ref[...], ln_b_ref[...])
    gate = jax.nn.silu(
        jnp.dot(xn, wgT_ref[...], preferred_element_type=jnp.float32) + bg_ref[...])
    mix = (mf_ref[...] + mb_rev) * gate
    y = jnp.dot(mix, woT_ref[...], preferred_element_type=jnp.float32) + bo_ref[...]
    o_ref[...] = _layernorm(y, ln_g_ref[...], ln_b_ref[...])


def _post_call(x_blh, mo, pp):
    B, L, H = x_blh.shape
    Tc = _pick_seq_tile(L)
    S = L // Tc

    xspec = pl.BlockSpec((None, Tc, H), lambda b, s: (b, s, 0))
    mfspec = pl.BlockSpec((None, None, Tc, H), lambda b, s: (0, b, s, 0))
    mbspec = pl.BlockSpec((None, None, Tc, H), lambda b, s, _S=S: (1, b, _S - 1 - s, 0))
    return pl.pallas_call(
        _post_kernel,
        out_shape=jax.ShapeDtypeStruct((B, L, H), jnp.float32),
        grid=(B, S),
        in_specs=[xspec, mfspec, mbspec,
                  _wspec(pp["wgT"].shape), _wspec(pp["bg"].shape),
                  _wspec(pp["woT"].shape), _wspec(pp["bo"].shape),
                  _wspec(pp["ln_g"].shape), _wspec(pp["ln_b"].shape)],
        out_specs=pl.BlockSpec((None, Tc, H), lambda b, s: (b, s, 0)),
        compiler_params=pltpu.CompilerParams(
            dimension_semantics=("parallel", "parallel"),
            vmem_limit_bytes=VMEM_LIMIT),
    )(x_blh, mo, mo,
      pp["wgT"], pp["bg"], pp["woT"], pp["bo"], pp["ln_g"], pp["ln_b"])


# ------------------------- weight packing (wide matmuls) ----------------------
def _prepare_params(p):
    def branch_pack(bp):
        return dict(
            winT=jnp.concatenate([bp["winxT"], bp["winzT"]], axis=1),
            wxT=jnp.concatenate([bp["wxdtT"], bp["wxBT"], bp["wxCT"]], axis=1),
            wconv=bp["wconv"], bconv=bp["bconv"],
            wdtT=bp["wdtT"], bdt=bp["bdt"],
            alogT=bp["alogT"], dvec=bp["dvec"], woutT=bp["woutT"],
        )

    f = branch_pack(p["mamba_f"])
    b = branch_pack(p["mamba_b"])
    stk = lambda k: jnp.stack([f[k], b[k]], axis=0)
    return dict(
        ln_g=p["ln_g"], ln_b=p["ln_b"],
        wmT=p["wmT"], bm=p["bm"],
        wgT=p["wgT"], bg=p["bg"],
        woT=p["woT"], bo=p["bo"],
        wbrT=jnp.stack([p["wfT"], p["wbT_flip"]], axis=0),
        bbr=jnp.stack([p["bf"], p["bb"]], axis=0),
        winT=stk("winT"), wconv=stk("wconv"), bconv=stk("bconv"),
        wxT=stk("wxT"), wdtT=stk("wdtT"), bdt=stk("bdt"),
        alogT=stk("alogT"), dvec=stk("dvec"), woutT=stk("woutT"),
    )


# ----------------------------------- forward ----------------------------------
def bit_mamsleep_forward(x, params):
    # x: (B, H, L) like the PyTorch module (NCW)
    x_blh = jnp.transpose(x, (0, 2, 1)).astype(jnp.float32)   # (B, L, H)
    pp = _prepare_params(params)
    mo = _mamba_branches_call(x_blh, pp)                      # (2, B, L, H)
    out_blh = _post_call(x_blh, mo, pp)                       # (B, L, H)
    return jnp.transpose(out_blh, (0, 2, 1))                  # back to (B, H, L)


# ------------------------------- parameter init -------------------------------
def init_params(key, H):
    d_inner = 2 * H
    d_state = 16
    d_conv = 4
    dt_rank = max(1, math.ceil(H / 16))
    keys = list(jax.random.split(key, 40))
    it = iter(keys)

    def w(shape, scale=0.1):
        return scale * jax.random.normal(next(it), shape, dtype=jnp.float32)

    def mamba_params():
        alogT = (jnp.log(jnp.arange(1, d_state + 1, dtype=jnp.float32))[:, None]
                 * jnp.ones((1, d_inner), jnp.float32))
        return dict(
            winxT=w((H, d_inner)), winzT=w((H, d_inner)),
            wconv=w((d_conv, d_inner)), bconv=w((1, d_inner)),
            wxdtT=w((d_inner, dt_rank)),
            wxBT=w((d_inner, d_state)), wxCT=w((d_inner, d_state)),
            wdtT=w((dt_rank, d_inner)), bdt=w((1, d_inner)),
            alogT=alogT, dvec=jnp.ones((1, d_inner), jnp.float32),
            woutT=w((d_inner, H)),
        )

    Wm, Wf, Wb, Wg, Wo = w((H, H)), w((H, H)), w((H, H)), w((H, H)), w((H, H))
    params = dict(
        ln_g=jnp.ones((1, H), jnp.float32),
        ln_b=jnp.zeros((1, H), jnp.float32),
        wmT=Wm.T, bm=w((1, H)),
        wfT=Wf.T, bf=w((1, H)),
        wbT_flip=jnp.flip(Wb, axis=1).T,   # conv_b applied to channel-flipped input
        bb=w((1, H)),
        wgT=Wg.T, bg=w((1, H)),
        woT=Wo.T, bo=w((1, H)),
        mamba_f=mamba_params(),
        mamba_b=mamba_params(),
    )
    return params


# ------------------------------ pure-JAX reference ----------------------------
def reference_forward(x, p):
    xb = jnp.transpose(x, (0, 2, 1))

    def ln(v):
        mu = v.mean(-1, keepdims=True)
        var = ((v - mu) ** 2).mean(-1, keepdims=True)
        return (v - mu) / jnp.sqrt(var + EPS) * p["ln_g"] + p["ln_b"]

    xn = ln(xb)
    m = xn @ p["wmT"] + p["bm"]
    mf = jax.nn.silu(m @ p["wfT"] + p["bf"])
    mb = jax.nn.silu(m @ p["wbT_flip"] + p["bb"])
    gate = jax.nn.silu(xn @ p["wgT"] + p["bg"])

    def mamba_ref(u, mp):
        B, L, _ = u.shape
        x_in = u @ mp["winxT"]
        z = u @ mp["winzT"]
        d_conv = mp["wconv"].shape[0]
        xp = jnp.pad(x_in, ((0, 0), (d_conv - 1, 0), (0, 0)))
        xc = sum(xp[:, k:k + L, :] * mp["wconv"][k] for k in range(d_conv))
        xc = jax.nn.silu(xc + mp["bconv"])
        dt = jax.nn.softplus((xc @ mp["wxdtT"]) @ mp["wdtT"] + mp["bdt"])
        Bm = xc @ mp["wxBT"]
        Cm = xc @ mp["wxCT"]
        AT = -jnp.exp(mp["alogT"])

        def scan_one(xc_b, dt_b, B_b, C_b):
            def step(h, inp):
                xct, dtt, Bt, Ct = inp
                dA = jnp.exp(AT * dtt[None, :])
                h = dA * h + Bt[:, None] * (dtt * xct)[None, :]
                return h, Ct @ h
            _, ys = lax.scan(step, jnp.zeros_like(AT), (xc_b, dt_b, B_b, C_b))
            return ys

        ys = jax.vmap(scan_one)(xc, dt, Bm, Cm)
        y = (ys + xc * mp["dvec"]) * jax.nn.silu(z)
        return y @ mp["woutT"]

    mf_o = mamba_ref(mf, p["mamba_f"])
    mb_o = jnp.flip(mamba_ref(mb, p["mamba_b"]), axis=1)
    s = (mf_o + mb_o) * gate
    y = ln(s @ p["woT"] + p["bo"])
    return jnp.transpose(y, (0, 2, 1))


if __name__ == "__main__":
    B, H, L = 2, 32, 8          # batch, hidden_dim, sequence length
    key = jax.random.PRNGKey(0)
    kx, kp = jax.random.split(key)
    x = jax.random.normal(kx, (B, H, L), dtype=jnp.float32)   # NCW like PyTorch
    params = init_params(kp, H)

    fwd = jax.jit(bit_mamsleep_forward)
    out = jax.block_until_ready(fwd(x, params))

    assert out.shape == (B, H, L)
    assert bool(jnp.all(jnp.isfinite(out)))

    ref = jax.block_until_ready(reference_forward(x, params))
    max_err = float(jnp.max(jnp.abs(out - ref)))
    assert max_err < 1e-2, f"mismatch vs reference: {max_err}"

    print("KERNEL_OK")
</pallas_src>

<mosaic_0001>
module attributes {stable_mosaic.version = 11 : i64} {
  func.func @_post_kernel(%arg0: i32, %arg1: i32, %arg2: memref<1x8x32xf32, #tpu.memory_space<vmem>>, %arg3: memref<1x1x8x32xf32, #tpu.memory_space<vmem>>, %arg4: memref<1x1x8x32xf32, #tpu.memory_space<vmem>>, %arg5: memref<32x32xf32, #tpu.memory_space<vmem>>, %arg6: memref<1x32xf32, #tpu.memory_space<vmem>>, %arg7: memref<32x32xf32, #tpu.memory_space<vmem>>, %arg8: memref<1x32xf32, #tpu.memory_space<vmem>>, %arg9: memref<1x32xf32, #tpu.memory_space<vmem>>, %arg10: memref<1x32xf32, #tpu.memory_space<vmem>>, %arg11: memref<1x8x32xf32, #tpu.memory_space<vmem>>) attributes {dimension_semantics = [#tpu.dimension_semantics<parallel>, #tpu.dimension_semantics<parallel>], iteration_bounds = array<i64: 2, 1>, scalar_prefetch = 0 : i64, scratch_operands = 0 : i64, tpu.core_type = #tpu.core_type<tc>, window_params = [{transform_indices = @transform_0, window_bounds = array<i64: 1, 8, 32>}, {transform_indices = @transform_1, window_bounds = array<i64: 1, 1, 8, 32>}, {transform_indices = @transform_2, window_bounds = array<i64: 1, 1, 8, 32>}, {pipeline_mode = #tpu.pipeline_mode<synchronous>, transform_indices = @transform_3, window_bounds = array<i64: 32, 32>}, {pipeline_mode = #tpu.pipeline_mode<synchronous>, transform_indices = @transform_4, window_bounds = array<i64: 1, 32>}, {pipeline_mode = #tpu.pipeline_mode<synchronous>, transform_indices = @transform_5, window_bounds = array<i64: 32, 32>}, {pipeline_mode = #tpu.pipeline_mode<synchronous>, transform_indices = @transform_6, window_bounds = array<i64: 1, 32>}, {pipeline_mode = #tpu.pipeline_mode<synchronous>, transform_indices = @transform_7, window_bounds = array<i64: 1, 32>}, {pipeline_mode = #tpu.pipeline_mode<synchronous>, transform_indices = @transform_8, window_bounds = array<i64: 1, 32>}, {transform_indices = @transform_9, window_bounds = array<i64: 1, 8, 32>}]} {
    %0 = tpu.iota {dimensions = array<i32: 0>} : vector<8x8xi32>
    %1 = tpu.iota {dimensions = array<i32: 1>} : vector<8x8xi32>
    %2 = arith.addi %0, %1 : vector<8x8xi32>
    %c7_i32 = arith.constant 7 : i32
    %3 = vector.broadcast %c7_i32 : i32 to vector<8x8xi32>
    %4 = arith.cmpi eq, %2, %3 : vector<8x8xi32>
    %5 = arith.extui %4 : vector<8x8xi1> to vector<8x8xi32>
    %6 = arith.sitofp %5 : vector<8x8xi32> to vector<8x8xf32>
    %c0 = arith.constant 0 : index
    %c0_0 = arith.constant 0 : index
    %c0_1 = arith.constant 0 : index
    %c0_2 = arith.constant 0 : index
    %7 = vector.load %arg4[%c0, %c0_0, %c0_1, %c0_2] : memref<1x1x8x32xf32, #tpu.memory_space<vmem>>, vector<1x1x8x32xf32>
    %8 = vector.shape_cast %7 : vector<1x1x8x32xf32> to vector<8x32xf32>
    %cst = arith.constant dense<0.000000e+00> : vector<8x32xf32>
    %9 = tpu.matmul %6, %8, %cst {dimension_numbers = #tpu.dot_dimension_numbers<[1], [0], [0], [1], [0, 0, 1, 1], [], []>} : vector<8x8xf32>, vector<8x32xf32>, vector<8x32xf32> -> vector<8x32xf32>
    %c0_3 = arith.constant 0 : index
    %c0_4 = arith.constant 0 : index
    %c0_5 = arith.constant 0 : index
    %10 = vector.load %arg2[%c0_3, %c0_4, %c0_5] : memref<1x8x32xf32, #tpu.memory_space<vmem>>, vector<1x8x32xf32>
    %11 = vector.shape_cast %10 : vector<1x8x32xf32> to vector<8x32xf32>
    %c0_6 = arith.constant 0 : index
    %c0_7 = arith.constant 0 : index
    %12 = vector.load %arg9[%c0_6, %c0_7] : memref<1x32xf32, #tpu.memory_space<vmem>>, vector<1x32xf32>
    %c0_8 = arith.constant 0 : index
    %c0_9 = arith.constant 0 : index
    %13 = vector.load %arg10[%c0_8, %c0_9] : memref<1x32xf32, #tpu.memory_space<vmem>>, vector<1x32xf32>
    %cst_10 = arith.constant dense<0.000000e+00> : vector<8xf32>
    %14 = vector.multi_reduction <add>, %11, %cst_10 [1] : vector<8x32xf32> to vector<8xf32>
    %15 = vector.shape_cast %14 : vector<8xf32> to vector<8x1xf32>
    %cst_11 = arith.constant 3.200000e+01 : f32
    %16 = vector.broadcast %cst_11 : f32 to vector<8x1xf32>
    %17 = arith.divf %15, %16 : vector<8x1xf32>
    %18 = vector.broadcast %17 : vector<8x1xf32> to vector<8x32xf32>
    %19 = arith.subf %11, %18 : vector<8x32xf32>
    %20 = arith.mulf %19, %19 : vector<8x32xf32>
    %cst_12 = arith.constant dense<0.000000e+00> : vector<8xf32>
    %21 = vector.multi_reduction <add>, %20, %cst_12 [1] : vector<8x32xf32> to vector<8xf32>
    %22 = vector.shape_cast %21 : vector<8xf32> to vector<8x1xf32>
    %cst_13 = arith.constant 3.200000e+01 : f32
    %23 = vector.broadcast %cst_13 : f32 to vector<8x1xf32>
    %24 = arith.divf %22, %23 : vector<8x1xf32>
    %25 = vector.broadcast %17 : vector<8x1xf32> to vector<8x32xf32>
    %26 = arith.subf %11, %25 : vector<8x32xf32>
    %cst_14 = arith.constant 9.99999974E-6 : f32
    %27 = vector.broadcast %cst_14 : f32 to vector<8x1xf32>
    %28 = arith.addf %24, %27 : vector<8x1xf32>
    %29 = math.rsqrt %28 : vector<8x1xf32>
    %30 = vector.broadcast %29 : vector<8x1xf32> to vector<8x32xf32>
    %31 = arith.mulf %26, %30 : vector<8x32xf32>
    %32 = vector.broadcast %12 : vector<1x32xf32> to vector<8x32xf32>
    %33 = arith.mulf %31, %32 : vector<8x32xf32>
    %34 = vector.broadcast %13 : vector<1x32xf32> to vector<8x32xf32>
    %35 = arith.addf %33, %34 : vector<8x32xf32>
    %c0_15 = arith.constant 0 : index
    %c0_16 = arith.constant 0 : index
    %36 = vector.load %arg5[%c0_15, %c0_16] : memref<32x32xf32, #tpu.memory_space<vmem>>, vector<32x32xf32>
    %cst_17 = arith.constant dense<0.000000e+00> : vector<8x32xf32>
    %37 = tpu.matmul %35, %36, %cst_17 {dimension_numbers = #tpu.dot_dimension_numbers<[1], [0], [0], [1], [0, 0, 1, 1], [], []>} : vector<8x32xf32>, vector<32x32xf32>, vector<8x32xf32> -> vector<8x32xf32>
    %c0_18 = arith.constant 0 : index
    %c0_19 = arith.constant 0 : index
    %38 = vector.load %arg6[%c0_18, %c0_19] : memref<1x32xf32, #tpu.memory_space<vmem>>, vector<1x32xf32>
    %39 = vector.broadcast %38 : vector<1x32xf32> to vector<8x32xf32>
    %40 = arith.addf %37, %39 : vector<8x32xf32>
    %41 = arith.negf %40 : vector<8x32xf32>
    %42 = math.exp %41 : vector<8x32xf32>
    %cst_20 = arith.constant 1.000000e+00 : f32
    %43 = vector.broadcast %cst_20 : f32 to vector<8x32xf32>
    %44 = arith.addf %43, %42 : vector<8x32xf32>
    %45 = arith.divf %43, %44 : vector<8x32xf32>
    %46 = arith.mulf %40, %45 : vector<8x32xf32>
    %c0_21 = arith.constant 0 : index
    %c0_22 = arith.constant 0 : index
    %c0_23 = arith.constant 0 : index
    %c0_24 = arith.constant 0 : index
    %47 = vector.load %arg3[%c0_21, %c0_22, %c0_23, %c0_24] : memref<1x1x8x32xf32, #tpu.memory_space<vmem>>, vector<1x1x8x32xf32>
    %48 = vector.shape_cast %47 : vector<1x1x8x32xf32> to vector<8x32xf32>
    %49 = arith.addf %48, %9 : vector<8x32xf32>
    %50 = arith.mulf %49, %46 : vector<8x32xf32>
    %c0_25 = arith.constant 0 : index
    %c0_26 = arith.constant 0 : index
    %51 = vector.load %arg7[%c0_25, %c0_26] : memref<32x32xf32, #tpu.memory_space<vmem>>, vector<32x32xf32>
    %cst_27 = arith.constant dense<0.000000e+00> : vector<8x32xf32>
    %52 = tpu.matmul %50, %51, %cst_27 {dimension_numbers = #tpu.dot_dimension_numbers<[1], [0], [0], [1], [0, 0, 1, 1], [], []>} : vector<8x32xf32>, vector<32x32xf32>, vector<8x32xf32> -> vector<8x32xf32>
    %c0_28 = arith.constant 0 : index
    %c0_29 = arith.constant 0 : index
    %53 = vector.load %arg8[%c0_28, %c0_29] : memref<1x32xf32, #tpu.memory_space<vmem>>, vector<1x32xf32>
    %54 = vector.broadcast %53 : vector<1x32xf32> to vector<8x32xf32>
    %55 = arith.addf %52, %54 : vector<8x32xf32>
    %c0_30 = arith.constant 0 : index
    %c0_31 = arith.constant 0 : index
    %56 = vector.load %arg9[%c0_30, %c0_31] : memref<1x32xf32, #tpu.memory_space<vmem>>, vector<1x32xf32>
    %c0_32 = arith.constant 0 : index
    %c0_33 = arith.constant 0 : index
    %57 = vector.load %arg10[%c0_32, %c0_33] : memref<1x32xf32, #tpu.memory_space<vmem>>, vector<1x32xf32>
    %cst_34 = arith.constant dense<0.000000e+00> : vector<8xf32>
    %58 = vector.multi_reduction <add>, %55, %cst_34 [1] : vector<8x32xf32> to vector<8xf32>
    %59 = vector.shape_cast %58 : vector<8xf32> to vector<8x1xf32>
    %cst_35 = arith.constant 3.200000e+01 : f32
    %60 = vector.broadcast %cst_35 : f32 to vector<8x1xf32>
    %61 = arith.divf %59, %60 : vector<8x1xf32>
    %62 = vector.broadcast %61 : vector<8x1xf32> to vector<8x32xf32>
    %63 = arith.subf %55, %62 : vector<8x32xf32>
    %64 = arith.mulf %63, %63 : vector<8x32xf32>
    %cst_36 = arith.constant dense<0.000000e+00> : vector<8xf32>
    %65 = vector.multi_reduction <add>, %64, %cst_36 [1] : vector<8x32xf32> to vector<8xf32>
    %66 = vector.shape_cast %65 : vector<8xf32> to vector<8x1xf32>
    %cst_37 = arith.constant 3.200000e+01 : f32
    %67 = vector.broadcast %cst_37 : f32 to vector<8x1xf32>
    %68 = arith.divf %66, %67 : vector<8x1xf32>
    %69 = vector.broadcast %61 : vector<8x1xf32> to vector<8x32xf32>
    %70 = arith.subf %55, %69 : vector<8x32xf32>
    %cst_38 = arith.constant 9.99999974E-6 : f32
    %71 = vector.broadcast %cst_38 : f32 to vector<8x1xf32>
    %72 = arith.addf %68, %71 : vector<8x1xf32>
    %73 = math.rsqrt %72 : vector<8x1xf32>
    %74 = vector.broadcast %73 : vector<8x1xf32> to vector<8x32xf32>
    %75 = arith.mulf %70, %74 : vector<8x32xf32>
    %76 = vector.broadcast %56 : vector<1x32xf32> to vector<8x32xf32>
    %77 = arith.mulf %75, %76 : vector<8x32xf32>
    %78 = vector.broadcast %57 : vector<1x32xf32> to vector<8x32xf32>
    %79 = arith.addf %77, %78 : vector<8x32xf32>
    %c0_39 = arith.constant 0 : index
    %c0_40 = arith.constant 0 : index
    %c0_41 = arith.constant 0 : index
    %80 = vector.load %arg11[%c0_39, %c0_40, %c0_41] : memref<1x8x32xf32, #tpu.memory_space<vmem>>, vector<1x8x32xf32>
    %81 = vector.shape_cast %80 : vector<1x8x32xf32> to vector<8x32xf32>
    %82 = vector.shape_cast %79 : vector<8x32xf32> to vector<1x8x32xf32>
    tpu.vector_store %arg11[%c0_39, %c0_40, %c0_41], %82 {strides = array<i32>} : memref<1x8x32xf32, #tpu.memory_space<vmem>>, vector<1x8x32xf32>,
    return
  }
  func.func @transform_0(%arg0: i32, %arg1: i32) -> (i32, i32, i32) {
    %c0_i32 = arith.constant 0 : i32
    %c0_i32_0 = arith.constant 0 : i32
    return %arg0, %arg1, %c0_i32 : i32, i32, i32
  }
  func.func @transform_1(%arg0: i32, %arg1: i32) -> (i32, i32, i32, i32) {
    %c0_i32 = arith.constant 0 : i32
    %c0_i32_0 = arith.constant 0 : i32
    %c0_i32_1 = arith.constant 0 : i32
    return %c0_i32, %arg0, %arg1, %c0_i32_0 : i32, i32, i32, i32
  }
  func.func @transform_2(%arg0: i32, %arg1: i32) -> (i32, i32, i32, i32) {
    %c0_i32 = arith.constant 0 : i32
    %0 = arith.subi %c0_i32, %arg1 : i32
    %c1_i32 = arith.constant 1 : i32
    %c0_i32_0 = arith.constant 0 : i32
    %c0_i32_1 = arith.constant 0 : i32
    return %c1_i32, %arg0, %0, %c0_i32_0 : i32, i32, i32, i32
  }
  func.func @transform_3(%arg0: i32, %arg1: i32) -> (i32, i32) {
    %c0_i32 = arith.constant 0 : i32
    %c0_i32_0 = arith.constant 0 : i32
    %c0_i32_1 = arith.constant 0 : i32
    return %c0_i32, %c0_i32_0 : i32, i32
  }
  func.func @transform_4(%arg0: i32, %arg1: i32) -> (i32, i32) {
    %c0_i32 = arith.constant 0 : i32
    %c0_i32_0 = arith.constant 0 : i32
    %c0_i32_1 = arith.constant 0 : i32
    return %c0_i32, %c0_i32_0 : i32, i32
  }
  func.func @transform_5(%arg0: i32, %arg1: i32) -> (i32, i32) {
    %c0_i32 = arith.constant 0 : i32
    %c0_i32_0 = arith.constant 0 : i32
    %c0_i32_1 = arith.constant 0 : i32
    return %c0_i32, %c0_i32_0 : i32, i32
  }
  func.func @transform_6(%arg0: i32, %arg1: i32) -> (i32, i32) {
    %c0_i32 = arith.constant 0 : i32
    %c0_i32_0 = arith.constant 0 : i32
    %c0_i32_1 = arith.constant 0 : i32
    return %c0_i32, %c0_i32_0 : i32, i32
  }
  func.func @transform_7(%arg0: i32, %arg1: i32) -> (i32, i32) {
    %c0_i32 = arith.constant 0 : i32
    %c0_i32_0 = arith.constant 0 : i32
    %c0_i32_1 = arith.constant 0 : i32
    return %c0_i32, %c0_i32_0 : i32, i32
  }
  func.func @transform_8(%arg0: i32, %arg1: i32) -> (i32, i32) {
    %c0_i32 = arith.constant 0 : i32
    %c0_i32_0 = arith.constant 0 : i32
    %c0_i32_1 = arith.constant 0 : i32
    return %c0_i32, %c0_i32_0 : i32, i32
  }
  func.func @transform_9(%arg0: i32, %arg1: i32) -> (i32, i32, i32) {
    %c0_i32 = arith.constant 0 : i32
    %c0_i32_0 = arith.constant 0 : i32
    return %arg0, %arg1, %c0_i32 : i32, i32, i32
  }
}

module attributes {stable_mosaic.version = 11 : i64} {
  func.func @_branch_kernel(%arg0: i32, %arg1: i32, %arg2: memref<1x8x32xf32, #tpu.memory_space<vmem>>, %arg3: memref<1x32xf32, #tpu.memory_space<vmem>>, %arg4: memref<1x32xf32, #tpu.memory_space<vmem>>, %arg5: memref<32x32xf32, #tpu.memory_space<vmem>>, %arg6: memref<1x32xf32, #tpu.memory_space<vmem>>, %arg7: memref<1x32x32xf32, #tpu.memory_space<vmem>>, %arg8: memref<1x1x32xf32, #tpu.memory_space<vmem>>, %arg9: memref<1x32x128xf32, #tpu.memory_space<vmem>>, %arg10: memref<1x4x64xf32, #tpu.memory_space<vmem>>, %arg11: memref<1x1x64xf32, #tpu.memory_space<vmem>>, %arg12: memref<1x64x34xf32, #tpu.memory_space<vmem>>, %arg13: memref<1x2x64xf32, #tpu.memory_space<vmem>>, %arg14: memref<1x1x64xf32, #tpu.memory_space<vmem>>, %arg15: memref<1x16x64xf32, #tpu.memory_space<vmem>>, %arg16: memref<1x1x64xf32, #tpu.memory_space<vmem>>, %arg17: memref<1x64x32xf32, #tpu.memory_space<vmem>>, %arg18: memref<1x1x8x32xf32, #tpu.memory_space<vmem>>, %arg19: memref<11x64xf32, #tpu.memory_space<vmem>>, %arg20: memref<8x64xf32, #tpu.memory_space<vmem>>, %arg21: memref<8x64xf32, #tpu.memory_space<vmem>>, %arg22: memref<8x32xf32, #tpu.memory_space<vmem>>, %arg23: memref<8x64xf32, #tpu.memory_space<vmem>>, %arg24: memref<8x64xf32, #tpu.memory_space<vmem>>, %arg25: memref<8x16x64xf32, #tpu.memory_space<vmem>>, %arg26: memref<16x8x64xf32, #tpu.memory_space<vmem>>) attributes {dimension_semantics = [#tpu.dimension_semantics<parallel>, #tpu.dimension_semantics<parallel>], iteration_bounds = array<i64: 2, 2>, scalar_prefetch = 0 : i64, scratch_operands = 8 : i64, tpu.core_type = #tpu.core_type<tc>, window_params = [{transform_indices = @transform_0, window_bounds = array<i64: 1, 8, 32>}, {pipeline_mode = #tpu.pipeline_mode<synchronous>, transform_indices = @transform_1, window_bounds = array<i64: 1, 32>}, {pipeline_mode = #tpu.pipeline_mode<synchronous>, transform_indices = @transform_2, window_bounds = array<i64: 1, 32>}, {pipeline_mode = #tpu.pipeline_mode<synchronous>, transform_indices = @transform_3, window_bounds = array<i64: 32, 32>}, {pipeline_mode = #tpu.pipeline_mode<synchronous>, transform_indices = @transform_4, window_bounds = array<i64: 1, 32>}, {transform_indices = @transform_5, window_bounds = array<i64: 1, 32, 32>}, {transform_indices = @transform_6, window_bounds = array<i64: 1, 1, 32>}, {transform_indices = @transform_7, window_bounds = array<i64: 1, 32, 128>}, {transform_indices = @transform_8, window_bounds = array<i64: 1, 4, 64>}, {transform_indices = @transform_9, window_bounds = array<i64: 1, 1, 64>}, {transform_indices = @transform_10, window_bounds = array<i64: 1, 64, 34>}, {transform_indices = @transform_11, window_bounds = array<i64: 1, 2, 64>}, {transform_indices = @transform_12, window_bounds = array<i64: 1, 1, 64>}, {transform_indices = @transform_13, window_bounds = array<i64: 1, 16, 64>}, {transform_indices = @transform_14, window_bounds = array<i64: 1, 1, 64>}, {transform_indices = @transform_15, window_bounds = array<i64: 1, 64, 32>}, {transform_indices = @transform_16, window_bounds = array<i64: 1, 1, 8, 32>}]} {
    %c0 = arith.constant 0 : index
    %c0_0 = arith.constant 0 : index
    %c0_1 = arith.constant 0 : index
    %0 = vector.load %arg2[%c0, %c0_0, %c0_1] : memref<1x8x32xf32, #tpu.memory_space<vmem>>, vector<1x8x32xf32>
    %1 = vector.shape_cast %0 : vector<1x8x32xf32> to vector<8x32xf32>
    %c0_2 = arith.constant 0 : index
    %c0_3 = arith.constant 0 : index
    %2 = vector.load %arg3[%c0_2, %c0_3] : memref<1x32xf32, #tpu.memory_space<vmem>>, vector<1x32xf32>
    %c0_4 = arith.constant 0 : index
    %c0_5 = arith.constant 0 : index
    %3 = vector.load %arg4[%c0_4, %c0_5] : memref<1x32xf32, #tpu.memory_space<vmem>>, vector<1x32xf32>
    %cst = arith.constant dense<0.000000e+00> : vector<8xf32>
    %4 = vector.multi_reduction <add>, %1, %cst [1] : vector<8x32xf32> to vector<8xf32>
    %5 = vector.shape_cast %4 : vector<8xf32> to vector<8x1xf32>
    %cst_6 = arith.constant 3.200000e+01 : f32
    %6 = vector.broadcast %cst_6 : f32 to vector<8x1xf32>
    %7 = arith.divf %5, %6 : vector<8x1xf32>
    %8 = vector.broadcast %7 : vector<8x1xf32> to vector<8x32xf32>
    %9 = arith.subf %1, %8 : vector<8x32xf32>
    %10 = arith.mulf %9, %9 : vector<8x32xf32>
    %cst_7 = arith.constant dense<0.000000e+00> : vector<8xf32>
    %11 = vector.multi_reduction <add>, %10, %cst_7 [1] : vector<8x32xf32> to vector<8xf32>
    %12 = vector.shape_cast %11 : vector<8xf32> to vector<8x1xf32>
    %cst_8 = arith.constant 3.200000e+01 : f32
    %13 = vector.broadcast %cst_8 : f32 to vector<8x1xf32>
    %14 = arith.divf %12, %13 : vector<8x1xf32>
    %15 = vector.broadcast %7 : vector<8x1xf32> to vector<8x32xf32>
    %16 = arith.subf %1, %15 : vector<8x32xf32>
    %cst_9 = arith.constant 9.99999974E-6 : f32
    %17 = vector.broadcast %cst_9 : f32 to vector<8x1xf32>
    %18 = arith.addf %14, %17 : vector<8x1xf32>
    %19 = math.rsqrt %18 : vector<8x1xf32>
    %20 = vector.broadcast %19 : vector<8x1xf32> to vector<8x32xf32>
    %21 = arith.mulf %16, %20 : vector<8x32xf32>
    %22 = vector.broadcast %2 : vector<1x32xf32> to vector<8x32xf32>
    %23 = arith.mulf %21, %22 : vector<8x32xf32>
    %24 = vector.broadcast %3 : vector<1x32xf32> to vector<8x32xf32>
    %25 = arith.addf %23, %24 : vector<8x32xf32>
    %c0_10 = arith.constant 0 : index
    %c0_11 = arith.constant 0 : index
    %26 = vector.load %arg5[%c0_10, %c0_11] : memref<32x32xf32, #tpu.memory_space<vmem>>, vector<32x32xf32>
    %cst_12 = arith.constant dense<0.000000e+00> : vector<8x32xf32>
    %27 = tpu.matmul %25, %26, %cst_12 {dimension_numbers = #tpu.dot_dimension_numbers<[1], [0], [0], [1], [0, 0, 1, 1], [], []>} : vector<8x32xf32>, vector<32x32xf32>, vector<8x32xf32> -> vector<8x32xf32>
    %c0_13 = arith.constant 0 : index
    %c0_14 = arith.constant 0 : index
    %28 = vector.load %arg6[%c0_13, %c0_14] : memref<1x32xf32, #tpu.memory_space<vmem>>, vector<1x32xf32>
    %29 = vector.broadcast %28 : vector<1x32xf32> to vector<8x32xf32>
    %30 = arith.addf %27, %29 : vector<8x32xf32>
    %c0_15 = arith.constant 0 : index
    %c0_16 = arith.constant 0 : index
    %c0_17 = arith.constant 0 : index
    %31 = vector.load %arg7[%c0_15, %c0_16, %c0_17] : memref<1x32x32xf32, #tpu.memory_space<vmem>>, vector<1x32x32xf32>
    %32 = vector.shape_cast %31 : vector<1x32x32xf32> to vector<32x32xf32>
    %cst_18 = arith.constant dense<0.000000e+00> : vector<8x32xf32>
    %33 = tpu.matmul %30, %32, %cst_18 {dimension_numbers = #tpu.dot_dimension_numbers<[1], [0], [0], [1], [0, 0, 1, 1], [], []>} : vector<8x32xf32>, vector<32x32xf32>, vector<8x32xf32> -> vector<8x32xf32>
    %c0_19 = arith.constant 0 : index
    %c0_20 = arith.constant 0 : index
    %c0_21 = arith.constant 0 : index
    %34 = vector.load %arg8[%c0_19, %c0_20, %c0_21] : memref<1x1x32xf32, #tpu.memory_space<vmem>>, vector<1x1x32xf32>
    %35 = vector.shape_cast %34 : vector<1x1x32xf32> to vector<1x32xf32>
    %36 = vector.broadcast %35 : vector<1x32xf32> to vector<8x32xf32>
    %37 = arith.addf %33, %36 : vector<8x32xf32>
    %38 = arith.negf %37 : vector<8x32xf32>
    %39 = math.exp %38 : vector<8x32xf32>
    %cst_22 = arith.constant 1.000000e+00 : f32
    %40 = vector.broadcast %cst_22 : f32 to vector<8x32xf32>
    %41 = arith.addf %40, %39 : vector<8x32xf32>
    %42 = arith.divf %40, %41 : vector<8x32xf32>
    %43 = arith.mulf %37, %42 : vector<8x32xf32>
    %c0_23 = arith.constant 0 : index
    %c0_24 = arith.constant 0 : index
    %c0_25 = arith.constant 0 : index
    %44 = vector.load %arg9[%c0_23, %c0_24, %c0_25] : memref<1x32x128xf32, #tpu.memory_space<vmem>>, vector<1x32x128xf32>
    %45 = vector.shape_cast %44 : vector<1x32x128xf32> to vector<32x128xf32>
    %cst_26 = arith.constant dense<0.000000e+00> : vector<8x128xf32>
    %46 = tpu.matmul %43, %45, %cst_26 {dimension_numbers = #tpu.dot_dimension_numbers<[1], [0], [0], [1], [0, 0, 1, 1], [], []>} : vector<8x32xf32>, vector<32x128xf32>, vector<8x128xf32> -> vector<8x128xf32>
    %47 = vector.extract_strided_slice %46 {offsets = [0, 0], sizes = [8, 64], strides = [1, 1]} : vector<8x128xf32> to vector<8x64xf32>
    %48 = vector.extract_strided_slice %46 {offsets = [0, 64], sizes = [8, 64], strides = [1, 1]} : vector<8x128xf32> to vector<8x64xf32>
    %49 = arith.negf %48 : vector<8x64xf32>
    %50 = math.exp %49 : vector<8x64xf32>
    %cst_27 = arith.constant 1.000000e+00 : f32
    %51 = vector.broadcast %cst_27 : f32 to vector<8x64xf32>
    %52 = arith.addf %51, %50 : vector<8x64xf32>
    %53 = arith.divf %51, %52 : vector<8x64xf32>
    %54 = arith.mulf %48, %53 : vector<8x64xf32>
    %c0_28 = arith.constant 0 : index
    %c0_29 = arith.constant 0 : index
    %55 = vector.load %arg23[%c0_28, %c0_29] : memref<8x64xf32, #tpu.memory_space<vmem>>, vector<8x64xf32>
    tpu.vector_store %arg23[%c0_28, %c0_29], %54 {strides = array<i32>} : memref<8x64xf32, #tpu.memory_space<vmem>>, vector<8x64xf32>,
    %cst_30 = arith.constant 0.000000e+00 : f32
    %56 = vector.broadcast %cst_30 : f32 to vector<3x64xf32>
    %c0_31 = arith.constant 0 : index
    %c0_32 = arith.constant 0 : index
    %57 = vector.load %arg19[%c0_31, %c0_32] : memref<11x64xf32, #tpu.memory_space<vmem>>, vector<3x64xf32>
    tpu.vector_store %arg19[%c0_31, %c0_32], %56 {strides = array<i32>} : memref<11x64xf32, #tpu.memory_space<vmem>>, vector<3x64xf32>,
    %c3 = arith.constant 3 : index
    %c0_33 = arith.constant 0 : index
    %58 = vector.load %arg19[%c3, %c0_33] : memref<11x64xf32, #tpu.memory_space<vmem>>, vector<8x64xf32>
    tpu.vector_store %arg19[%c3, %c0_33], %47 {strides = array<i32>} : memref<11x64xf32, #tpu.memory_space<vmem>>, vector<8x64xf32>,
    %c0_34 = arith.constant 0 : index
    %c3_35 = arith.constant 3 : index
    %c0_36 = arith.constant 0 : index
    %59 = vector.load %arg10[%c0_34, %c3_35, %c0_36] : memref<1x4x64xf32, #tpu.memory_space<vmem>>, vector<1x1x64xf32>
    %60 = vector.shape_cast %59 : vector<1x1x64xf32> to vector<1x64xf32>
    %61 = vector.broadcast %60 : vector<1x64xf32> to vector<8x64xf32>
    %62 = arith.mulf %47, %61 : vector<8x64xf32>
    %c0_37 = arith.constant 0 : index
    %c0_38 = arith.constant 0 : index
    %63 = vector.load %arg19[%c0_37, %c0_38] : memref<11x64xf32, #tpu.memory_space<vmem>>, vector<8x64xf32>
    %c0_39 = arith.constant 0 : index
    %c0_40 = arith.constant 0 : index
    %c0_41 = arith.constant 0 : index
    %64 = vector.load %arg10[%c0_39, %c0_40, %c0_41] : memref<1x4x64xf32, #tpu.memory_space<vmem>>, vector<1x1x64xf32>
    %65 = vector.shape_cast %64 : vector<1x1x64xf32> to vector<1x64xf32>
    %66 = vector.broadcast %65 : vector<1x64xf32> to vector<8x64xf32>
    %67 = arith.mulf %63, %66 : vector<8x64xf32>
    %68 = arith.addf %62, %67 : vector<8x64xf32>
    %c1 = arith.constant 1 : index
    %c0_42 = arith.constant 0 : index
    %69 = vector.load %arg19[%c1, %c0_42] : memref<11x64xf32, #tpu.memory_space<vmem>>, vector<8x64xf32>
    %c0_43 = arith.constant 0 : index
    %c1_44 = arith.constant 1 : index
    %c0_45 = arith.constant 0 : index
    %70 = vector.load %arg10[%c0_43, %c1_44, %c0_45] : memref<1x4x64xf32, #tpu.memory_space<vmem>>, vector<1x1x64xf32>
    %71 = vector.shape_cast %70 : vector<1x1x64xf32> to vector<1x64xf32>
    %72 = vector.broadcast %71 : vector<1x64xf32> to vector<8x64xf32>
    %73 = arith.mulf %69, %72 : vector<8x64xf32>
    %74 = arith.addf %68, %73 : vector<8x64xf32>
    %c2 = arith.constant 2 : index
    %c0_46 = arith.constant 0 : index
    %75 = vector.load %arg19[%c2, %c0_46] : memref<11x64xf32, #tpu.memory_space<vmem>>, vector<8x64xf32>
    %c0_47 = arith.constant 0 : index
    %c2_48 = arith.constant 2 : index
    %c0_49 = arith.constant 0 : index
    %76 = vector.load %arg10[%c0_47, %c2_48, %c0_49] : memref<1x4x64xf32, #tpu.memory_space<vmem>>, vector<1x1x64xf32>
    %77 = vector.shape_cast %76 : vector<1x1x64xf32> to vector<1x64xf32>
    %78 = vector.broadcast %77 : vector<1x64xf32> to vector<8x64xf32>
    %79 = arith.mulf %75, %78 : vector<8x64xf32>
    %80 = arith.addf %74, %79 : vector<8x64xf32>
    %c0_50 = arith.constant 0 : index
    %c0_51 = arith.constant 0 : index
    %c0_52 = arith.constant 0 : index
    %81 = vector.load %arg11[%c0_50, %c0_51, %c0_52] : memref<1x1x64xf32, #tpu.memory_space<vmem>>, vector<1x1x64xf32>
    %82 = vector.shape_cast %81 : vector<1x1x64xf32> to vector<1x64xf32>
    %83 = vector.broadcast %82 : vector<1x64xf32> to vector<8x64xf32>
    %84 = arith.addf %80, %83 : vector<8x64xf32>
    %85 = arith.negf %84 : vector<8x64xf32>
    %86 = math.exp %85 : vector<8x64xf32>
    %cst_53 = arith.constant 1.000000e+00 : f32
    %87 = vector.broadcast %cst_53 : f32 to vector<8x64xf32>
    %88 = arith.addf %87, %86 : vector<8x64xf32>
    %89 = arith.divf %87, %88 : vector<8x64xf32>
    %90 = arith.mulf %84, %89 : vector<8x64xf32>
    %c0_54 = arith.constant 0 : index
    %c0_55 = arith.constant 0 : index
    %91 = vector.load %arg20[%c0_54, %c0_55] : memref<8x64xf32, #tpu.memory_space<vmem>>, vector<8x64xf32>
    tpu.vector_store %arg20[%c0_54, %c0_55], %90 {strides = array<i32>} : memref<8x64xf32, #tpu.memory_space<vmem>>, vector<8x64xf32>,
    %c0_56 = arith.constant 0 : index
    %c0_57 = arith.constant 0 : index
    %c0_58 = arith.constant 0 : index
    %92 = vector.load %arg12[%c0_56, %c0_57, %c0_58] : memref<1x64x34xf32, #tpu.memory_space<vmem>>, vector<1x64x34xf32>
    %93 = vector.shape_cast %92 : vector<1x64x34xf32> to vector<64x34xf32>
    %cst_59 = arith.constant dense<0.000000e+00> : vector<8x34xf32>
    %94 = tpu.matmul %90, %93, %cst_59 {dimension_numbers = #tpu.dot_dimension_numbers<[1], [0], [0], [1], [0, 0, 1, 1], [], []>} : vector<8x64xf32>, vector<64x34xf32>, vector<8x34xf32> -> vector<8x34xf32>
    %95 = vector.extract_strided_slice %94 {offsets = [0, 0], sizes = [8, 2], strides = [1, 1]} : vector<8x34xf32> to vector<8x2xf32>
    %96 = vector.extract_strided_slice %94 {offsets = [0, 2], sizes = [8, 32], strides = [1, 1]} : vector<8x34xf32> to vector<8x32xf32>
    %c0_60 = arith.constant 0 : index
    %c0_61 = arith.constant 0 : index
    %97 = vector.load %arg22[%c0_60, %c0_61] : memref<8x32xf32, #tpu.memory_space<vmem>>, vector<8x32xf32>
    tpu.vector_store %arg22[%c0_60, %c0_61], %96 {strides = array<i32>} : memref<8x32xf32, #tpu.memory_space<vmem>>, vector<8x32xf32>,
    %c0_62 = arith.constant 0 : index
    %c0_63 = arith.constant 0 : index
    %c0_64 = arith.constant 0 : index
    %98 = vector.load %arg13[%c0_62, %c0_63, %c0_64] : memref<1x2x64xf32, #tpu.memory_space<vmem>>, vector<1x2x64xf32>
    %99 = vector.shape_cast %98 : vector<1x2x64xf32> to vector<2x64xf32>
    %cst_65 = arith.constant dense<0.000000e+00> : vector<8x64xf32>
    %100 = tpu.matmul %95, %99, %cst_65 {dimension_numbers = #tpu.dot_dimension_numbers<[1], [0], [0], [1], [0, 0, 1, 1], [], []>} : vector<8x2xf32>, vector<2x64xf32>, vector<8x64xf32> -> vector<8x64xf32>
    %c0_66 = arith.constant 0 : index
    %c0_67 = arith.constant 0 : index
    %c0_68 = arith.constant 0 : index
    %101 = vector.load %arg14[%c0_66, %c0_67, %c0_68] : memref<1x1x64xf32, #tpu.memory_space<vmem>>, vector<1x1x64xf32>
    %102 = vector.shape_cast %101 : vector<1x1x64xf32> to vector<1x64xf32>
    %103 = vector.broadcast %102 : vector<1x64xf32> to vector<8x64xf32>
    %104 = arith.addf %100, %103 : vector<8x64xf32>
    %cst_69 = arith.constant 0.000000e+00 : f32
    %105 = vector.broadcast %cst_69 : f32 to vector<8x64xf32>
    %106 = arith.maximumf %104, %105 : vector<8x64xf32>
    %107 = vector.broadcast %cst_69 : f32 to vector<8x64xf32>
    %108 = arith.subf %104, %107 : vector<8x64xf32>
    %109 = arith.cmpf one, %108, %108 : vector<8x64xf32>
    %110 = vector.broadcast %cst_69 : f32 to vector<8x64xf32>
    %111 = arith.addf %104, %110 : vector<8x64xf32>
    %112 = math.absf %108 : vector<8x64xf32>
    %cst_70 = arith.constant 0.000000e+00 : f32
    %113 = vector.broadcast %cst_70 : f32 to vector<8x64xf32>
    %114 = arith.subf %113, %112 : vector<8x64xf32>
    %115 = math.exp %114 : vector<8x64xf32>
    %116 = math.log1p %115 : vector<8x64xf32>
    %117 = arith.addf %106, %116 : vector<8x64xf32>
    %118 = arith.select %109, %111, %117 : vector<8x64xi1>, vector<8x64xf32>
    %c0_71 = arith.constant 0 : index
    %c0_72 = arith.constant 0 : index
    %119 = vector.load %arg21[%c0_71, %c0_72] : memref<8x64xf32, #tpu.memory_space<vmem>>, vector<8x64xf32>
    tpu.vector_store %arg21[%c0_71, %c0_72], %118 {strides = array<i32>} : memref<8x64xf32, #tpu.memory_space<vmem>>, vector<8x64xf32>,
    %c0_73 = arith.constant 0 : index
    %c0_74 = arith.constant 0 : index
    %c0_75 = arith.constant 0 : index
    %120 = vector.load %arg15[%c0_73, %c0_74, %c0_75] : memref<1x16x64xf32, #tpu.memory_space<vmem>>, vector<1x16x64xf32>
    %121 = vector.shape_cast %120 : vector<1x16x64xf32> to vector<16x64xf32>
    %122 = math.exp %121 : vector<16x64xf32>
    %cst_76 = arith.constant 0.000000e+00 : f32
    %123 = vector.broadcast %cst_76 : f32 to vector<16x64xf32>
    %124 = arith.subf %123, %122 : vector<16x64xf32>
    %cst_77 = arith.constant 0.000000e+00 : f32
    %125 = vector.broadcast %cst_77 : f32 to vector<16x64xf32>
    %c0_78 = arith.constant 0 : index
    %c0_79 = arith.constant 0 : index
    %126 = vector.load %arg21[%c0_78, %c0_79] : memref<8x64xf32, #tpu.memory_space<vmem>>, vector<8x64xf32>
    %c0_80 = arith.constant 0 : index
    %c0_81 = arith.constant 0 : index
    %127 = vector.load %arg20[%c0_80, %c0_81] : memref<8x64xf32, #tpu.memory_space<vmem>>, vector<8x64xf32>
    %c0_82 = arith.constant 0 : index
    %c0_83 = arith.constant 0 : index
    %128 = vector.load %arg22[%c0_82, %c0_83] : memref<8x32xf32, #tpu.memory_space<vmem>>, vector<8x32xf32>
    %129 = arith.mulf %126, %127 : vector<8x64xf32>
    %130 = vector.extract_strided_slice %128 {offsets = [0, 0], sizes = [8, 1], strides = [1, 1]} : vector<8x32xf32> to vector<8x1xf32>
    %131 = vector.broadcast %130 : vector<8x1xf32> to vector<8x64xf32>
    %132 = arith.mulf %131, %129 : vector<8x64xf32>
    %c0_84 = arith.constant 0 : index
    %c0_85 = arith.constant 0 : index
    %c0_86 = arith.constant 0 : index
    %133 = vector.load %arg25[%c0_84, %c0_85, %c0_86] : memref<8x16x64xf32, #tpu.memory_space<vmem>>, vector<8x1x64xf32>
    %134 = vector.shape_cast %133 : vector<8x1x64xf32> to vector<8x64xf32>
    %135 = vector.shape_cast %132 : vector<8x64xf32> to vector<8x1x64xf32>
    tpu.vector_store %arg25[%c0_84, %c0_85, %c0_86], %135 {strides = array<i32>} : memref<8x16x64xf32, #tpu.memory_space<vmem>>, vector<8x1x64xf32>,
    %136 = vector.extract_strided_slice %128 {offsets = [0, 1], sizes = [8, 1], strides = [1, 1]} : vector<8x32xf32> to vector<8x1xf32>
    %137 = vector.broadcast %136 : vector<8x1xf32> to vector<8x64xf32>
    %138 = arith.mulf %137, %129 : vector<8x64xf32>
    %c0_87 = arith.constant 0 : index
    %c1_88 = arith.constant 1 : index
    %c0_89 = arith.constant 0 : index
    %139 = vector.load %arg25[%c0_87, %c1_88, %c0_89] : memref<8x16x64xf32, #tpu.memory_space<vmem>>, vector<8x1x64xf32>
    %140 = vector.shape_cast %139 : vector<8x1x64xf32> to vector<8x64xf32>
    %141 = vector.shape_cast %138 : vector<8x64xf32> to vector<8x1x64xf32>
    tpu.vector_store %arg25[%c0_87, %c1_88, %c0_89], %141 {strides = array<i32>} : memref<8x16x64xf32, #tpu.memory_space<vmem>>, vector<8x1x64xf32>,
    %142 = vector.extract_strided_slice %128 {offsets = [0, 2], sizes = [8, 1], strides = [1, 1]} : vector<8x32xf32> to vector<8x1xf32>
    %143 = vector.broadcast %142 : vector<8x1xf32> to vector<8x64xf32>
    %144 = arith.mulf %143, %129 : vector<8x64xf32>
    %c0_90 = arith.constant 0 : index
    %c2_91 = arith.constant 2 : index
    %c0_92 = arith.constant 0 : index
    %145 = vector.load %arg25[%c0_90, %c2_91, %c0_92] : memref<8x16x64xf32, #tpu.memory_space<vmem>>, vector<8x1x64xf32>
    %146 = vector.shape_cast %145 : vector<8x1x64xf32> to vector<8x64xf32>
    %147 = vector.shape_cast %144 : vector<8x64xf32> to vector<8x1x64xf32>
    tpu.vector_store %arg25[%c0_90, %c2_91, %c0_92], %147 {strides = array<i32>} : memref<8x16x64xf32, #tpu.memory_space<vmem>>, vector<8x1x64xf32>,
    %148 = vector.extract_strided_slice %128 {offsets = [0, 3], sizes = [8, 1], strides = [1, 1]} : vector<8x32xf32> to vector<8x1xf32>
    %149 = vector.broadcast %148 : vector<8x1xf32> to vector<8x64xf32>
    %150 = arith.mulf %149, %129 : vector<8x64xf32>
    %c0_93 = arith.constant 0 : index
    %c3_94 = arith.constant 3 : index
    %c0_95 = arith.constant 0 : index
    %151 = vector.load %arg25[%c0_93, %c3_94, %c0_95] : memref<8x16x64xf32, #tpu.memory_space<vmem>>, vector<8x1x64xf32>
    %152 = vector.shape_cast %151 : vector<8x1x64xf32> to vector<8x64xf32>
    %153 = vector.shape_cast %150 : vector<8x64xf32> to vector<8x1x64xf32>
    tpu.vector_store %arg25[%c0_93, %c3_94, %c0_95], %153 {strides = array<i32>} : memref<8x16x64xf32, #tpu.memory_space<vmem>>, vector<8x1x64xf32>,
    %154 = vector.extract_strided_slice %128 {offsets = [0, 4], sizes = [8, 1], strides = [1, 1]} : vector<8x32xf32> to vector<8x1xf32>
    %155 = vector.broadcast %154 : vector<8x1xf32> to vector<8x64xf32>
    %156 = arith.mulf %155, %129 : vector<8x64xf32>
    %c0_96 = arith.constant 0 : index
    %c4 = arith.constant 4 : index
    %c0_97 = arith.constant 0 : index
    %157 = vector.load %arg25[%c0_96, %c4, %c0_97] : memref<8x16x64xf32, #tpu.memory_space<vmem>>, vector<8x1x64xf32>
    %158 = vector.shape_cast %157 : vector<8x1x64xf32> to vector<8x64xf32>
    %159 = vector.shape_cast %156 : vector<8x64xf32> to vector<8x1x64xf32>
    tpu.vector_store %arg25[%c0_96, %c4, %c0_97], %159 {strides = array<i32>} : memref<8x16x64xf32, #tpu.memory_space<vmem>>, vector<8x1x64xf32>,
    %160 = vector.extract_strided_slice %128 {offsets = [0, 5], sizes = [8, 1], strides = [1, 1]} : vector<8x32xf32> to vector<8x1xf32>
    %161 = vector.broadcast %160 : vector<8x1xf32> to vector<8x64xf32>
    %162 = arith.mulf %161, %129 : vector<8x64xf32>
    %c0_98 = arith.constant 0 : index
    %c5 = arith.constant 5 : index
    %c0_99 = arith.constant 0 : index
    %163 = vector.load %arg25[%c0_98, %c5, %c0_99] : memref<8x16x64xf32, #tpu.memory_space<vmem>>, vector<8x1x64xf32>
    %164 = vector.shape_cast %163 : vector<8x1x64xf32> to vector<8x64xf32>
    %165 = vector.shape_cast %162 : vector<8x64xf32> to vector<8x1x64xf32>
    tpu.vector_store %arg25[%c0_98, %c5, %c0_99], %165 {strides = array<i32>} : memref<8x16x64xf32, #tpu.memory_space<vmem>>, vector<8x1x64xf32>,
    %166 = vector.extract_strided_slice %128 {offsets = [0, 6], sizes = [8, 1], strides = [1, 1]} : vector<8x32xf32> to vector<8x1xf32>
    %167 = vector.broadcast %166 : vector<8x1xf32> to vector<8x64xf32>
    %168 = arith.mulf %167, %129 : vector<8x64xf32>
    %c0_100 = arith.constant 0 : index
    %c6 = arith.constant 6 : index
    %c0_101 = arith.constant 0 : index
    %169 = vector.load %arg25[%c0_100, %c6, %c0_101] : memref<8x16x64xf32, #tpu.memory_space<vmem>>, vector<8x1x64xf32>
    %170 = vector.shape_cast %169 : vector<8x1x64xf32> to vector<8x64xf32>
    %171 = vector.shape_cast %168 : vector<8x64xf32> to vector<8x1x64xf32>
    tpu.vector_store %arg25[%c0_100, %c6, %c0_101], %171 {strides = array<i32>} : memref<8x16x64xf32, #tpu.memory_space<vmem>>, vector<8x1x64xf32>,
    %172 = vector.extract_strided_slice %128 {offsets = [0, 7], sizes = [8, 1], strides = [1, 1]} : vector<8x32xf32> to vector<8x1xf32>
    %173 = vector.broadcast %172 : vector<8x1xf32> to vector<8x64xf32>
    %174 = arith.mulf %173, %129 : vector<8x64xf32>
    %c0_102 = arith.constant 0 : index
    %c7 = arith.constant 7 : index
    %c0_103 = arith.constant 0 : index
    %175 = vector.load %arg25[%c0_102, %c7, %c0_103] : memref<8x16x64xf32, #tpu.memory_space<vmem>>, vector<8x1x64xf32>
    %176 = vector.shape_cast %175 : vector<8x1x64xf32> to vector<8x64xf32>
    %177 = vector.shape_cast %174 : vector<8x64xf32> to vector<8x1x64xf32>
    tpu.vector_store %arg25[%c0_102, %c7, %c0_103], %177 {strides = array<i32>} : memref<8x16x64xf32, #tpu.memory_space<vmem>>, vector<8x1x64xf32>,
    %178 = vector.extract_strided_slice %128 {offsets = [0, 8], sizes = [8, 1], strides = [1, 1]} : vector<8x32xf32> to vector<8x1xf32>
    %179 = vector.broadcast %178 : vector<8x1xf32> to vector<8x64xf32>
    %180 = arith.mulf %179, %129 : vector<8x64xf32>
    %c0_104 = arith.constant 0 : index
    %c8 = arith.constant 8 : index
    %c0_105 = arith.constant 0 : index
    %181 = vector.load %arg25[%c0_104, %c8, %c0_105] : memref<8x16x64xf32, #tpu.memory_space<vmem>>, vector<8x1x64xf32>
    %182 = vector.shape_cast %181 : vector<8x1x64xf32> to vector<8x64xf32>
    %183 = vector.shape_cast %180 : vector<8x64xf32> to vector<8x1x64xf32>
    tpu.vector_store %arg25[%c0_104, %c8, %c0_105], %183 {strides = array<i32>} : memref<8x16x64xf32, #tpu.memory_space<vmem>>, vector<8x1x64xf32>,
    %184 = vector.extract_strided_slice %128 {offsets = [0, 9], sizes = [8, 1], strides = [1, 1]} : vector<8x32xf32> to vector<8x1xf32>
    %185 = vector.broadcast %184 : vector<8x1xf32> to vector<8x64xf32>
    %186 = arith.mulf %185, %129 : vector<8x64xf32>
    %c0_106 = arith.constant 0 : index
    %c9 = arith.constant 9 : index
    %c0_107 = arith.constant 0 : index
    %187 = vector.load %arg25[%c0_106, %c9, %c0_107] : memref<8x16x64xf32, #tpu.memory_space<vmem>>, vector<8x1x64xf32>
    %188 = vector.shape_cast %187 : vector<8x1x64xf32> to vector<8x64xf32>
    %189 = vector.shape_cast %186 : vector<8x64xf32> to vector<8x1x64xf32>
    tpu.vector_store %arg25[%c0_106, %c9, %c0_107], %189 {strides = array<i32>} : memref<8x16x64xf32, #tpu.memory_space<vmem>>, vector<8x1x64xf32>,
    %190 = vector.extract_strided_slice %128 {offsets = [0, 10], sizes = [8, 1], strides = [1, 1]} : vector<8x32xf32> to vector<8x1xf32>
    %191 = vector.broadcast %190 : vector<8x1xf32> to vector<8x64xf32>
    %192 = arith.mulf %191, %129 : vector<8x64xf32>
    %c0_108 = arith.constant 0 : index
    %c10 = arith.constant 10 : index
    %c0_109 = arith.constant 0 : index
    %193 = vector.load %arg25[%c0_108, %c10, %c0_109] : memref<8x16x64xf32, #tpu.memory_space<vmem>>, vector<8x1x64xf32>
    %194 = vector.shape_cast %193 : vector<8x1x64xf32> to vector<8x64xf32>
    %195 = vector.shape_cast %192 : vector<8x64xf32> to vector<8x1x64xf32>
    tpu.vector_store %arg25[%c0_108, %c10, %c0_109], %195 {strides = array<i32>} : memref<8x16x64xf32, #tpu.memory_space<vmem>>, vector<8x1x64xf32>,
    %196 = vector.extract_strided_slice %128 {offsets = [0, 11], sizes = [8, 1], strides = [1, 1]} : vector<8x32xf32> to vector<8x1xf32>
    %197 = vector.broadcast %196 : vector<8x1xf32> to vector<8x64xf32>
    %198 = arith.mulf %197, %129 : vector<8x64xf32>
    %c0_110 = arith.constant 0 : index
    %c11 = arith.constant 11 : index
    %c0_111 = arith.constant 0 : index
    %199 = vector.load %arg25[%c0_110, %c11, %c0_111] : memref<8x16x64xf32, #tpu.memory_space<vmem>>, vector<8x1x64xf32>
    %200 = vector.shape_cast %199 : vector<8x1x64xf32> to vector<8x64xf32>
    %201 = vector.shape_cast %198 : vector<8x64xf32> to vector<8x1x64xf32>
    tpu.vector_store %arg25[%c0_110, %c11, %c0_111], %201 {strides = array<i32>} : memref<8x16x64xf32, #tpu.memory_space<vmem>>, vector<8x1x64xf32>,
    %202 = vector.extract_strided_slice %128 {offsets = [0, 12], sizes = [8, 1], strides = [1, 1]} : vector<8x32xf32> to vector<8x1xf32>
    %203 = vector.broadcast %202 : vector<8x1xf32> to vector<8x64xf32>
    %204 = arith.mulf %203, %129 : vector<8x64xf32>
    %c0_112 = arith.constant 0 : index
    %c12 = arith.constant 12 : index
    %c0_113 = arith.constant 0 : index
    %205 = vector.load %arg25[%c0_112, %c12, %c0_113] : memref<8x16x64xf32, #tpu.memory_space<vmem>>, vector<8x1x64xf32>
    %206 = vector.shape_cast %205 : vector<8x1x64xf32> to vector<8x64xf32>
    %207 = vector.shape_cast %204 : vector<8x64xf32> to vector<8x1x64xf32>
    tpu.vector_store %arg25[%c0_112, %c12, %c0_113], %207 {strides = array<i32>} : memref<8x16x64xf32, #tpu.memory_space<vmem>>, vector<8x1x64xf32>,
    %208 = vector.extract_strided_slice %128 {offsets = [0, 13], sizes = [8, 1], strides = [1, 1]} : vector<8x32xf32> to vector<8x1xf32>
    %209 = vector.broadcast %208 : vector<8x1xf32> to vector<8x64xf32>
    %210 = arith.mulf %209, %129 : vector<8x64xf32>
    %c0_114 = arith.constant 0 : index
    %c13 = arith.constant 13 : index
    %c0_115 = arith.constant 0 : index
    %211 = vector.load %arg25[%c0_114, %c13, %c0_115] : memref<8x16x64xf32, #tpu.memory_space<vmem>>, vector<8x1x64xf32>
    %212 = vector.shape_cast %211 : vector<8x1x64xf32> to vector<8x64xf32>
    %213 = vector.shape_cast %210 : vector<8x64xf32> to vector<8x1x64xf32>
    tpu.vector_store %arg25[%c0_114, %c13, %c0_115], %213 {strides = array<i32>} : memref<8x16x64xf32, #tpu.memory_space<vmem>>, vector<8x1x64xf32>,
    %214 = vector.extract_strided_slice %128 {offsets = [0, 14], sizes = [8, 1], strides = [1, 1]} : vector<8x32xf32> to vector<8x1xf32>
    %215 = vector.broadcast %214 : vector<8x1xf32> to vector<8x64xf32>
    %216 = arith.mulf %215, %129 : vector<8x64xf32>
    %c0_116 = arith.constant 0 : index
    %c14 = arith.constant 14 : index
    %c0_117 = arith.constant 0 : index
    %217 = vector.load %arg25[%c0_116, %c14, %c0_117] : memref<8x16x64xf32, #tpu.memory_space<vmem>>, vector<8x1x64xf32>
    %218 = vector.shape_cast %217 : vector<8x1x64xf32> to vector<8x64xf32>
    %219 = vector.shape_cast %216 : vector<8x64xf32> to vector<8x1x64xf32>
    tpu.vector_store %arg25[%c0_116, %c14, %c0_117], %219 {strides = array<i32>} : memref<8x16x64xf32, #tpu.memory_space<vmem>>, vector<8x1x64xf32>,
    %220 = vector.extract_strided_slice %128 {offsets = [0, 15], sizes = [8, 1], strides = [1, 1]} : vector<8x32xf32> to vector<8x1xf32>
    %221 = vector.broadcast %220 : vector<8x1xf32> to vector<8x64xf32>
    %222 = arith.mulf %221, %129 : vector<8x64xf32>
    %c0_118 = arith.constant 0 : index
    %c15 = arith.constant 15 : index
    %c0_119 = arith.constant 0 : index
    %223 = vector.load %arg25[%c0_118, %c15, %c0_119] : memref<8x16x64xf32, #tpu.memory_space<vmem>>, vector<8x1x64xf32>
    %224 = vector.shape_cast %223 : vector<8x1x64xf32> to vector<8x64xf32>
    %225 = vector.shape_cast %222 : vector<8x64xf32> to vector<8x1x64xf32>
    tpu.vector_store %arg25[%c0_118, %c15, %c0_119], %225 {strides = array<i32>} : memref<8x16x64xf32, #tpu.memory_space<vmem>>, vector<8x1x64xf32>,
    %226 = vector.extract_strided_slice %126 {offsets = [0, 0], sizes = [1, 64], strides = [1, 1]} : vector<8x64xf32> to vector<1x64xf32>
    %227 = vector.broadcast %226 : vector<1x64xf32> to vector<16x64xf32>
    %228 = arith.mulf %124, %227 : vector<16x64xf32>
    %229 = math.exp %228 : vector<16x64xf32>
    %230 = arith.mulf %229, %125 : vector<16x64xf32>
    %c0_120 = arith.constant 0 : index
    %c0_121 = arith.constant 0 : index
    %c0_122 = arith.constant 0 : index
    %231 = vector.load %arg25[%c0_120, %c0_121, %c0_122] : memref<8x16x64xf32, #tpu.memory_space<vmem>>, vector<1x16x64xf32>
    %232 = vector.shape_cast %231 : vector<1x16x64xf32> to vector<16x64xf32>
    %233 = arith.addf %230, %232 : vector<16x64xf32>
    %c0_123 = arith.constant 0 : index
    %c0_124 = arith.constant 0 : index
    %c0_125 = arith.constant 0 : index
    %234 = vector.load %arg26[%c0_123, %c0_124, %c0_125] : memref<16x8x64xf32, #tpu.memory_space<vmem>>, vector<16x1x64xf32>
    %235 = vector.shape_cast %234 : vector<16x1x64xf32> to vector<16x64xf32>
    %236 = vector.shape_cast %233 : vector<16x64xf32> to vector<16x1x64xf32>
    tpu.vector_store %arg26[%c0_123, %c0_124, %c0_125], %236 {strides = array<i32>} : memref<16x8x64xf32, #tpu.memory_space<vmem>>, vector<16x1x64xf32>,
    %237 = vector.extract_strided_slice %126 {offsets = [1, 0], sizes = [1, 64], strides = [1, 1]} : vector<8x64xf32> to vector<1x64xf32>
    %238 = vector.broadcast %237 : vector<1x64xf32> to vector<16x64xf32>
    %239 = arith.mulf %124, %238 : vector<16x64xf32>
    %240 = math.exp %239 : vector<16x64xf32>
    %241 = arith.mulf %240, %233 : vector<16x64xf32>
    %c1_126 = arith.constant 1 : index
    %c0_127 = arith.constant 0 : index
    %c0_128 = arith.constant 0 : index
    %242 = vector.load %arg25[%c1_126, %c0_127, %c0_128] : memref<8x16x64xf32, #tpu.memory_space<vmem>>, vector<1x16x64xf32>
    %243 = vector.shape_cast %242 : vector<1x16x64xf32> to vector<16x64xf32>
    %244 = arith.addf %241, %243 : vector<16x64xf32>
    %c0_129 = arith.constant 0 : index
    %c1_130 = arith.constant 1 : index
    %c0_131 = arith.constant 0 : index
    %245 = vector.load %arg26[%c0_129, %c1_130, %c0_131] : memref<16x8x64xf32, #tpu.memory_space<vmem>>, vector<16x1x64xf32>
    %246 = vector.shape_cast %245 : vector<16x1x64xf32> to vector<16x64xf32>
    %247 = vector.shape_cast %244 : vector<16x64xf32> to vector<16x1x64xf32>
    tpu.vector_store %arg26[%c0_129, %c1_130, %c0_131], %247 {strides = array<i32>} : memref<16x8x64xf32, #tpu.memory_space<vmem>>, vector<16x1x64xf32>,
    %248 = vector.extract_strided_slice %126 {offsets = [2, 0], sizes = [1, 64], strides = [1, 1]} : vector<8x64xf32> to vector<1x64xf32>
    %249 = vector.broadcast %248 : vector<1x64xf32> to vector<16x64xf32>
    %250 = arith.mulf %124, %249 : vector<16x64xf32>
    %251 = math.exp %250 : vector<16x64xf32>
    %252 = arith.mulf %251, %244 : vector<16x64xf32>
    %c2_132 = arith.constant 2 : index
    %c0_133 = arith.constant 0 : index
    %c0_134 = arith.constant 0 : index
    %253 = vector.load %arg25[%c2_132, %c0_133, %c0_134] : memref<8x16x64xf32, #tpu.memory_space<vmem>>, vector<1x16x64xf32>
    %254 = vector.shape_cast %253 : vector<1x16x64xf32> to vector<16x64xf32>
    %255 = arith.addf %252, %254 : vector<16x64xf32>
    %c0_135 = arith.constant 0 : index
    %c2_136 = arith.constant 2 : index
    %c0_137 = arith.constant 0 : index
    %256 = vector.load %arg26[%c0_135, %c2_136, %c0_137] : memref<16x8x64xf32, #tpu.memory_space<vmem>>, vector<16x1x64xf32>
    %257 = vector.shape_cast %256 : vector<16x1x64xf32> to vector<16x64xf32>
    %258 = vector.shape_cast %255 : vector<16x64xf32> to vector<16x1x64xf32>
    tpu.vector_store %arg26[%c0_135, %c2_136, %c0_137], %258 {strides = array<i32>} : memref<16x8x64xf32, #tpu.memory_space<vmem>>, vector<16x1x64xf32>,
    %259 = vector.extract_strided_slice %126 {offsets = [3, 0], sizes = [1, 64], strides = [1, 1]} : vector<8x64xf32> to vector<1x64xf32>
    %260 = vector.broadcast %259 : vector<1x64xf32> to vector<16x64xf32>
    %261 = arith.mulf %124, %260 : vector<16x64xf32>
    %262 = math.exp %261 : vector<16x64xf32>
    %263 = arith.mulf %262, %255 : vector<16x64xf32>
    %c3_138 = arith.constant 3 : index
    %c0_139 = arith.constant 0 : index
    %c0_140 = arith.constant 0 : index
    %264 = vector.load %arg25[%c3_138, %c0_139, %c0_140] : memref<8x16x64xf32, #tpu.memory_space<vmem>>, vector<1x16x64xf32>
    %265 = vector.shape_cast %264 : vector<1x16x64xf32> to vector<16x64xf32>
    %266 = arith.addf %263, %265 : vector<16x64xf32>
    %c0_141 = arith.constant 0 : index
    %c3_142 = arith.constant 3 : index
    %c0_143 = arith.constant 0 : index
    %267 = vector.load %arg26[%c0_141, %c3_142, %c0_143] : memref<16x8x64xf32, #tpu.memory_space<vmem>>, vector<16x1x64xf32>
    %268 = vector.shape_cast %267 : vector<16x1x64xf32> to vector<16x64xf32>
    %269 = vector.shape_cast %266 : vector<16x64xf32> to vector<16x1x64xf32>
    tpu.vector_store %arg26[%c0_141, %c3_142, %c0_143], %269 {strides = array<i32>} : memref<16x8x64xf32, #tpu.memory_space<vmem>>, vector<16x1x64xf32>,
    %270 = vector.extract_strided_slice %126 {offsets = [4, 0], sizes = [1, 64], strides = [1, 1]} : vector<8x64xf32> to vector<1x64xf32>
    %271 = vector.broadcast %270 : vector<1x64xf32> to vector<16x64xf32>
    %272 = arith.mulf %124, %271 : vector<16x64xf32>
    %273 = math.exp %272 : vector<16x64xf32>
    %274 = arith.mulf %273, %266 : vector<16x64xf32>
    %c4_144 = arith.constant 4 : index
    %c0_145 = arith.constant 0 : index
    %c0_146 = arith.constant 0 : index
    %275 = vector.load %arg25[%c4_144, %c0_145, %c0_146] : memref<8x16x64xf32, #tpu.memory_space<vmem>>, vector<1x16x64xf32>
    %276 = vector.shape_cast %275 : vector<1x16x64xf32> to vector<16x64xf32>
    %277 = arith.addf %274, %276 : vector<16x64xf32>
    %c0_147 = arith.constant 0 : index
    %c4_148 = arith.constant 4 : index
    %c0_149 = arith.constant 0 : index
    %278 = vector.load %arg26[%c0_147, %c4_148, %c0_149] : memref<16x8x64xf32, #tpu.memory_space<vmem>>, vector<16x1x64xf32>
    %279 = vector.shape_cast %278 : vector<16x1x64xf32> to vector<16x64xf32>
    %280 = vector.shape_cast %277 : vector<16x64xf32> to vector<16x1x64xf32>
    tpu.vector_store %arg26[%c0_147, %c4_148, %c0_149], %280 {strides = array<i32>} : memref<16x8x64xf32, #tpu.memory_space<vmem>>, vector<16x1x64xf32>,
    %281 = vector.extract_strided_slice %126 {offsets = [5, 0], sizes = [1, 64], strides = [1, 1]} : vector<8x64xf32> to vector<1x64xf32>
    %282 = vector.broadcast %281 : vector<1x64xf32> to vector<16x64xf32>
    %283 = arith.mulf %124, %282 : vector<16x64xf32>
    %284 = math.exp %283 : vector<16x64xf32>
    %285 = arith.mulf %284, %277 : vector<16x64xf32>
    %c5_150 = arith.constant 5 : index
    %c0_151 = arith.constant 0 : index
    %c0_152 = arith.constant 0 : index
    %286 = vector.load %arg25[%c5_150, %c0_151, %c0_152] : memref<8x16x64xf32, #tpu.memory_space<vmem>>, vector<1x16x64xf32>
    %287 = vector.shape_cast %286 : vector<1x16x64xf32> to vector<16x64xf32>
    %288 = arith.addf %285, %287 : vector<16x64xf32>
    %c0_153 = arith.constant 0 : index
    %c5_154 = arith.constant 5 : index
    %c0_155 = arith.constant 0 : index
    %289 = vector.load %arg26[%c0_153, %c5_154, %c0_155] : memref<16x8x64xf32, #tpu.memory_space<vmem>>, vector<16x1x64xf32>
    %290 = vector.shape_cast %289 : vector<16x1x64xf32> to vector<16x64xf32>
    %291 = vector.shape_cast %288 : vector<16x64xf32> to vector<16x1x64xf32>
    tpu.vector_store %arg26[%c0_153, %c5_154, %c0_155], %291 {strides = array<i32>} : memref<16x8x64xf32, #tpu.memory_space<vmem>>, vector<16x1x64xf32>,
    %292 = vector.extract_strided_slice %126 {offsets = [6, 0], sizes = [1, 64], strides = [1, 1]} : vector<8x64xf32> to vector<1x64xf32>
    %293 = vector.broadcast %292 : vector<1x64xf32> to vector<16x64xf32>
    %294 = arith.mulf %124, %293 : vector<16x64xf32>
    %295 = math.exp %294 : vector<16x64xf32>
    %296 = arith.mulf %295, %288 : vector<16x64xf32>
    %c6_156 = arith.constant 6 : index
    %c0_157 = arith.constant 0 : index
    %c0_158 = arith.constant 0 : index
    %297 = vector.load %arg25[%c6_156, %c0_157, %c0_158] : memref<8x16x64xf32, #tpu.memory_space<vmem>>, vector<1x16x64xf32>
    %298 = vector.shape_cast %297 : vector<1x16x64xf32> to vector<16x64xf32>
    %299 = arith.addf %296, %298 : vector<16x64xf32>
    %c0_159 = arith.constant 0 : index
    %c6_160 = arith.constant 6 : index
    %c0_161 = arith.constant 0 : index
    %300 = vector.load %arg26[%c0_159, %c6_160, %c0_161] : memref<16x8x64xf32, #tpu.memory_space<vmem>>, vector<16x1x64xf32>
    %301 = vector.shape_cast %300 : vector<16x1x64xf32> to vector<16x64xf32>
    %302 = vector.shape_cast %299 : vector<16x64xf32> to vector<16x1x64xf32>
    tpu.vector_store %arg26[%c0_159, %c6_160, %c0_161], %302 {strides = array<i32>} : memref<16x8x64xf32, #tpu.memory_space<vmem>>, vector<16x1x64xf32>,
    %303 = vector.extract_strided_slice %126 {offsets = [7, 0], sizes = [1, 64], strides = [1, 1]} : vector<8x64xf32> to vector<1x64xf32>
    %304 = vector.broadcast %303 : vector<1x64xf32> to vector<16x64xf32>
    %305 = arith.mulf %124, %304 : vector<16x64xf32>
    %306 = math.exp %305 : vector<16x64xf32>
    %307 = arith.mulf %306, %299 : vector<16x64xf32>
    %c7_162 = arith.constant 7 : index
    %c0_163 = arith.constant 0 : index
    %c0_164 = arith.constant 0 : index
    %308 = vector.load %arg25[%c7_162, %c0_163, %c0_164] : memref<8x16x64xf32, #tpu.memory_space<vmem>>, vector<1x16x64xf32>
    %309 = vector.shape_cast %308 : vector<1x16x64xf32> to vector<16x64xf32>
    %310 = arith.addf %307, %309 : vector<16x64xf32>
    %c0_165 = arith.constant 0 : index
    %c7_166 = arith.constant 7 : index
    %c0_167 = arith.constant 0 : index
    %311 = vector.load %arg26[%c0_165, %c7_166, %c0_167] : memref<16x8x64xf32, #tpu.memory_space<vmem>>, vector<16x1x64xf32>
    %312 = vector.shape_cast %311 : vector<16x1x64xf32> to vector<16x64xf32>
    %313 = vector.shape_cast %310 : vector<16x64xf32> to vector<16x1x64xf32>
    tpu.vector_store %arg26[%c0_165, %c7_166, %c0_167], %313 {strides = array<i32>} : memref<16x8x64xf32, #tpu.memory_space<vmem>>, vector<16x1x64xf32>,
    %cst_168 = arith.constant 0.000000e+00 : f32
    %314 = vector.broadcast %cst_168 : f32 to vector<8x64xf32>
    %315 = vector.extract_strided_slice %128 {offsets = [0, 16], sizes = [8, 1], strides = [1, 1]} : vector<8x32xf32> to vector<8x1xf32>
    %c0_169 = arith.constant 0 : index
    %c0_170 = arith.constant 0 : index
    %c0_171 = arith.constant 0 : index
    %316 = vector.load %arg26[%c0_169, %c0_170, %c0_171] : memref<16x8x64xf32, #tpu.memory_space<vmem>>, vector<1x8x64xf32>
    %317 = vector.shape_cast %316 : vector<1x8x64xf32> to vector<8x64xf32>
    %318 = vector.broadcast %315 : vector<8x1xf32> to vector<8x64xf32>
    %319 = arith.mulf %318, %317 : vector<8x64xf32>
    %320 = arith.addf %314, %319 : vector<8x64xf32>
    %321 = vector.extract_strided_slice %128 {offsets = [0, 17], sizes = [8, 1], strides = [1, 1]} : vector<8x32xf32> to vector<8x1xf32>
    %c1_172 = arith.constant 1 : index
    %c0_173 = arith.constant 0 : index
    %c0_174 = arith.constant 0 : index
    %322 = vector.load %arg26[%c1_172, %c0_173, %c0_174] : memref<16x8x64xf32, #tpu.memory_space<vmem>>, vector<1x8x64xf32>
    %323 = vector.shape_cast %322 : vector<1x8x64xf32> to vector<8x64xf32>
    %324 = vector.broadcast %321 : vector<8x1xf32> to vector<8x64xf32>
    %325 = arith.mulf %324, %323 : vector<8x64xf32>
    %326 = arith.addf %320, %325 : vector<8x64xf32>
    %327 = vector.extract_strided_slice %128 {offsets = [0, 18], sizes = [8, 1], strides = [1, 1]} : vector<8x32xf32> to vector<8x1xf32>
    %c2_175 = arith.constant 2 : index
    %c0_176 = arith.constant 0 : index
    %c0_177 = arith.constant 0 : index
    %328 = vector.load %arg26[%c2_175, %c0_176, %c0_177] : memref<16x8x64xf32, #tpu.memory_space<vmem>>, vector<1x8x64xf32>
    %329 = vector.shape_cast %328 : vector<1x8x64xf32> to vector<8x64xf32>
    %330 = vector.broadcast %327 : vector<8x1xf32> to vector<8x64xf32>
    %331 = arith.mulf %330, %329 : vector<8x64xf32>
    %332 = arith.addf %326, %331 : vector<8x64xf32>
    %333 = vector.extract_strided_slice %128 {offsets = [0, 19], sizes = [8, 1], strides = [1, 1]} : vector<8x32xf32> to vector<8x1xf32>
    %c3_178 = arith.constant 3 : index
    %c0_179 = arith.constant 0 : index
    %c0_180 = arith.constant 0 : index
    %334 = vector.load %arg26[%c3_178, %c0_179, %c0_180] : memref<16x8x64xf32, #tpu.memory_space<vmem>>, vector<1x8x64xf32>
    %335 = vector.shape_cast %334 : vector<1x8x64xf32> to vector<8x64xf32>
    %336 = vector.broadcast %333 : vector<8x1xf32> to vector<8x64xf32>
    %337 = arith.mulf %336, %335 : vector<8x64xf32>
    %338 = arith.addf %332, %337 : vector<8x64xf32>
    %339 = vector.extract_strided_slice %128 {offsets = [0, 20], sizes = [8, 1], strides = [1, 1]} : vector<8x32xf32> to vector<8x1xf32>
    %c4_181 = arith.constant 4 : index
    %c0_182 = arith.constant 0 : index
    %c0_183 = arith.constant 0 : index
    %340 = vector.load %arg26[%c4_181, %c0_182, %c0_183] : memref<16x8x64xf32, #tpu.memory_space<vmem>>, vector<1x8x64xf32>
    %341 = vector.shape_cast %340 : vector<1x8x64xf32> to vector<8x64xf32>
    %342 = vector.broadcast %339 : vector<8x1xf32> to vector<8x64xf32>
    %343 = arith.mulf %342, %341 : vector<8x64xf32>
    %344 = arith.addf %338, %343 : vector<8x64xf32>
    %345 = vector.extract_strided_slice %128 {offsets = [0, 21], sizes = [8, 1], strides = [1, 1]} : vector<8x32xf32> to vector<8x1xf32>
    %c5_184 = arith.constant 5 : index
    %c0_185 = arith.constant 0 : index
    %c0_186 = arith.constant 0 : index
    %346 = vector.load %arg26[%c5_184, %c0_185, %c0_186] : memref<16x8x64xf32, #tpu.memory_space<vmem>>, vector<1x8x64xf32>
    %347 = vector.shape_cast %346 : vector<1x8x64xf32> to vector<8x64xf32>
    %348 = vector.broadcast %345 : vector<8x1xf32> to vector<8x64xf32>
    %349 = arith.mulf %348, %347 : vector<8x64xf32>
    %350 = arith.addf %344, %349 : vector<8x64xf32>
    %351 = vector.extract_strided_slice %128 {offsets = [0, 22], sizes = [8, 1], strides = [1, 1]} : vector<8x32xf32> to vector<8x1xf32>
    %c6_187 = arith.constant 6 : index
    %c0_188 = arith.constant 0 : index
    %c0_189 = arith.constant 0 : index
    %352 = vector.load %arg26[%c6_187, %c0_188, %c0_189] : memref<16x8x64xf32, #tpu.memory_space<vmem>>, vector<1x8x64xf32>
    %353 = vector.shape_cast %352 : vector<1x8x64xf32> to vector<8x64xf32>
    %354 = vector.broadcast %351 : vector<8x1xf32> to vector<8x64xf32>
    %355 = arith.mulf %354, %353 : vector<8x64xf32>
    %356 = arith.addf %350, %355 : vector<8x64xf32>
    %357 = vector.extract_strided_slice %128 {offsets = [0, 23], sizes = [8, 1], strides = [1, 1]} : vector<8x32xf32> to vector<8x1xf32>
    %c7_190 = arith.constant 7 : index
    %c0_191 = arith.constant 0 : index
    %c0_192 = arith.constant 0 : index
    %358 = vector.load %arg26[%c7_190, %c0_191, %c0_192] : memref<16x8x64xf32, #tpu.memory_space<vmem>>, vector<1x8x64xf32>
    %359 = vector.shape_cast %358 : vector<1x8x64xf32> to vector<8x64xf32>
    %360 = vector.broadcast %357 : vector<8x1xf32> to vector<8x64xf32>
    %361 = arith.mulf %360, %359 : vector<8x64xf32>
    %362 = arith.addf %356, %361 : vector<8x64xf32>
    %363 = vector.extract_strided_slice %128 {offsets = [0, 24], sizes = [8, 1], strides = [1, 1]} : vector<8x32xf32> to vector<8x1xf32>
    %c8_193 = arith.constant 8 : index
    %c0_194 = arith.constant 0 : index
    %c0_195 = arith.constant 0 : index
    %364 = vector.load %arg26[%c8_193, %c0_194, %c0_195] : memref<16x8x64xf32, #tpu.memory_space<vmem>>, vector<1x8x64xf32>
    %365 = vector.shape_cast %364 : vector<1x8x64xf32> to vector<8x64xf32>
    %366 = vector.broadcast %363 : vector<8x1xf32> to vector<8x64xf32>
    %367 = arith.mulf %366, %365 : vector<8x64xf32>
    %368 = arith.addf %362, %367 : vector<8x64xf32>
    %369 = vector.extract_strided_slice %128 {offsets = [0, 25], sizes = [8, 1], strides = [1, 1]} : vector<8x32xf32> to vector<8x1xf32>
    %c9_196 = arith.constant 9 : index
    %c0_197 = arith.constant 0 : index
    %c0_198 = arith.constant 0 : index
    %370 = vector.load %arg26[%c9_196, %c0_197, %c0_198] : memref<16x8x64xf32, #tpu.memory_space<vmem>>, vector<1x8x64xf32>
    %371 = vector.shape_cast %370 : vector<1x8x64xf32> to vector<8x64xf32>
    %372 = vector.broadcast %369 : vector<8x1xf32> to vector<8x64xf32>
    %373 = arith.mulf %372, %371 : vector<8x64xf32>
    %374 = arith.addf %368, %373 : vector<8x64xf32>
    %375 = vector.extract_strided_slice %128 {offsets = [0, 26], sizes = [8, 1], strides = [1, 1]} : vector<8x32xf32> to vector<8x1xf32>
    %c10_199 = arith.constant 10 : index
    %c0_200 = arith.constant 0 : index
    %c0_201 = arith.constant 0 : index
    %376 = vector.load %arg26[%c10_199, %c0_200, %c0_201] : memref<16x8x64xf32, #tpu.memory_space<vmem>>, vector<1x8x64xf32>
    %377 = vector.shape_cast %376 : vector<1x8x64xf32> to vector<8x64xf32>
    %378 = vector.broadcast %375 : vector<8x1xf32> to vector<8x64xf32>
    %379 = arith.mulf %378, %377 : vector<8x64xf32>
    %380 = arith.addf %374, %379 : vector<8x64xf32>
    %381 = vector.extract_strided_slice %128 {offsets = [0, 27], sizes = [8, 1], strides = [1, 1]} : vector<8x32xf32> to vector<8x1xf32>
    %c11_202 = arith.constant 11 : index
    %c0_203 = arith.constant 0 : index
    %c0_204 = arith.constant 0 : index
    %382 = vector.load %arg26[%c11_202, %c0_203, %c0_204] : memref<16x8x64xf32, #tpu.memory_space<vmem>>, vector<1x8x64xf32>
    %383 = vector.shape_cast %382 : vector<1x8x64xf32> to vector<8x64xf32>
    %384 = vector.broadcast %381 : vector<8x1xf32> to vector<8x64xf32>
    %385 = arith.mulf %384, %383 : vector<8x64xf32>
    %386 = arith.addf %380, %385 : vector<8x64xf32>
    %387 = vector.extract_strided_slice %128 {offsets = [0, 28], sizes = [8, 1], strides = [1, 1]} : vector<8x32xf32> to vector<8x1xf32>
    %c12_205 = arith.constant 12 : index
    %c0_206 = arith.constant 0 : index
    %c0_207 = arith.constant 0 : index
    %388 = vector.load %arg26[%c12_205, %c0_206, %c0_207] : memref<16x8x64xf32, #tpu.memory_space<vmem>>, vector<1x8x64xf32>
    %389 = vector.shape_cast %388 : vector<1x8x64xf32> to vector<8x64xf32>
    %390 = vector.broadcast %387 : vector<8x1xf32> to vector<8x64xf32>
    %391 = arith.mulf %390, %389 : vector<8x64xf32>
    %392 = arith.addf %386, %391 : vector<8x64xf32>
    %393 = vector.extract_strided_slice %128 {offsets = [0, 29], sizes = [8, 1], strides = [1, 1]} : vector<8x32xf32> to vector<8x1xf32>
    %c13_208 = arith.constant 13 : index
    %c0_209 = arith.constant 0 : index
    %c0_210 = arith.constant 0 : index
    %394 = vector.load %arg26[%c13_208, %c0_209, %c0_210] : memref<16x8x64xf32, #tpu.memory_space<vmem>>, vector<1x8x64xf32>
    %395 = vector.shape_cast %394 : vector<1x8x64xf32> to vector<8x64xf32>
    %396 = vector.broadcast %393 : vector<8x1xf32> to vector<8x64xf32>
    %397 = arith.mulf %396, %395 : vector<8x64xf32>
    %398 = arith.addf %392, %397 : vector<8x64xf32>
    %399 = vector.extract_strided_slice %128 {offsets = [0, 30], sizes = [8, 1], strides = [1, 1]} : vector<8x32xf32> to vector<8x1xf32>
    %c14_211 = arith.constant 14 : index
    %c0_212 = arith.constant 0 : index
    %c0_213 = arith.constant 0 : index
    %400 = vector.load %arg26[%c14_211, %c0_212, %c0_213] : memref<16x8x64xf32, #tpu.memory_space<vmem>>, vector<1x8x64xf32>
    %401 = vector.shape_cast %400 : vector<1x8x64xf32> to vector<8x64xf32>
    %402 = vector.broadcast %399 : vector<8x1xf32> to vector<8x64xf32>
    %403 = arith.mulf %402, %401 : vector<8x64xf32>
    %404 = arith.addf %398, %403 : vector<8x64xf32>
    %405 = vector.extract_strided_slice %128 {offsets = [0, 31], sizes = [8, 1], strides = [1, 1]} : vector<8x32xf32> to vector<8x1xf32>
    %c15_214 = arith.constant 15 : index
    %c0_215 = arith.constant 0 : index
    %c0_216 = arith.constant 0 : index
    %406 = vector.load %arg26[%c15_214, %c0_215, %c0_216] : memref<16x8x64xf32, #tpu.memory_space<vmem>>, vector<1x8x64xf32>
    %407 = vector.shape_cast %406 : vector<1x8x64xf32> to vector<8x64xf32>
    %408 = vector.broadcast %405 : vector<8x1xf32> to vector<8x64xf32>
    %409 = arith.mulf %408, %407 : vector<8x64xf32>
    %410 = arith.addf %404, %409 : vector<8x64xf32>
    %c0_217 = arith.constant 0 : index
    %c0_218 = arith.constant 0 : index
    %411 = vector.load %arg24[%c0_217, %c0_218] : memref<8x64xf32, #tpu.memory_space<vmem>>, vector<8x64xf32>
    tpu.vector_store %arg24[%c0_217, %c0_218], %410 {strides = array<i32>} : memref<8x64xf32, #tpu.memory_space<vmem>>, vector<8x64xf32>,
    %c0_219 = arith.constant 0 : index
    %c0_220 = arith.constant 0 : index
    %412 = vector.load %arg24[%c0_219, %c0_220] : memref<8x64xf32, #tpu.memory_space<vmem>>, vector<8x64xf32>
    %c0_221 = arith.constant 0 : index
    %c0_222 = arith.constant 0 : index
    %413 = vector.load %arg20[%c0_221, %c0_222] : memref<8x64xf32, #tpu.memory_space<vmem>>, vector<8x64xf32>
    %c0_223 = arith.constant 0 : index
    %c0_224 = arith.constant 0 : index
    %c0_225 = arith.constant 0 : index
    %414 = vector.load %arg16[%c0_223, %c0_224, %c0_225] : memref<1x1x64xf32, #tpu.memory_space<vmem>>, vector<1x1x64xf32>
    %415 = vector.shape_cast %414 : vector<1x1x64xf32> to vector<1x64xf32>
    %416 = vector.broadcast %415 : vector<1x64xf32> to vector<8x64xf32>
    %417 = arith.mulf %413, %416 : vector<8x64xf32>
    %418 = arith.addf %412, %417 : vector<8x64xf32>
    %c0_226 = arith.constant 0 : index
    %c0_227 = arith.constant 0 : index
    %419 = vector.load %arg23[%c0_226, %c0_227] : memref<8x64xf32, #tpu.memory_space<vmem>>, vector<8x64xf32>
    %420 = arith.mulf %418, %419 : vector<8x64xf32>
    %c0_228 = arith.constant 0 : index
    %c0_229 = arith.constant 0 : index
    %c0_230 = arith.constant 0 : index
    %421 = vector.load %arg17[%c0_228, %c0_229, %c0_230] : memref<1x64x32xf32, #tpu.memory_space<vmem>>, vector<1x64x32xf32>
    %422 = vector.shape_cast %421 : vector<1x64x32xf32> to vector<64x32xf32>
    %cst_231 = arith.constant dense<0.000000e+00> : vector<8x32xf32>
    %423 = tpu.matmul %420, %422, %cst_231 {dimension_numbers = #tpu.dot_dimension_numbers<[1], [0], [0], [1], [0, 0, 1, 1], [], []>} : vector<8x64xf32>, vector<64x32xf32>, vector<8x32xf32> -> vector<8x32xf32>
    %c0_232 = arith.constant 0 : index
    %c0_233 = arith.constant 0 : index
    %c0_234 = arith.constant 0 : index
    %c0_235 = arith.constant 0 : index
    %424 = vector.load %arg18[%c0_232, %c0_233, %c0_234, %c0_235] : memref<1x1x8x32xf32, #tpu.memory_space<vmem>>, vector<1x1x8x32xf32>
    %425 = vector.shape_cast %424 : vector<1x1x8x32xf32> to vector<8x32xf32>
    %426 = vector.shape_cast %423 : vector<8x32xf32> to vector<1x1x8x32xf32>
    tpu.vector_store %arg18[%c0_232, %c0_233, %c0_234, %c0_235], %426 {strides = array<i32>} : memref<1x1x8x32xf32, #tpu.memory_space<vmem>>, vector<1x1x8x32xf32>,
    return
  }
  func.func @transform_0(%arg0: i32, %arg1: i32) -> (i32, i32, i32) {
    %c0_i32 = arith.constant 0 : i32
    %c0_i32_0 = arith.constant 0 : i32
    %c0_i32_1 = arith.constant 0 : i32
    return %arg1, %c0_i32, %c0_i32_0 : i32, i32, i32
  }
  func.func @transform_1(%arg0: i32, %arg1: i32) -> (i32, i32) {
    %c0_i32 = arith.constant 0 : i32
    %c0_i32_0 = arith.constant 0 : i32
    %c0_i32_1 = arith.constant 0 : i32
    return %c0_i32, %c0_i32_0 : i32, i32
  }
  func.func @transform_2(%arg0: i32, %arg1: i32) -> (i32, i32) {
    %c0_i32 = arith.constant 0 : i32
    %c0_i32_0 = arith.constant 0 : i32
    %c0_i32_1 = arith.constant 0 : i32
    return %c0_i32, %c0_i32_0 : i32, i32
  }
  func.func @transform_3(%arg0: i32, %arg1: i32) -> (i32, i32) {
    %c0_i32 = arith.constant 0 : i32
    %c0_i32_0 = arith.constant 0 : i32
    %c0_i32_1 = arith.constant 0 : i32
    return %c0_i32, %c0_i32_0 : i32, i32
  }
  func.func @transform_4(%arg0: i32, %arg1: i32) -> (i32, i32) {
    %c0_i32 = arith.constant 0 : i32
    %c0_i32_0 = arith.constant 0 : i32
    %c0_i32_1 = arith.constant 0 : i32
    return %c0_i32, %c0_i32_0 : i32, i32
  }
  func.func @transform_5(%arg0: i32, %arg1: i32) -> (i32, i32, i32) {
    %c0_i32 = arith.constant 0 : i32
    %c0_i32_0 = arith.constant 0 : i32
    %c0_i32_1 = arith.constant 0 : i32
    return %arg0, %c0_i32, %c0_i32_0 : i32, i32, i32
  }
  func.func @transform_6(%arg0: i32, %arg1: i32) -> (i32, i32, i32) {
    %c0_i32 = arith.constant 0 : i32
    %c0_i32_0 = arith.constant 0 : i32
    %c0_i32_1 = arith.constant 0 : i32
    return %arg0, %c0_i32, %c0_i32_0 : i32, i32, i32
  }
  func.func @transform_7(%arg0: i32, %arg1: i32) -> (i32, i32, i32) {
    %c0_i32 = arith.constant 0 : i32
    %c0_i32_0 = arith.constant 0 : i32
    %c0_i32_1 = arith.constant 0 : i32
    return %arg0, %c0_i32, %c0_i32_0 : i32, i32, i32
  }
  func.func @transform_8(%arg0: i32, %arg1: i32) -> (i32, i32, i32) {
    %c0_i32 = arith.constant 0 : i32
    %c0_i32_0 = arith.constant 0 : i32
    %c0_i32_1 = arith.constant 0 : i32
    return %arg0, %c0_i32, %c0_i32_0 : i32, i32, i32
  }
  func.func @transform_9(%arg0: i32, %arg1: i32) -> (i32, i32, i32) {
    %c0_i32 = arith.constant 0 : i32
    %c0_i32_0 = arith.constant 0 : i32
    %c0_i32_1 = arith.constant 0 : i32
    return %arg0, %c0_i32, %c0_i32_0 : i32, i32, i32
  }
  func.func @transform_10(%arg0: i32, %arg1: i32) -> (i32, i32, i32) {
    %c0_i32 = arith.constant 0 : i32
    %c0_i32_0 = arith.constant 0 : i32
    %c0_i32_1 = arith.constant 0 : i32
    return %arg0, %c0_i32, %c0_i32_0 : i32, i32, i32
  }
  func.func @transform_11(%arg0: i32, %arg1: i32) -> (i32, i32, i32) {
    %c0_i32 = arith.constant 0 : i32
    %c0_i32_0 = arith.constant 0 : i32
    %c0_i32_1 = arith.constant 0 : i32
    return %arg0, %c0_i32, %c0_i32_0 : i32, i32, i32
  }
  func.func @transform_12(%arg0: i32, %arg1: i32) -> (i32, i32, i32) {
    %c0_i32 = arith.constant 0 : i32
    %c0_i32_0 = arith.constant 0 : i32
    %c0_i32_1 = arith.constant 0 : i32
    return %arg0, %c0_i32, %c0_i32_0 : i32, i32, i32
  }
  func.func @transform_13(%arg0: i32, %arg1: i32) -> (i32, i32, i32) {
    %c0_i32 = arith.constant 0 : i32
    %c0_i32_0 = arith.constant 0 : i32
    %c0_i32_1 = arith.constant 0 : i32
    return %arg0, %c0_i32, %c0_i32_0 : i32, i32, i32
  }
  func.func @transform_14(%arg0: i32, %arg1: i32) -> (i32, i32, i32) {
    %c0_i32 = arith.constant 0 : i32
    %c0_i32_0 = arith.constant 0 : i32
    %c0_i32_1 = arith.constant 0 : i32
    return %arg0, %c0_i32, %c0_i32_0 : i32, i32, i32
  }
  func.func @transform_15(%arg0: i32, %arg1: i32) -> (i32, i32, i32) {
    %c0_i32 = arith.constant 0 : i32
    %c0_i32_0 = arith.constant 0 : i32
    %c0_i32_1 = arith.constant 0 : i32
    return %arg0, %c0_i32, %c0_i32_0 : i32, i32, i32
  }
  func.func @transform_16(%arg0: i32, %arg1: i32) -> (i32, i32, i32, i32) {
    %c0_i32 = arith.constant 0 : i32
    %c0_i32_0 = arith.constant 0 : i32
    %c0_i32_1 = arith.constant 0 : i32
    return %arg0, %arg1, %c0_i32, %c0_i32_0 : i32, i32, i32, i32
  }
}

</mosaic_0001>

<llo_original>
// kernel: bit_mamsleep_forward.3
$region0: #{bit_mamsleep_forward.3}
  #allocation0 [shape = 'u32[]', space=smem, size = 0x4, offset = 0x4, fixed_abs, tag = 'smem constant byte address 0x4 - core index']
  #allocation1 [shape = 'u32[144,128]{1,0:T(1,128)}', space=vmem, size = 0x12000, scoped, tag = 'internal scratch']
  %s0 = inlined_call_operand.hbm [shape: f32[2,8,32], index: 0, kind: input, shape index: {}]
  %s1 = inlined_call_operand.hbm [shape: f32[2,2,8,32], index: 1, kind: input, shape index: {}, may-alias: {1,2}]
  %s2 = inlined_call_operand.hbm [shape: f32[2,2,8,32], index: 2, kind: input, shape index: {}, may-alias: {1,2}]
  %s3 = inlined_call_operand.hbm [shape: f32[32,32], index: 3, kind: input, shape index: {}]
  %s4 = inlined_call_operand.hbm [shape: f32[1,32], index: 4, kind: input, shape index: {}]
  %s5 = inlined_call_operand.hbm [shape: f32[32,32], index: 5, kind: input, shape index: {}]
  %s6 = inlined_call_operand.hbm [shape: f32[1,32], index: 6, kind: input, shape index: {}]
  %s7 = inlined_call_operand.hbm [shape: f32[1,32], index: 7, kind: input, shape index: {}]
  %s8 = inlined_call_operand.hbm [shape: f32[1,32], index: 8, kind: input, shape index: {}]
  %s9 = inlined_call_operand.hbm [shape: f32[2,8,32], index: 9, kind: output, shape index: {}]
  %s10 = sld [smem:[#allocation0]]
  $region105: #{bit_mamsleep_forward.3} parent=0
    _
  %s12 = ssub.s32 1, %s10
  %s13 = scalar_select 0, %s12, %s10
  $region1: #{bit_mamsleep_forward.3} parent=0
    #allocation2 [shape = 'u8[8192]{0}', space=vmem, size = 0x2000, scoped, tag = 'input window, operand 0']
    #allocation3 [shape = 's32[2]{0}', space=sflag, size = 0x8, scoped, tag = 'scoped memory for bit_mamsleep_forward.3']
    #allocation4 [shape = 's32[2]{0}', space=sflag, size = 0x8, scoped, tag = 'scoped memory for bit_mamsleep_forward.3']
    #allocation5 [shape = 'u8[8192]{0}', space=vmem, size = 0x2000, scoped, tag = 'input window, operand 1']
    #allocation6 [shape = 's32[2]{0}', space=sflag, size = 0x8, scoped, tag = 'scoped memory for bit_mamsleep_forward.3']
    #allocation7 [shape = 'u8[8192]{0}', space=vmem, size = 0x2000, scoped, tag = 'input window, operand 2']
    #allocation8 [shape = 'u8[16384]{0}', space=vmem, size = 0x4000, scoped, tag = 'input window, operand 3, single buffered']
    #allocation9 [shape = 's32[1]{0}', space=sflag, size = 0x4, scoped, tag = 'scoped memory for bit_mamsleep_forward.3']
    #allocation10 [shape = 'u8[512]{0}', space=vmem, size = 0x400, scoped, tag = 'input window, operand 4, single buffered']
    #allocation11 [shape = 'u8[16384]{0}', space=vmem, size = 0x4000, scoped, tag = 'input window, operand 5, single buffered']
    #allocation12 [shape = 's32[1]{0}', space=sflag, size = 0x4, scoped, tag = 'scoped memory for bit_mamsleep_forward.3']
    #allocation13 [shape = 'u8[512]{0}', space=vmem, size = 0x400, scoped, tag = 'input window, operand 6, single buffered']
    #allocation14 [shape = 'u8[512]{0}', space=vmem, size = 0x400, scoped, tag = 'input window, operand 7, single buffered']
    #allocation15 [shape = 's32[1]{0}', space=sflag, size = 0x4, scoped, tag = 'scoped memory for bit_mamsleep_forward.3']
    #allocation16 [shape = 'u8[512]{0}', space=vmem, size = 0x400, scoped, tag = 'input window, operand 8, single buffered']
    #allocation17 [shape = 'u8[8192]{0}', space=vmem, size = 0x2000, scoped, tag = 'output window, operand 0']
    %14 = vsyncpa [#allocation3], 0
    %s15 = scalar_lea.sflag [#allocation3], 1
    %16 = vsyncpa %s15, 0
    %17 = vsyncpa [#allocation6], 0
    %s18 = scalar_lea.sflag [#allocation6], 1
    %19 = vsyncpa %s18, 0
    %20 = vsyncpa [#allocation9], 0
    %21 = vsyncpa [#allocation12], 0
    %22 = vsyncpa [#allocation15], 0
    %23 = vsyncpa [#allocation4], 0
    %s24 = scalar_lea.sflag [#allocation4], 1
    %25 = vsyncpa %s24, 0
    loop: start=0, step=1, limit=4
    $region2: #{bit_mamsleep_forward.3} parent=1 // loop_pre_header
      _
    $region3: #{bit_mamsleep_forward.3} parent=1 // loop_header
      %s27 = sphi 0, %s31
      %p28 = scmp.ge.s32.totalorder %s27, 4
      %s34 = sphi 0, %s46
      %s35 = sphi 0, %s42
      %s36 = sphi 0, %s34
      %s37 = sphi 0, %s35
      %s38 = sphi 0, %s36
      %s39 = sphi 0, %s37
      %s51 = sphi 0, %s53
      %s54 = sphi 0, %s51
      %s55 = sphi 0, %s54
      %s71 = sphi 0, %s55
      %s79 = sphi 0, %s81
      %s82 = sphi 0, %s79
      %s83 = sphi 0, %s82
      %s99 = sphi 0, %s83
      %s109 = sphi 0, %s111
      %s112 = sphi 0, %s109
      %s113 = sphi 0, %s112
      %s129 = sphi 0, %s113
      %s133 = sphi 0, %s133
      %s135 = sphi 0, %s133
      %s136 = sphi 0, %s135
      %s150 = sphi 0, %s136
      %s154 = sphi 0, %s154
      %s156 = sphi 0, %s154
      %s157 = sphi 0, %s156
      %s171 = sphi 0, %s157
      %s175 = sphi 0, %s175
      %s177 = sphi 0, %s175
      %s178 = sphi 0, %s177
      %s192 = sphi 0, %s178
      %s196 = sphi 0, %s196
      %s198 = sphi 0, %s196
      %s199 = sphi 0, %s198
      %s213 = sphi 0, %s199
      %s217 = sphi 0, %s217
      %s219 = sphi 0, %s217
      %s220 = sphi 0, %s219
      %s234 = sphi 0, %s220
      %s238 = sphi 0, %s238
      %s240 = sphi 0, %s238
      %s241 = sphi 0, %s240
      %s255 = sphi 0, %s241
      %s263 = sphi 0, %s265
      %s266 = sphi 0, %s263
      %s267 = sphi 0, %s266
      %s283 = sphi 0, %s267
    $region4: #{bit_mamsleep_forward.3} parent=1 // loop_header_branch
      %30 = sbr.rel (%p28) target = $region8
    $region5: #{bit_mamsleep_forward.3} parent=1 // loop_body
      %s32 = ssub.s32 %s27, 1
      %s33 = ssub.s32 %s27, 2
      %s40 = sadd.s32 1, %s35
      %p41 = scmp.ge.s32.totalorder %s40, 1
      %s42 = scalar_select %p41, 0, %s40
      %s43 = sadd.s32 1, %s34
      %s44 = scalar_select %p41, %s43, %s34
      %p45 = scmp.ge.s32.totalorder %s44, 2
      %s46 = scalar_select %p45, 0, %s44
      %s47 = ssub.s32 %s34, %s46
      %s48 = ssub.s32 %s35, %s42
      %s49 = sor.u32 %s47, %s48
      %p50 = scmp.eq.s32.totalorder %s49, 0
      %s52 = sadd.s32 %s51, 1
      %s53 = scalar_select %p50, %s51, %s52
      %p56 = pneg %p50
      %p57 = scmp.eq.s32.totalorder %s27, 1
      %p58 = por %p56, %p57
      %p59 = scmp.ne.s32.totalorder %s51, %s54
      %p60 = scmp.eq.s32.totalorder %s27, 0
      %p61 = por %p59, %p60
      %p62 = scmp.ne.s32.totalorder %s51, %s54
      %p63 = scmp.eq.s32.totalorder %s32, 1
      %p64 = por %p62, %p63
      %p65 = scmp.ne.s32.totalorder %s54, %s55
      %p66 = scmp.eq.s32.totalorder %s32, 0
      %p67 = por %p65, %p66
      %p68 = scmp.ne.s32.totalorder %s54, %s55
      %p69 = scmp.eq.s32.totalorder %s33, 1
      %p70 = por %p68, %p69
      %p72 = scmp.ne.s32.totalorder %s55, %s71
      %p73 = scmp.eq.s32.totalorder %s33, 0
      %p74 = por %p72, %p73
      %s75 = ssub.s32 %s34, %s46
      %s76 = ssub.s32 %s35, %s42
      %s77 = sor.u32 %s75, %s76
      %p78 = scmp.eq.s32.totalorder %s77, 0
      %s80 = sadd.s32 %s79, 1
      %s81 = scalar_select %p78, %s79, %s80
      %p84 = pneg %p78
      %p85 = scmp.eq.s32.totalorder %s27, 1
      %p86 = por %p84, %p85
      %p87 = scmp.ne.s32.totalorder %s79, %s82
      %p88 = scmp.eq.s32.totalorder %s27, 0
      %p89 = por %p87, %p88
      %p90 = scmp.ne.s32.totalorder %s79, %s82
      %p91 = scmp.eq.s32.totalorder %s32, 1
      %p92 = por %p90, %p91
      %p93 = scmp.ne.s32.totalorder %s82, %s83
      %p94 = scmp.eq.s32.totalorder %s32, 0
      %p95 = por %p93, %p94
      %p96 = scmp.ne.s32.totalorder %s82, %s83
      %p97 = scmp.eq.s32.totalorder %s33, 1
      %p98 = por %p96, %p97
      %p100 = scmp.ne.s32.totalorder %s83, %s99
      %p101 = scmp.eq.s32.totalorder %s33, 0
      %p102 = por %p100, %p101
      %s103 = ssub.s32 0, %s35
      %s104 = ssub.s32 0, %s42
      %s105 = ssub.s32 %s34, %s46
      %s106 = ssub.s32 %s103, %s104
      %s107 = sor.u32 %s105, %s106
      %p108 = scmp.eq.s32.totalorder %s107, 0
      %s110 = sadd.s32 %s109, 1
      %s111 = scalar_select %p108, %s109, %s110
      %p114 = pneg %p108
      %p115 = scmp.eq.s32.totalorder %s27, 1
      %p116 = por %p114, %p115
      %p117 = scmp.ne.s32.totalorder %s109, %s112
      %p118 = scmp.eq.s32.totalorder %s27, 0
      %p119 = por %p117, %p118
      %p120 = scmp.ne.s32.totalorder %s109, %s112
      %p121 = scmp.eq.s32.totalorder %s32, 1
      %p122 = por %p120, %p121
      %p123 = scmp.ne.s32.totalorder %s112, %s113
      %p124 = scmp.eq.s32.totalorder %s32, 0
      %p125 = por %p123, %p124
      %p126 = scmp.ne.s32.totalorder %s112, %s113
      %p127 = scmp.eq.s32.totalorder %s33, 1
      %p128 = por %p126, %p127
      %p130 = scmp.ne.s32.totalorder %s113, %s129
      %p131 = scmp.eq.s32.totalorder %s33, 0
      %p132 = por %p130, %p131
      %s134 = sadd.s32 %s133, 1
      %p137 = scmp.eq.s32.totalorder %s27, 1
      %p138 = scmp.ne.s32.totalorder %s133, %s135
      %p139 = scmp.eq.s32.totalorder %s27, 0
      %p140 = por %p138, %p139
      %p141 = scmp.ne.s32.totalorder %s133, %s135
      %p142 = scmp.eq.s32.totalorder %s32, 1
      %p143 = por %p141, %p142
      %p144 = scmp.ne.s32.totalorder %s135, %s136
      %p145 = scmp.eq.s32.totalorder %s32, 0
      %p146 = por %p144, %p145
      %p147 = scmp.ne.s32.totalorder %s135, %s136
      %p148 = scmp.eq.s32.totalorder %s33, 1
      %p149 = por %p147, %p148
      %p151 = scmp.ne.s32.totalorder %s136, %s150
      %p152 = scmp.eq.s32.totalorder %s33, 0
      %p153 = por %p151, %p152
      %s155 = sadd.s32 %s154, 1
      %p158 = scmp.eq.s32.totalorder %s27, 1
      %p159 = scmp.ne.s32.totalorder %s154, %s156
      %p160 = scmp.eq.s32.totalorder %s27, 0
      %p161 = por %p159, %p160
      %p162 = scmp.ne.s32.totalorder %s154, %s156
      %p163 = scmp.eq.s32.totalorder %s32, 1
      %p164 = por %p162, %p163
      %p165 = scmp.ne.s32.totalorder %s156, %s157
      %p166 = scmp.eq.s32.totalorder %s32, 0
      %p167 = por %p165, %p166
      %p168 = scmp.ne.s32.totalorder %s156, %s157
      %p169 = scmp.eq.s32.totalorder %s33, 1
      %p170 = por %p168, %p169
      %p172 = scmp.ne.s32.totalorder %s157, %s171
      %p173 = scmp.eq.s32.totalorder %s33, 0
      %p174 = por %p172, %p173
      %s176 = sadd.s32 %s175, 1
      %p179 = scmp.eq.s32.totalorder %s27, 1
      %p180 = scmp.ne.s32.totalorder %s175, %s177
      %p181 = scmp.eq.s32.totalorder %s27, 0
      %p182 = por %p180, %p181
      %p183 = scmp.ne.s32.totalorder %s175, %s177
      %p184 = scmp.eq.s32.totalorder %s32, 1
      %p185 = por %p183, %p184
      %p186 = scmp.ne.s32.totalorder %s177, %s178
      %p187 = scmp.eq.s32.totalorder %s32, 0
      %p188 = por %p186, %p187
      %p189 = scmp.ne.s32.totalorder %s177, %s178
      %p190 = scmp.eq.s32.totalorder %s33, 1
      %p191 = por %p189, %p190
      %p193 = scmp.ne.s32.totalorder %s178, %s192
      %p194 = scmp.eq.s32.totalorder %s33, 0
      %p195 = por %p193, %p194
      %s197 = sadd.s32 %s196, 1
      %p200 = scmp.eq.s32.totalorder %s27, 1
      %p201 = scmp.ne.s32.totalorder %s196, %s198
      %p202 = scmp.eq.s32.totalorder %s27, 0
      %p203 = por %p201, %p202
      %p204 = scmp.ne.s32.totalorder %s196, %s198
      %p205 = scmp.eq.s32.totalorder %s32, 1
      %p206 = por %p204, %p205
      %p207 = scmp.ne.s32.totalorder %s198, %s199
      %p208 = scmp.eq.s32.totalorder %s32, 0
      %p209 = por %p207, %p208
      %p210 = scmp.ne.s32.totalorder %s198, %s199
      %p211 = scmp.eq.s32.totalorder %s33, 1
      %p212 = por %p210, %p211
      %p214 = scmp.ne.s32.totalorder %s199, %s213
      %p215 = scmp.eq.s32.totalorder %s33, 0
      %p216 = por %p214, %p215
      %s218 = sadd.s32 %s217, 1
      %p221 = scmp.eq.s32.totalorder %s27, 1
      %p222 = scmp.ne.s32.totalorder %s217, %s219
      %p223 = scmp.eq.s32.totalorder %s27, 0
      %p224 = por %p222, %p223
      %p225 = scmp.ne.s32.totalorder %s217, %s219
      %p226 = scmp.eq.s32.totalorder %s32, 1
      %p227 = por %p225, %p226
      %p228 = scmp.ne.s32.totalorder %s219, %s220
      %p229 = scmp.eq.s32.totalorder %s32, 0
      %p230 = por %p228, %p229
      %p231 = scmp.ne.s32.totalorder %s219, %s220
      %p232 = scmp.eq.s32.totalorder %s33, 1
      %p233 = por %p231, %p232
      %p235 = scmp.ne.s32.totalorder %s220, %s234
      %p236 = scmp.eq.s32.totalorder %s33, 0
      %p237 = por %p235, %p236
      %s239 = sadd.s32 %s238, 1
      %p242 = scmp.eq.s32.totalorder %s27, 1
      %p243 = scmp.ne.s32.totalorder %s238, %s240
      %p244 = scmp.eq.s32.totalorder %s27, 0
      %p245 = por %p243, %p244
      %p246 = scmp.ne.s32.totalorder %s238, %s240
      %p247 = scmp.eq.s32.totalorder %s32, 1
      %p248 = por %p246, %p247
      %p249 = scmp.ne.s32.totalorder %s240, %s241
      %p250 = scmp.eq.s32.totalorder %s32, 0
      %p251 = por %p249, %p250
      %p252 = scmp.ne.s32.totalorder %s240, %s241
      %p253 = scmp.eq.s32.totalorder %s33, 1
      %p254 = por %p252, %p253
      %p256 = scmp.ne.s32.totalorder %s241, %s255
      %p257 = scmp.eq.s32.totalorder %s33, 0
      %p258 = por %p256, %p257
      %s259 = ssub.s32 %s34, %s46
      %s260 = ssub.s32 %s35, %s42
      %s261 = sor.u32 %s259, %s260
      %p262 = scmp.eq.s32.totalorder %s261, 0
      %s264 = sadd.s32 %s263, 1
      %s265 = scalar_select %p262, %s263, %s264
      %p268 = pneg %p262
      %p269 = scmp.eq.s32.totalorder %s27, 1
      %p270 = por %p268, %p269
      %p271 = scmp.ne.s32.totalorder %s263, %s266
      %p272 = scmp.eq.s32.totalorder %s27, 0
      %p273 = por %p271, %p272
      %p274 = scmp.ne.s32.totalorder %s263, %s266
      %p275 = scmp.eq.s32.totalorder %s32, 1
      %p276 = por %p274, %p275
      %p277 = scmp.ne.s32.totalorder %s266, %s267
      %p278 = scmp.eq.s32.totalorder %s32, 0
      %p279 = por %p277, %p278
      %p280 = scmp.ne.s32.totalorder %s266, %s267
      %p281 = scmp.eq.s32.totalorder %s33, 1
      %p282 = por %p280, %p281
      %p284 = scmp.ne.s32.totalorder %s267, %s283
      %p285 = scmp.eq.s32.totalorder %s33, 0
      %p286 = por %p284, %p285
      %p287 = scmp.le.s32.totalorder 1, %s27
      %p288 = scmp.lt.s32.totalorder %s27, 3
      %p289 = pnand %p287, %p288
      %p290 = pneg %p289
      // Predicated region
      $region9: #{bit_mamsleep_forward.3} parent=5 // pred_check
        _
      $region10: #{bit_mamsleep_forward.3} parent=5 // pred_check_branch
        %292 = sbr.rel (%p289) target = $region12
      $region11: #{bit_mamsleep_forward.3} parent=5 // pred_region
        %s293 = ssub.s32 %s27, 1
        // Predicated region
        $region13: #{bit_mamsleep_forward.3} parent=11 // pred_check
          %p294 = pneg %p146
        $region14: #{bit_mamsleep_forward.3} parent=11 // pred_check_branch
          %296 = sbr.rel (%p294) target = $region16
        $region15: #{bit_mamsleep_forward.3} parent=11 // pred_region
          %s298 = ssub.s32 512, 512
          %299 = vsyncadd [#allocation9], %s298
          %s300 = sshll.u32 [#allocation8], 4
          %s301 = int_to_ptr.vmem [resolvable:$true] %s300
          %306 = dma.hbm_to_vmem [thread:$0]  %s3, 512, %s301, [#allocation9], 128, 128, 8
        $region16: #{bit_mamsleep_forward.3} parent=11 // pred_fallthru
          _
        // Predicated region
        $region17: #{bit_mamsleep_forward.3} parent=11 // pred_check
          %p307 = pneg %p167
        $region18: #{bit_mamsleep_forward.3} parent=11 // pred_check_branch
          %309 = sbr.rel (%p307) target = $region20
        $region19: #{bit_mamsleep_forward.3} parent=11 // pred_region
          %s311 = ssub.s32 16, 16
          %312 = vsyncadd [#allocation9], %s311
          %s314 = sshll.u32 [#allocation10], 4
          %s315 = int_to_ptr.vmem [resolvable:$true] %s314
          %317 = dma.hbm_to_vmem [thread:$0]  %s4, 16, %s315, [#allocation9]
        $region20: #{bit_mamsleep_forward.3} parent=11 // pred_fallthru
          _
        // Predicated region
        $region21: #{bit_mamsleep_forward.3} parent=11 // pred_check
          %p318 = pneg %p188
        $region22: #{bit_mamsleep_forward.3} parent=11 // pred_check_branch
          %320 = sbr.rel (%p318) target = $region24
        $region23: #{bit_mamsleep_forward.3} parent=11 // pred_region
          %s322 = ssub.s32 512, 512
          %323 = vsyncadd [#allocation12], %s322
          %s324 = sshll.u32 [#allocation11], 4
          %s325 = int_to_ptr.vmem [resolvable:$true] %s324
          %330 = dma.hbm_to_vmem [thread:$0]  %s5, 512, %s325, [#allocation12], 128, 128, 8
        $region24: #{bit_mamsleep_forward.3} parent=11 // pred_fallthru
          _
        // Predicated region
        $region25: #{bit_mamsleep_forward.3} parent=11 // pred_check
          %p331 = pneg %p209
        $region26: #{bit_mamsleep_forward.3} parent=11 // pred_check_branch
          %333 = sbr.rel (%p331) target = $region28
        $region27: #{bit_mamsleep_forward.3} parent=11 // pred_region
          %s335 = ssub.s32 16, 16
          %336 = vsyncadd [#allocation12], %s335
          %s338 = sshll.u32 [#allocation13], 4
          %s339 = int_to_ptr.vmem [resolvable:$true] %s338
          %341 = dma.hbm_to_vmem [thread:$0]  %s6, 16, %s339, [#allocation12]
        $region28: #{bit_mamsleep_forward.3} parent=11 // pred_fallthru
          _
        // Predicated region
        $region29: #{bit_mamsleep_forward.3} parent=11 // pred_check
          %p342 = pneg %p230
        $region30: #{bit_mamsleep_forward.3} parent=11 // pred_check_branch
          %344 = sbr.rel (%p342) target = $region32
        $region31: #{bit_mamsleep_forward.3} parent=11 // pred_region
          %s346 = ssub.s32 16, 16
          %347 = vsyncadd [#allocation15], %s346
          %s349 = sshll.u32 [#allocation14], 4
          %s350 = int_to_ptr.vmem [resolvable:$true] %s349
          %352 = dma.hbm_to_vmem [thread:$0]  %s7, 16, %s350, [#allocation15]
        $region32: #{bit_mamsleep_forward.3} parent=11 // pred_fallthru
          _
        // Predicated region
        $region33: #{bit_mamsleep_forward.3} parent=11 // pred_check
          %p353 = pneg %p251
        $region34: #{bit_mamsleep_forward.3} parent=11 // pred_check_branch
          %355 = sbr.rel (%p353) target = $region36
        $region35: #{bit_mamsleep_forward.3} parent=11 // pred_region
          %s357 = ssub.s32 16, 16
          %358 = vsyncadd [#allocation15], %s357
          %s360 = sshll.u32 [#allocation16], 4
          %s361 = int_to_ptr.vmem [resolvable:$true] %s360
          %363 = dma.hbm_to_vmem [thread:$0]  %s8, 16, %s361, [#allocation15]
        $region36: #{bit_mamsleep_forward.3} parent=11 // pred_fallthru
          _
      $region12: #{bit_mamsleep_forward.3} parent=5 // pred_fallthru
        _
      %p364 = scmp.lt.s32.totalorder %s27, 2
      // Predicated region
      $region37: #{bit_mamsleep_forward.3} parent=5 // pred_check
        %p365 = pneg %p364
      $region38: #{bit_mamsleep_forward.3} parent=5 // pred_check_branch
        %367 = sbr.rel (%p365) target = $region40
      $region39: #{bit_mamsleep_forward.3} parent=5 // pred_region
        // Predicated region
        $region41: #{bit_mamsleep_forward.3} parent=39 // pred_check
          %p368 = pneg %p61
        $region42: #{bit_mamsleep_forward.3} parent=39 // pred_check_branch
          %370 = sbr.rel (%p368) target = $region44
        $region43: #{bit_mamsleep_forward.3} parent=39 // pred_region
          %s371 = sand.u32 %s51, 1
          %s372 = scalar_lea.sflag [#allocation3], %s371
          %s373 = sand.u32 %s51, 1
          %s374 = smul.addr %s373, 8
          %s375 = scalar_lea.vmem [#allocation2], %s374
          %s377 = ssub.s32 128, 128
          %378 = vsyncadd %s372, %s377
          %s379 = sadd.s32 %s35, %s34
          %s380 = smul.addr %s379, 128
          %s381 = scalar_lea.hbm %s0, %s380
          %s383 = sshll.u32 %s375, 4
          %s384 = int_to_ptr.vmem [resolvable:$true] %s383
          %386 = dma.hbm_to_vmem [thread:$0]  %s381, 128, %s384, %s372
        $region44: #{bit_mamsleep_forward.3} parent=39 // pred_fallthru
          _
        // Predicated region
        $region45: #{bit_mamsleep_forward.3} parent=39 // pred_check
          %p387 = pneg %p89
        $region46: #{bit_mamsleep_forward.3} parent=39 // pred_check_branch
          %389 = sbr.rel (%p387) target = $region48
        $region47: #{bit_mamsleep_forward.3} parent=39 // pred_region
          %s390 = sand.u32 %s27, 1
          %s391 = scalar_lea.sflag [#allocation6], %s390
          %s392 = sand.u32 %s79, 1
          %s393 = smul.addr %s392, 8
          %s394 = scalar_lea.vmem [#allocation5], %s393
          %s396 = ssub.s32 128, 128
          %397 = vsyncadd %s391, %s396
          %s398 = sadd.s32 %s35, %s34
          %s399 = smul.addr %s398, 128
          %s400 = scalar_lea.hbm %s1, %s399
          %s402 = sshll.u32 %s394, 4
          %s403 = int_to_ptr.vmem [resolvable:$true] %s402
          %405 = dma.hbm_to_vmem [thread:$0]  %s400, 128, %s403, %s391
        $region48: #{bit_mamsleep_forward.3} parent=39 // pred_fallthru
          _
        // Predicated region
        $region49: #{bit_mamsleep_forward.3} parent=39 // pred_check
          %p406 = pneg %p119
        $region50: #{bit_mamsleep_forward.3} parent=39 // pred_check_branch
          %408 = sbr.rel (%p406) target = $region52
        $region51: #{bit_mamsleep_forward.3} parent=39 // pred_region
          %s409 = sand.u32 %s27, 1
          %s410 = scalar_lea.sflag [#allocation6], %s409
          %s411 = sand.u32 %s109, 1
          %s412 = smul.addr %s411, 8
          %s413 = scalar_lea.vmem [#allocation7], %s412
          %s414 = ssub.s32 0, %s35
          %s416 = ssub.s32 128, 128
          %417 = vsyncadd %s410, %s416
          %s418 = sadd.s32 %s414, %s34
          %s419 = sadd.s32 %s418, 2
          %s420 = smul.addr %s419, 128
          %s421 = scalar_lea.hbm %s2, %s420
          %s423 = sshll.u32 %s413, 4
          %s424 = int_to_ptr.vmem [resolvable:$true] %s423
          %426 = dma.hbm_to_vmem [thread:$0]  %s421, 128, %s424, %s410
        $region52: #{bit_mamsleep_forward.3} parent=39 // pred_fallthru
          _
      $region40: #{bit_mamsleep_forward.3} parent=5 // pred_fallthru
        _
      %p427 = scmp.le.s32.totalorder 1, %s27
      %p428 = scmp.lt.s32.totalorder %s27, 3
      %p429 = pnand %p427, %p428
      %p430 = pneg %p429
      // Predicated region
      $region53: #{bit_mamsleep_forward.3} parent=5 // pred_check
        _
      $region54: #{bit_mamsleep_forward.3} parent=5 // pred_check_branch
        %432 = sbr.rel (%p429) target = $region56
      $region55: #{bit_mamsleep_forward.3} parent=5 // pred_region
        %s433 = ssub.s32 %s27, 1
        %s434 = sand.u32 %s54, 1
        %s435 = scalar_lea.sflag [#allocation3], %s434
        %s436 = sand.u32 %s54, 1
        %s437 = smul.addr %s436, 8
        %s438 = scalar_lea.vmem [#allocation2], %s437
        // Predicated region
        $region57: #{bit_mamsleep_forward.3} parent=55 // pred_check
          %p439 = pneg %p67
        $region58: #{bit_mamsleep_forward.3} parent=55 // pred_check_branch
          %441 = sbr.rel (%p439) target = $region60
        $region59: #{bit_mamsleep_forward.3} parent=55 // pred_region
          %442 = dma.done %s435, 128
        $region60: #{bit_mamsleep_forward.3} parent=55 // pred_fallthru
          _
        %s443 = sand.u32 %s32, 1
        %s444 = scalar_lea.sflag [#allocation6], %s443
        %s445 = sand.u32 %s82, 1
        %s446 = smul.addr %s445, 8
        %s447 = scalar_lea.vmem [#allocation5], %s446
        // Predicated region
        $region61: #{bit_mamsleep_forward.3} parent=55 // pred_check
          %p448 = pneg %p95
        $region62: #{bit_mamsleep_forward.3} parent=55 // pred_check_branch
          %450 = sbr.rel (%p448) target = $region64
        $region63: #{bit_mamsleep_forward.3} parent=55 // pred_region
          %451 = dma.done %s444, 128
        $region64: #{bit_mamsleep_forward.3} parent=55 // pred_fallthru
          _
        %s452 = sand.u32 %s32, 1
        %s453 = scalar_lea.sflag [#allocation6], %s452
        %s454 = sand.u32 %s112, 1
        %s455 = smul.addr %s454, 8
        %s456 = scalar_lea.vmem [#allocation7], %s455
        // Predicated region
        $region65: #{bit_mamsleep_forward.3} parent=55 // pred_check
          %p457 = pneg %p125
        $region66: #{bit_mamsleep_forward.3} parent=55 // pred_check_branch
          %459 = sbr.rel (%p457) target = $region68
        $region67: #{bit_mamsleep_forward.3} parent=55 // pred_region
          %460 = dma.done %s453, 128
        $region68: #{bit_mamsleep_forward.3} parent=55 // pred_fallthru
          _
        // Predicated region
        $region69: #{bit_mamsleep_forward.3} parent=55 // pred_check
          %p461 = pneg %p146
        $region70: #{bit_mamsleep_forward.3} parent=55 // pred_check_branch
          %463 = sbr.rel (%p461) target = $region72
        $region71: #{bit_mamsleep_forward.3} parent=55 // pred_region
          %464 = dma.done [#allocation9], 512
        $region72: #{bit_mamsleep_forward.3} parent=55 // pred_fallthru
          _
        // Predicated region
        $region73: #{bit_mamsleep_forward.3} parent=55 // pred_check
          %p465 = pneg %p167
        $region74: #{bit_mamsleep_forward.3} parent=55 // pred_check_branch
          %467 = sbr.rel (%p465) target = $region76
        $region75: #{bit_mamsleep_forward.3} parent=55 // pred_region
          %468 = dma.done [#allocation9], 16
        $region76: #{bit_mamsleep_forward.3} parent=55 // pred_fallthru
          _
        // Predicated region
        $region77: #{bit_mamsleep_forward.3} parent=55 // pred_check
          %p469 = pneg %p188
        $region78: #{bit_mamsleep_forward.3} parent=55 // pred_check_branch
          %471 = sbr.rel (%p469) target = $region80
        $region79: #{bit_mamsleep_forward.3} parent=55 // pred_region
          %472 = dma.done [#allocation12], 512
        $region80: #{bit_mamsleep_forward.3} parent=55 // pred_fallthru
          _
        // Predicated region
        $region81: #{bit_mamsleep_forward.3} parent=55 // pred_check
          %p473 = pneg %p209
        $region82: #{bit_mamsleep_forward.3} parent=55 // pred_check_branch
          %475 = sbr.rel (%p473) target = $region84
        $region83: #{bit_mamsleep_forward.3} parent=55 // pred_region
          %476 = dma.done [#allocation12], 16
        $region84: #{bit_mamsleep_forward.3} parent=55 // pred_fallthru
          _
        // Predicated region
        $region85: #{bit_mamsleep_forward.3} parent=55 // pred_check
          %p477 = pneg %p230
        $region86: #{bit_mamsleep_forward.3} parent=55 // pred_check_branch
          %479 = sbr.rel (%p477) target = $region88
        $region87: #{bit_mamsleep_forward.3} parent=55 // pred_region
          %480 = dma.done [#allocation15], 16
        $region88: #{bit_mamsleep_forward.3} parent=55 // pred_fallthru
          _
        // Predicated region
        $region89: #{bit_mamsleep_forward.3} parent=55 // pred_check
          %p481 = pneg %p251
        $region90: #{bit_mamsleep_forward.3} parent=55 // pred_check_branch
          %483 = sbr.rel (%p481) target = $region92
        $region91: #{bit_mamsleep_forward.3} parent=55 // pred_region
          %484 = dma.done [#allocation15], 16
        $region92: #{bit_mamsleep_forward.3} parent=55 // pred_fallthru
          _
        %s485 = sand.u32 %s54, 1
        %s486 = scalar_lea.sflag [#allocation3], %s485
        %s487 = sand.u32 %s54, 1
        %s488 = smul.addr %s487, 8
        %s489 = scalar_lea.vmem [#allocation2], %s488
        %p490 = pneg %p67
        %p491 = pneg %p64
        %s492 = sand.u32 %s32, 1
        %s493 = scalar_lea.sflag [#allocation6], %s492
        %s494 = sand.u32 %s82, 1
        %s495 = smul.addr %s494, 8
        %s496 = scalar_lea.vmem [#allocation5], %s495
        %p497 = pneg %p95
        %p498 = pneg %p92
        %s499 = sand.u32 %s32, 1
        %s500 = scalar_lea.sflag [#allocation6], %s499
        %s501 = sand.u32 %s112, 1
        %s502 = smul.addr %s501, 8
        %s503 = scalar_lea.vmem [#allocation7], %s502
        %p504 = pneg %p125
        %p505 = pneg %p122
        %p506 = pneg %p146
        %p507 = pneg %p143
        %p508 = pneg %p167
        %p509 = pneg %p164
        %p510 = pneg %p188
        %p511 = pneg %p185
        %p512 = pneg %p209
        %p513 = pneg %p206
        %p514 = pneg %p230
        %p515 = pneg %p227
        %p516 = pneg %p251
        %p517 = pneg %p248
        %p518 = pneg %p279
        %p519 = pneg %p276
        %s520 = sand.u32 %s266, 1
        %s521 = scalar_lea.sflag [#allocation4], %s520
        %s522 = sand.u32 %s266, 1
        %s523 = smul.addr %s522, 8
        %s524 = scalar_lea.vmem [#allocation17], %s523
        %s525 = ssub.s32 0, %s37
        %v526 = vlaneseq
        %v527 = vshrl.u32 %v526, 7
        %v528 = vlaneseq
        %v529 = vand.u32 %v528, 127
        %v530 = vadd.s32 %v527, %v529
        %vm531 = vcmp.eq.s32.totalorder %v530, 7
        %v532 = vsel %vm531, 1, 0
        %v533 = vcvt.s32.f32 %v532
        %v534 = vld [vmem:[%s456] sm:$0xff]
        %vm535 = vcmask 64512
        %v537 = vsel %vm535, %v533, 0
        %539 = vmatprep.subr.mxu0 0.0
        %540 = vmatpush1.msra.mxu0 %v534
        %541 = vmatprep.subr.mxu0 0.0
        %542 = vmatpush1.msra.mxu0 0.0
        %543 = vmatprep.subr.mxu0 0.0
        %544 = vmatpush1.msra.mxu0 0.0
        %545 = vmatprep.subr.mxu0 0.0
        %546 = vmatpush1.msra.mxu0 0.0
        %547 = vmatprep.subr.mxu0 0.0
        %548 = vmatpush1.msra.mxu0 0.0
        %549 = vmatprep.subr.mxu0 0.0
        %550 = vmatpush1.msra.mxu0 0.0
        %551 = vmatprep.subr.mxu0 0.0
        %552 = vmatpush1.msra.mxu0 0.0
        %553 = vmatprep.subr.mxu0 0.0
        %554 = vmatpush1.msra.mxu0 0.0
        %555 = vmatprep.subr.mxu0 0.0
        %556 = vmatpush1.msra.mxu0 0.0
        %557 = vmatprep.subr.mxu0 0.0
        %558 = vmatpush1.msra.mxu0 0.0
        %559 = vmatprep.subr.mxu0 0.0
        %560 = vmatpush1.msra.mxu0 0.0
        %561 = vmatprep.subr.mxu0 0.0
        %562 = vmatpush1.msra.mxu0 0.0
        %563 = vmatprep.subr.mxu0 0.0
        %564 = vmatpush1.msra.mxu0 0.0
        %565 = vmatprep.subr.mxu0 0.0
        %566 = vmatpush1.msra.mxu0 0.0
        %567 = vmatprep.subr.mxu0 0.0
        %568 = vmatpush1.msra.mxu0 0.0
        %569 = vmatprep.subr.mxu0 0.0
        %570 = vmatpush1.msra.mxu0 0.0
        %571 = vmatprep.subr.mxu0 0.0
        %572 = vmatpush1.msra.mxu0 0.0
        %573 = vmatprep.subr.mxu0 0.0
        %574 = vmatpush1.msra.mxu0 0.0
        %575 = vmatprep.subr.mxu0 0.0
        %576 = vmatpush1.msra.mxu0 0.0
        %577 = vmatprep.subr.mxu0 0.0
        %578 = vmatpush1.msra.mxu0 0.0
        %579 = vmatprep.subr.mxu0 0.0
        %580 = vmatpush1.msra.mxu0 0.0
        %581 = vmatprep.subr.mxu0 0.0
        %582 = vmatpush1.msra.mxu0 0.0
        %583 = vmatprep.subr.mxu0 0.0
        %584 = vmatpush1.msra.mxu0 0.0
        %585 = vmatprep.subr.mxu0 0.0
        %586 = vmatpush1.msra.mxu0 0.0
        %587 = vmatprep.subr.mxu0 0.0
        %588 = vmatpush1.msra.mxu0 0.0
        %589 = vmatprep.subr.mxu0 0.0
        %590 = vmatpush1.msra.mxu0 0.0
        %591 = vmatprep.subr.mxu0 0.0
        %592 = vmatpush1.msra.mxu0 0.0
        %593 = vmatprep.subr.mxu0 0.0
        %594 = vmatpush1.msra.mxu0 0.0
        %595 = vmatprep.subr.mxu0 0.0
        %596 = vmatpush1.msra.mxu0 0.0
        %597 = vmatprep.subr.mxu0 0.0
        %598 = vmatpush1.msra.mxu0 0.0
        %599 = vmatprep.subr.mxu0 0.0
        %600 = vmatpush1.msra.mxu0 0.0
        %601 = vmatprep.subr.mxu0 0.0
        %602 = vmatpush1.msra.mxu0 0.0
        %603 = vmatprep.mubr.f32.mxu0 0.0
        %604 = vmatmul.mubr.f32.gmra.mrb[0].mxu0 %v537
        %v605 = vpop.f32.mrb[0].mxu0
        %v606 = vadd.f32 0.0, %v605
        %v607 = vpop.f32.mrb[0].mxu0
        %608 = vdwg.mxu0
        %v609 = vld [vmem:[%s438] sm:$0xff]
        %v610 = vld [vmem:[#allocation14] sm:$0x1]
        %v611 = vld [vmem:[#allocation16] sm:$0x1]
        %vm612 = vcmask 261120
        %v613 = vsel %vm612, %v609, 0.0
        %614 = vadd.xlane.f32.xlu0 %v613
        %v615 = vpop.xlane.xlu0 %614
        %v616 = vrcp.pop 32.0
        %v617 = vmul.f32 %v615, %v616
        %v618 = vsub.f32 %v609, %v617
        %v619 = vmul.f32 %v618, %v618
        %v620 = vsel %vm612, %v619, 0.0
        %621 = vadd.xlane.f32.xlu0 %v620
        %v622 = vpop.xlane.xlu0 %621
        %v623 = vmul.f32 %v622, %v616
        %v624 = vadd.f32 %v623, 1e-05
        %v625 = vrsqrt.pop %v624
        %v626 = vmul.f32 %v618, %v625
        %v628 = vlaneseq
        %v629 = vshrl.u32 %v628, 7
        %v630 = vsub.s32 0, %v629
        %v631 = vrot.slane %v610, %v630
        %v633 = vmul.f32 %v626, %v631
        %v635 = vlaneseq
        %v636 = vshrl.u32 %v635, 7
        %v637 = vsub.s32 0, %v636
        %v638 = vrot.slane %v611, %v637
        %v640 = vadd.f32 %v633, %v638
        %v641 = vld [vmem:[#allocation8] sm:$0xff]
        %v642 = vld [vmem:[#allocation8 + $0x8] sm:$0xff]
        %v643 = vld [vmem:[#allocation8 + $0x10] sm:$0xff]
        %v644 = vld [vmem:[#allocation8 + $0x18] sm:$0xff]
        %v645 = vld [vmem:[#allocation10] sm:$0x1]
        %v647 = vlaneseq
        %v648 = vshrl.u32 %v647, 7
        %v649 = vsub.s32 0, %v648
        %v650 = vrot.slane %v645, %v649
        %v653 = vsel %vm612, %v640, 0
        %655 = vmatprep.subr.mxu0 0.0
        %656 = vmatpush1.msra.mxu0 %v641
        %657 = vmatprep.subr.mxu0 0.0
        %658 = vmatpush1.msra.mxu0 %v642
        %659 = vmatprep.subr.mxu0 0.0
        %660 = vmatpush1.msra.mxu0 %v643
        %661 = vmatprep.subr.mxu0 0.0
        %662 = vmatpush1.msra.mxu0 %v644
        %663 = vmatprep.subr.mxu0 0.0
        %664 = vmatpush1.msra.mxu0 0.0
        %665 = vmatprep.subr.mxu0 0.0
        %666 = vmatpush1.msra.mxu0 0.0
        %667 = vmatprep.subr.mxu0 0.0
        %668 = vmatpush1.msra.mxu0 0.0
        %669 = vmatprep.subr.mxu0 0.0
        %670 = vmatpush1.msra.mxu0 0.0
        %671 = vmatprep.subr.mxu0 0.0
        %672 = vmatpush1.msra.mxu0 0.0
        %673 = vmatprep.subr.mxu0 0.0
        %674 = vmatpush1.msra.mxu0 0.0
        %675 = vmatprep.subr.mxu0 0.0
        %676 = vmatpush1.msra.mxu0 0.0
        %677 = vmatprep.subr.mxu0 0.0
        %678 = vmatpush1.msra.mxu0 0.0
        %679 = vmatprep.subr.mxu0 0.0
        %680 = vmatpush1.msra.mxu0 0.0
        %681 = vmatprep.subr.mxu0 0.0
        %682 = vmatpush1.msra.mxu0 0.0
        %683 = vmatprep.subr.mxu0 0.0
        %684 = vmatpush1.msra.mxu0 0.0
        %685 = vmatprep.subr.mxu0 0.0
        %686 = vmatpush1.msra.mxu0 0.0
        %687 = vmatprep.subr.mxu0 0.0
        %688 = vmatpush1.msra.mxu0 0.0
        %689 = vmatprep.subr.mxu0 0.0
        %690 = vmatpush1.msra.mxu0 0.0
        %691 = vmatprep.subr.mxu0 0.0
        %692 = vmatpush1.msra.mxu0 0.0
        %693 = vmatprep.subr.mxu0 0.0
        %694 = vmatpush1.msra.mxu0 0.0
        %695 = vmatprep.subr.mxu0 0.0
        %696 = vmatpush1.msra.mxu0 0.0
        %697 = vmatprep.subr.mxu0 0.0
        %698 = vmatpush1.msra.mxu0 0.0
        %699 = vmatprep.subr.mxu0 0.0
        %700 = vmatpush1.msra.mxu0 0.0
        %701 = vmatprep.subr.mxu0 0.0
        %702 = vmatpush1.msra.mxu0 0.0
        %703 = vmatprep.subr.mxu0 0.0
        %704 = vmatpush1.msra.mxu0 0.0
        %705 = vmatprep.subr.mxu0 0.0
        %706 = vmatpush1.msra.mxu0 0.0
        %707 = vmatprep.subr.mxu0 0.0
        %708 = vmatpush1.msra.mxu0 0.0
        %709 = vmatprep.subr.mxu0 0.0
        %710 = vmatpush1.msra.mxu0 0.0
        %711 = vmatprep.subr.mxu0 0.0
        %712 = vmatpush1.msra.mxu0 0.0
        %713 = vmatprep.subr.mxu0 0.0
        %714 = vmatpush1.msra.mxu0 0.0
        %715 = vmatprep.subr.mxu0 0.0
        %716 = vmatpush1.msra.mxu0 0.0
        %717 = vmatprep.subr.mxu0 0.0
        %718 = vmatpush1.msra.mxu0 0.0
        %719 = vmatprep.mubr.f32.mxu0 0.0
        %720 = vmatmul.mubr.f32.gmra.mrb[0].mxu0 %v653
        %v721 = vpop.f32.mrb[0].mxu0
        %v722 = vadd.f32 %v650, %v721
        %v723 = vpop.f32.mrb[0].mxu0
        %724 = vdwg.mxu0
        %v725 = vxor.u32 %v722, 2147483648
        %v726 = vmul.f32 %v725, 1.442695
        %v727 = vpow.pop %v726
        %v728 = vadd.f32 %v727, 1.0
        %v729 = vrcp.pop %v728
        %v730 = vmul.f32 1.0, %v729
        %v731 = vmul.f32 %v722, %v730
        %v732 = vld [vmem:[%s447] sm:$0xff]
        %v733 = vadd.f32 %v732, %v606
        %v734 = vmul.f32 %v733, %v731
        %v735 = vld [vmem:[#allocation11] sm:$0xff]
        %v736 = vld [vmem:[#allocation11 + $0x8] sm:$0xff]
        %v737 = vld [vmem:[#allocation11 + $0x10] sm:$0xff]
        %v738 = vld [vmem:[#allocation11 + $0x18] sm:$0xff]
        %v739 = vld [vmem:[#allocation13] sm:$0x1]
        %v741 = vlaneseq
        %v742 = vshrl.u32 %v741, 7
        %v743 = vsub.s32 0, %v742
        %v744 = vrot.slane %v739, %v743
        %v747 = vsel %vm612, %v734, 0
        %749 = vmatprep.subr.mxu0 0.0
        %750 = vmatpush1.msra.mxu0 %v735
        %751 = vmatprep.subr.mxu0 0.0
        %752 = vmatpush1.msra.mxu0 %v736
        %753 = vmatprep.subr.mxu0 0.0
        %754 = vmatpush1.msra.mxu0 %v737
        %755 = vmatprep.subr.mxu0 0.0
        %756 = vmatpush1.msra.mxu0 %v738
        %757 = vmatprep.subr.mxu0 0.0
        %758 = vmatpush1.msra.mxu0 0.0
        %759 = vmatprep.subr.mxu0 0.0
        %760 = vmatpush1.msra.mxu0 0.0
        %761 = vmatprep.subr.mxu0 0.0
        %762 = vmatpush1.msra.mxu0 0.0
        %763 = vmatprep.subr.mxu0 0.0
        %764 = vmatpush1.msra.mxu0 0.0
        %765 = vmatprep.subr.mxu0 0.0
        %766 = vmatpush1.msra.mxu0 0.0
        %767 = vmatprep.subr.mxu0 0.0
        %768 = vmatpush1.msra.mxu0 0.0
        %769 = vmatprep.subr.mxu0 0.0
        %770 = vmatpush1.msra.mxu0 0.0
        %771 = vmatprep.subr.mxu0 0.0
        %772 = vmatpush1.msra.mxu0 0.0
        %773 = vmatprep.subr.mxu0 0.0
        %774 = vmatpush1.msra.mxu0 0.0
        %775 = vmatprep.subr.mxu0 0.0
        %776 = vmatpush1.msra.mxu0 0.0
        %777 = vmatprep.subr.mxu0 0.0
        %778 = vmatpush1.msra.mxu0 0.0
        %779 = vmatprep.subr.mxu0 0.0
        %780 = vmatpush1.msra.mxu0 0.0
        %781 = vmatprep.subr.mxu0 0.0
        %782 = vmatpush1.msra.mxu0 0.0
        %783 = vmatprep.subr.mxu0 0.0
        %784 = vmatpush1.msra.mxu0 0.0
        %785 = vmatprep.subr.mxu0 0.0
        %786 = vmatpush1.msra.mxu0 0.0
        %787 = vmatprep.subr.mxu0 0.0
        %788 = vmatpush1.msra.mxu0 0.0
        %789 = vmatprep.subr.mxu0 0.0
        %790 = vmatpush1.msra.mxu0 0.0
        %791 = vmatprep.subr.mxu0 0.0
        %792 = vmatpush1.msra.mxu0 0.0
        %793 = vmatprep.subr.mxu0 0.0
        %794 = vmatpush1.msra.mxu0 0.0
        %795 = vmatprep.subr.mxu0 0.0
        %796 = vmatpush1.msra.mxu0 0.0
        %797 = vmatprep.subr.mxu0 0.0
        %798 = vmatpush1.msra.mxu0 0.0
        %799 = vmatprep.subr.mxu0 0.0
        %800 = vmatpush1.msra.mxu0 0.0
        %801 = vmatprep.subr.mxu0 0.0
        %802 = vmatpush1.msra.mxu0 0.0
        %803 = vmatprep.subr.mxu0 0.0
        %804 = vmatpush1.msra.mxu0 0.0
        %805 = vmatprep.subr.mxu0 0.0
        %806 = vmatpush1.msra.mxu0 0.0
        %807 = vmatprep.subr.mxu0 0.0
        %808 = vmatpush1.msra.mxu0 0.0
        %809 = vmatprep.subr.mxu0 0.0
        %810 = vmatpush1.msra.mxu0 0.0
        %811 = vmatprep.subr.mxu0 0.0
        %812 = vmatpush1.msra.mxu0 0.0
        %813 = vmatprep.mubr.f32.mxu0 0.0
        %814 = vmatmul.mubr.f32.gmra.mrb[0].mxu0 %v747
        %v815 = vpop.f32.mrb[0].mxu0
        %v816 = vadd.f32 %v744, %v815
        %v817 = vpop.f32.mrb[0].mxu0
        %818 = vdwg.mxu0
        %v819 = vsel %vm612, %v816, 0.0
        %820 = vadd.xlane.f32.xlu0 %v819
        %v821 = vpop.xlane.xlu0 %820
        %v822 = vmul.f32 %v821, %v616
        %v823 = vsub.f32 %v816, %v822
        %v824 = vmul.f32 %v823, %v823
        %v825 = vsel %vm612, %v824, 0.0
        %826 = vadd.xlane.f32.xlu0 %v825
        %v827 = vpop.xlane.xlu0 %826
        %v828 = vmul.f32 %v827, %v616
        %v829 = vadd.f32 %v828, 1e-05
        %v830 = vrsqrt.pop %v829
        %v831 = vmul.f32 %v823, %v830
        %v832 = vmul.f32 %v831, %v631
        %v833 = vadd.f32 %v832, %v638
        %834 = vst.msk [vmem:[%s524] sm:$0xff] %vm612, %v833
        %s835 = sand.u32 %s266, 1
        %s836 = scalar_lea.sflag [#allocation4], %s835
        %s837 = sand.u32 %s266, 1
        %s838 = smul.addr %s837, 8
        %s839 = scalar_lea.vmem [#allocation17], %s838
        // Predicated region
        $region93: #{bit_mamsleep_forward.3} parent=55 // pred_check
          %p840 = pneg %p276
        $region94: #{bit_mamsleep_forward.3} parent=55 // pred_check_branch
          %842 = sbr.rel (%p840) target = $region96
        $region95: #{bit_mamsleep_forward.3} parent=55 // pred_region
          %s844 = ssub.s32 128, 128
          %845 = vsyncadd %s836, %s844
          %s846 = sadd.s32 %s37, %s36
          %s847 = smul.addr %s846, 128
          %s848 = scalar_lea.hbm %s9, %s847
          %s850 = sshll.u32 %s839, 4
          %s851 = int_to_ptr.vmem [resolvable:$true] %s850
          %853 = dma.vmem_to_hbm [thread:$0]  %s851, 128, %s848, %s836
        $region96: #{bit_mamsleep_forward.3} parent=55 // pred_fallthru
          _
      $region56: #{bit_mamsleep_forward.3} parent=5 // pred_fallthru
        _
      %p854 = scmp.le.s32.totalorder 2, %s27
      // Predicated region
      $region97: #{bit_mamsleep_forward.3} parent=5 // pred_check
        %p855 = pneg %p854
      $region98: #{bit_mamsleep_forward.3} parent=5 // pred_check_branch
        %857 = sbr.rel (%p855) target = $region100
      $region99: #{bit_mamsleep_forward.3} parent=5 // pred_region
        %s858 = ssub.s32 %s27, 2
        // Predicated region
        $region101: #{bit_mamsleep_forward.3} parent=99 // pred_check
          %p859 = pneg %p282
        $region102: #{bit_mamsleep_forward.3} parent=99 // pred_check_branch
          %861 = sbr.rel (%p859) target = $region104
        $region103: #{bit_mamsleep_forward.3} parent=99 // pred_region
          %s862 = sand.u32 %s267, 1
          %s863 = scalar_lea.sflag [#allocation4], %s862
          %s864 = sand.u32 %s267, 1
          %s865 = smul.addr %s864, 8
          %s866 = scalar_lea.vmem [#allocation17], %s865
          %867 = dma.done %s863, 128
        $region104: #{bit_mamsleep_forward.3} parent=99 // pred_fallthru
          _
      $region100: #{bit_mamsleep_forward.3} parent=5 // pred_fallthru
        _
    $region6: #{bit_mamsleep_forward.3} parent=1 // loop_footer
      %s31 = sadd.s32 1, %s27
    $region7: #{bit_mamsleep_forward.3} parent=1 // loop_footer_branch
      %26 = sbr.rel target = $region3
    $region8: #{bit_mamsleep_forward.3} parent=1 // loop_exit
      _
    %868 = vsyncpa [#allocation3], 1
    %s869 = scalar_lea.sflag [#allocation3], 1
    %870 = vsyncpa %s869, 1
    %871 = vsyncpa [#allocation6], 1
    %s872 = scalar_lea.sflag [#allocation6], 1
    %873 = vsyncpa %s872, 1
    %874 = vsyncpa [#allocation9], 1
    %875 = vsyncpa [#allocation12], 1
    %876 = vsyncpa [#allocation15], 1
    %877 = vsyncpa [#allocation4], 1
    %s878 = scalar_lea.sflag [#allocation4], 1
    %879 = vsyncpa %s878, 1

// kernel: bit_mamsleep_forward.2
$region0: #{bit_mamsleep_forward.2}
  #allocation0 [shape = 'u32[]', space=smem, size = 0x4, offset = 0x4, fixed_abs, tag = 'smem constant byte address 0x4 - core index']
  #allocation1 [shape = 'u32[144,128]{1,0:T(1,128)}', space=vmem, size = 0x12000, scoped, tag = 'internal scratch']
  #allocation2 [shape = 'f32[11,64]{1,0:T(8,128)}', space=vmem, size = 0x2000, scoped, tag = 'scratch operand']
  #allocation3 [shape = 'f32[8,64]{1,0:T(8,128)}', space=vmem, size = 0x1000, scoped, tag = 'scratch operand']
  #allocation4 [shape = 'f32[8,64]{1,0:T(8,128)}', space=vmem, size = 0x1000, scoped, tag = 'scratch operand']
  #allocation5 [shape = 'f32[8,32]{1,0:T(8,128)}', space=vmem, size = 0x1000, scoped, tag = 'scratch operand']
  #allocation6 [shape = 'f32[8,64]{1,0:T(8,128)}', space=vmem, size = 0x1000, scoped, tag = 'scratch operand']
  #allocation7 [shape = 'f32[8,64]{1,0:T(8,128)}', space=vmem, size = 0x1000, scoped, tag = 'scratch operand']
  #allocation8 [shape = 'f32[8,16,64]{2,1,0:T(8,128)}', space=vmem, size = 0x10000, scoped, tag = 'scratch operand']
  #allocation9 [shape = 'f32[16,8,64]{2,1,0:T(8,128)}', space=vmem, size = 0x10000, scoped, tag = 'scratch operand']
  %s0 = inlined_call_operand.hbm [shape: f32[2,8,32], index: 0, kind: input, shape index: {}]
  %s1 = inlined_call_operand.hbm [shape: f32[1,32], index: 1, kind: input, shape index: {}]
  %s2 = inlined_call_operand.hbm [shape: f32[1,32], index: 2, kind: input, shape index: {}]
  %s3 = inlined_call_operand.hbm [shape: f32[32,32], index: 3, kind: input, shape index: {}]
  %s4 = inlined_call_operand.hbm [shape: f32[1,32], index: 4, kind: input, shape index: {}]
  %s5 = inlined_call_operand.hbm [shape: f32[2,32,32], index: 5, kind: input, shape index: {}]
  %s6 = inlined_call_operand.hbm [shape: f32[2,1,32], index: 6, kind: input, shape index: {}]
  %s7 = inlined_call_operand.hbm [shape: f32[2,32,128], index: 7, kind: input, shape index: {}]
  %s8 = inlined_call_operand.hbm [shape: f32[2,4,64], index: 8, kind: input, shape index: {}]
  %s9 = inlined_call_operand.hbm [shape: f32[2,1,64], index: 9, kind: input, shape index: {}]
  %s10 = inlined_call_operand.hbm [shape: f32[2,64,34], index: 10, kind: input, shape index: {}]
  %s11 = inlined_call_operand.hbm [shape: f32[2,2,64], index: 11, kind: input, shape index: {}]
  %s12 = inlined_call_operand.hbm [shape: f32[2,1,64], index: 12, kind: input, shape index: {}]
  %s13 = inlined_call_operand.hbm [shape: f32[2,16,64], index: 13, kind: input, shape index: {}]
  %s14 = inlined_call_operand.hbm [shape: f32[2,1,64], index: 14, kind: input, shape index: {}]
  %s15 = inlined_call_operand.hbm [shape: f32[2,64,32], index: 15, kind: input, shape index: {}]
  %s16 = inlined_call_operand.hbm [shape: f32[2,2,8,32], index: 16, kind: output, shape index: {}]
  %s17 = sld [smem:[#allocation0]]
  $region161: #{bit_mamsleep_forward.2} parent=0
    _
  %s19 = ssub.s32 1, %s17
  %s20 = scalar_select 0, %s19, %s17
  $region1: #{bit_mamsleep_forward.2} parent=0
    #allocation10 [shape = 'u8[8192]{0}', space=vmem, size = 0x2000, scoped, tag = 'input window, operand 0']
    #allocation11 [shape = 's32[2]{0}', space=sflag, size = 0x8, scoped, tag = 'scoped memory for bit_mamsleep_forward.2']
    #allocation12 [shape = 's32[2]{0}', space=sflag, size = 0x8, scoped, tag = 'scoped memory for bit_mamsleep_forward.2']
    #allocation13 [shape = 'u8[512]{0}', space=vmem, size = 0x400, scoped, tag = 'input window, operand 1, single buffered']
    #allocation14 [shape = 's32[1]{0}', space=sflag, size = 0x4, scoped, tag = 'scoped memory for bit_mamsleep_forward.2']
    #allocation15 [shape = 'u8[512]{0}', space=vmem, size = 0x400, scoped, tag = 'input window, operand 2, single buffered']
    #allocation16 [shape = 'u8[16384]{0}', space=vmem, size = 0x4000, scoped, tag = 'input window, operand 3, single buffered']
    #allocation17 [shape = 's32[1]{0}', space=sflag, size = 0x4, scoped, tag = 'scoped memory for bit_mamsleep_forward.2']
    #allocation18 [shape = 'u8[512]{0}', space=vmem, size = 0x400, scoped, tag = 'input window, operand 4, single buffered']
    #allocation19 [shape = 'u8[32768]{0}', space=vmem, size = 0x8000, scoped, tag = 'input window, operand 5']
    #allocation20 [shape = 's32[2]{0}', space=sflag, size = 0x8, scoped, tag = 'scoped memory for bit_mamsleep_forward.2']
    #allocation21 [shape = 'u8[1024]{0}', space=vmem, size = 0x400, scoped, tag = 'input window, operand 6']
    #allocation22 [shape = 'u8[32768]{0}', space=vmem, size = 0x8000, scoped, tag = 'input window, operand 7']
    #allocation23 [shape = 's32[2]{0}', space=sflag, size = 0x8, scoped, tag = 'scoped memory for bit_mamsleep_forward.2']
    #allocation24 [shape = 'u8[4096]{0}', space=vmem, size = 0x1000, scoped, tag = 'input window, operand 8']
    #allocation25 [shape = 'u8[1024]{0}', space=vmem, size = 0x400, scoped, tag = 'input window, operand 9']
    #allocation26 [shape = 's32[2]{0}', space=sflag, size = 0x8, scoped, tag = 'scoped memory for bit_mamsleep_forward.2']
    #allocation27 [shape = 'u8[65536]{0}', space=vmem, size = 0x10000, scoped, tag = 'input window, operand 10']
    #allocation28 [shape = 'u8[2048]{0}', space=vmem, size = 0x800, scoped, tag = 'input window, operand 11']
    #allocation29 [shape = 's32[2]{0}', space=sflag, size = 0x8, scoped, tag = 'scoped memory for bit_mamsleep_forward.2']
    #allocation30 [shape = 'u8[1024]{0}', space=vmem, size = 0x400, scoped, tag = 'input window, operand 12']
    #allocation31 [shape = 'u8[16384]{0}', space=vmem, size = 0x4000, scoped, tag = 'input window, operand 13']
    #allocation32 [shape = 's32[2]{0}', space=sflag, size = 0x8, scoped, tag = 'scoped memory for bit_mamsleep_forward.2']
    #allocation33 [shape = 'u8[1024]{0}', space=vmem, size = 0x400, scoped, tag = 'input window, operand 14']
    #allocation34 [shape = 'u8[65536]{0}', space=vmem, size = 0x10000, scoped, tag = 'input window, operand 15']
    #allocation35 [shape = 's32[2]{0}', space=sflag, size = 0x8, scoped, tag = 'scoped memory for bit_mamsleep_forward.2']
    #allocation36 [shape = 'u8[8192]{0}', space=vmem, size = 0x2000, scoped, tag = 'output window, operand 0']
    %21 = vsyncpa [#allocation11], 0
    %s22 = scalar_lea.sflag [#allocation11], 1
    %23 = vsyncpa %s22, 0
    %24 = vsyncpa [#allocation14], 0
    %25 = vsyncpa [#allocation17], 0
    %26 = vsyncpa [#allocation20], 0
    %s27 = scalar_lea.sflag [#allocation20], 1
    %28 = vsyncpa %s27, 0
    %29 = vsyncpa [#allocation23], 0
    %s30 = scalar_lea.sflag [#allocation23], 1
    %31 = vsyncpa %s30, 0
    %32 = vsyncpa [#allocation26], 0
    %s33 = scalar_lea.sflag [#allocation26], 1
    %34 = vsyncpa %s33, 0
    %35 = vsyncpa [#allocation29], 0
    %s36 = scalar_lea.sflag [#allocation29], 1
    %37 = vsyncpa %s36, 0
    %38 = vsyncpa [#allocation32], 0
    %s39 = scalar_lea.sflag [#allocation32], 1
    %40 = vsyncpa %s39, 0
    %41 = vsyncpa [#allocation35], 0
    %s42 = scalar_lea.sflag [#allocation35], 1
    %43 = vsyncpa %s42, 0
    %44 = vsyncpa [#allocation12], 0
    %s45 = scalar_lea.sflag [#allocation12], 1
    %46 = vsyncpa %s45, 0
    loop: start=0, step=1, limit=6
    $region2: #{bit_mamsleep_forward.2} parent=1 // loop_pre_header
      _
    $region3: #{bit_mamsleep_forward.2} parent=1 // loop_header
      %s48 = sphi 0, %s52
      %p49 = scmp.ge.s32.totalorder %s48, 6
      %s55 = sphi 0, %s67
      %s56 = sphi 0, %s63
      %s57 = sphi 0, %s55
      %s58 = sphi 0, %s56
      %s59 = sphi 0, %s57
      %s60 = sphi 0, %s58
      %s70 = sphi 0, %s72
      %s73 = sphi 0, %s70
      %s74 = sphi 0, %s73
      %s90 = sphi 0, %s74
      %s94 = sphi 0, %s94
      %s96 = sphi 0, %s94
      %s97 = sphi 0, %s96
      %s111 = sphi 0, %s97
      %s115 = sphi 0, %s115
      %s117 = sphi 0, %s115
      %s118 = sphi 0, %s117
      %s132 = sphi 0, %s118
      %s136 = sphi 0, %s136
      %s138 = sphi 0, %s136
      %s139 = sphi 0, %s138
      %s153 = sphi 0, %s139
      %s157 = sphi 0, %s157
      %s159 = sphi 0, %s157
      %s160 = sphi 0, %s159
      %s174 = sphi 0, %s160
      %s180 = sphi 0, %s182
      %s183 = sphi 0, %s180
      %s184 = sphi 0, %s183
      %s200 = sphi 0, %s184
      %s206 = sphi 0, %s208
      %s209 = sphi 0, %s206
      %s210 = sphi 0, %s209
      %s226 = sphi 0, %s210
      %s232 = sphi 0, %s234
      %s235 = sphi 0, %s232
      %s236 = sphi 0, %s235
      %s252 = sphi 0, %s236
      %s258 = sphi 0, %s260
      %s261 = sphi 0, %s258
      %s262 = sphi 0, %s261
      %s278 = sphi 0, %s262
      %s284 = sphi 0, %s286
      %s287 = sphi 0, %s284
      %s288 = sphi 0, %s287
      %s304 = sphi 0, %s288
      %s310 = sphi 0, %s312
      %s313 = sphi 0, %s310
      %s314 = sphi 0, %s313
      %s330 = sphi 0, %s314
      %s336 = sphi 0, %s338
      %s339 = sphi 0, %s336
      %s340 = sphi 0, %s339
      %s356 = sphi 0, %s340
      %s362 = sphi 0, %s364
      %s365 = sphi 0, %s362
      %s366 = sphi 0, %s365
      %s382 = sphi 0, %s366
      %s388 = sphi 0, %s390
      %s391 = sphi 0, %s388
      %s392 = sphi 0, %s391
      %s408 = sphi 0, %s392
      %s414 = sphi 0, %s416
      %s417 = sphi 0, %s414
      %s418 = sphi 0, %s417
      %s434 = sphi 0, %s418
      %s440 = sphi 0, %s442
      %s443 = sphi 0, %s440
      %s444 = sphi 0, %s443
      %s460 = sphi 0, %s444
      %s468 = sphi 0, %s470
      %s471 = sphi 0, %s468
      %s472 = sphi 0, %s471
      %s488 = sphi 0, %s472
    $region4: #{bit_mamsleep_forward.2} parent=1 // loop_header_branch
      %51 = sbr.rel (%p49) target = $region8
    $region5: #{bit_mamsleep_forward.2} parent=1 // loop_body
      %s53 = ssub.s32 %s48, 1
      %s54 = ssub.s32 %s48, 2
      %s61 = sadd.s32 1, %s56
      %p62 = scmp.ge.s32.totalorder %s61, 2
      %s63 = scalar_select %p62, 0, %s61
      %s64 = sadd.s32 1, %s55
      %s65 = scalar_select %p62, %s64, %s55
      %p66 = scmp.ge.s32.totalorder %s65, 2
      %s67 = scalar_select %p66, 0, %s65
      %s68 = ssub.s32 %s56, %s63
      %p69 = scmp.eq.s32.totalorder %s68, 0
      %s71 = sadd.s32 %s70, 1
      %s72 = scalar_select %p69, %s70, %s71
      %p75 = pneg %p69
      %p76 = scmp.eq.s32.totalorder %s48, 3
      %p77 = por %p75, %p76
      %p78 = scmp.ne.s32.totalorder %s70, %s73
      %p79 = scmp.eq.s32.totalorder %s48, 0
      %p80 = por %p78, %p79
      %p81 = scmp.ne.s32.totalorder %s70, %s73
      %p82 = scmp.eq.s32.totalorder %s53, 3
      %p83 = por %p81, %p82
      %p84 = scmp.ne.s32.totalorder %s73, %s74
      %p85 = scmp.eq.s32.totalorder %s53, 0
      %p86 = por %p84, %p85
      %p87 = scmp.ne.s32.totalorder %s73, %s74
      %p88 = scmp.eq.s32.totalorder %s54, 3
      %p89 = por %p87, %p88
      %p91 = scmp.ne.s32.totalorder %s74, %s90
      %p92 = scmp.eq.s32.totalorder %s54, 0
      %p93 = por %p91, %p92
      %s95 = sadd.s32 %s94, 1
      %p98 = scmp.eq.s32.totalorder %s48, 3
      %p99 = scmp.ne.s32.totalorder %s94, %s96
      %p100 = scmp.eq.s32.totalorder %s48, 0
      %p101 = por %p99, %p100
      %p102 = scmp.ne.s32.totalorder %s94, %s96
      %p103 = scmp.eq.s32.totalorder %s53, 3
      %p104 = por %p102, %p103
      %p105 = scmp.ne.s32.totalorder %s96, %s97
      %p106 = scmp.eq.s32.totalorder %s53, 0
      %p107 = por %p105, %p106
      %p108 = scmp.ne.s32.totalorder %s96, %s97
      %p109 = scmp.eq.s32.totalorder %s54, 3
      %p110 = por %p108, %p109
      %p112 = scmp.ne.s32.totalorder %s97, %s111
      %p113 = scmp.eq.s32.totalorder %s54, 0
      %p114 = por %p112, %p113
      %s116 = sadd.s32 %s115, 1
      %p119 = scmp.eq.s32.totalorder %s48, 3
      %p120 = scmp.ne.s32.totalorder %s115, %s117
      %p121 = scmp.eq.s32.totalorder %s48, 0
      %p122 = por %p120, %p121
      %p123 = scmp.ne.s32.totalorder %s115, %s117
      %p124 = scmp.eq.s32.totalorder %s53, 3
      %p125 = por %p123, %p124
      %p126 = scmp.ne.s32.totalorder %s117, %s118
      %p127 = scmp.eq.s32.totalorder %s53, 0
      %p128 = por %p126, %p127
      %p129 = scmp.ne.s32.totalorder %s117, %s118
      %p130 = scmp.eq.s32.totalorder %s54, 3
      %p131 = por %p129, %p130
      %p133 = scmp.ne.s32.totalorder %s118, %s132
      %p134 = scmp.eq.s32.totalorder %s54, 0
      %p135 = por %p133, %p134
      %s137 = sadd.s32 %s136, 1
      %p140 = scmp.eq.s32.totalorder %s48, 3
      %p141 = scmp.ne.s32.totalorder %s136, %s138
      %p142 = scmp.eq.s32.totalorder %s48, 0
      %p143 = por %p141, %p142
      %p144 = scmp.ne.s32.totalorder %s136, %s138
      %p145 = scmp.eq.s32.totalorder %s53, 3
      %p146 = por %p144, %p145
      %p147 = scmp.ne.s32.totalorder %s138, %s139
      %p148 = scmp.eq.s32.totalorder %s53, 0
      %p149 = por %p147, %p148
      %p150 = scmp.ne.s32.totalorder %s138, %s139
      %p151 = scmp.eq.s32.totalorder %s54, 3
      %p152 = por %p150, %p151
      %p154 = scmp.ne.s32.totalorder %s139, %s153
      %p155 = scmp.eq.s32.totalorder %s54, 0
      %p156 = por %p154, %p155
      %s158 = sadd.s32 %s157, 1
      %p161 = scmp.eq.s32.totalorder %s48, 3
      %p162 = scmp.ne.s32.totalorder %s157, %s159
      %p163 = scmp.eq.s32.totalorder %s48, 0
      %p164 = por %p162, %p163
      %p165 = scmp.ne.s32.totalorder %s157, %s159
      %p166 = scmp.eq.s32.totalorder %s53, 3
      %p167 = por %p165, %p166
      %p168 = scmp.ne.s32.totalorder %s159, %s160
      %p169 = scmp.eq.s32.totalorder %s53, 0
      %p170 = por %p168, %p169
      %p171 = scmp.ne.s32.totalorder %s159, %s160
      %p172 = scmp.eq.s32.totalorder %s54, 3
      %p173 = por %p171, %p172
      %p175 = scmp.ne.s32.totalorder %s160, %s174
      %p176 = scmp.eq.s32.totalorder %s54, 0
      %p177 = por %p175, %p176
      %s178 = ssub.s32 %s55, %s67
      %p179 = scmp.eq.s32.totalorder %s178, 0
      %s181 = sadd.s32 %s180, 1
      %s182 = scalar_select %p179, %s180, %s181
      %p185 = pneg %p179
      %p186 = scmp.eq.s32.totalorder %s48, 3
      %p187 = por %p185, %p186
      %p188 = scmp.ne.s32.totalorder %s180, %s183
      %p189 = scmp.eq.s32.totalorder %s48, 0
      %p190 = por %p188, %p189
      %p191 = scmp.ne.s32.totalorder %s180, %s183
      %p192 = scmp.eq.s32.totalorder %s53, 3
      %p193 = por %p191, %p192
      %p194 = scmp.ne.s32.totalorder %s183, %s184
      %p195 = scmp.eq.s32.totalorder %s53, 0
      %p196 = por %p194, %p195
      %p197 = scmp.ne.s32.totalorder %s183, %s184
      %p198 = scmp.eq.s32.totalorder %s54, 3
      %p199 = por %p197, %p198
      %p201 = scmp.ne.s32.totalorder %s184, %s200
      %p202 = scmp.eq.s32.totalorder %s54, 0
      %p203 = por %p201, %p202
      %s204 = ssub.s32 %s55, %s67
      %p205 = scmp.eq.s32.totalorder %s204, 0
      %s207 = sadd.s32 %s206, 1
      %s208 = scalar_select %p205, %s206, %s207
      %p211 = pneg %p205
      %p212 = scmp.eq.s32.totalorder %s48, 3
      %p213 = por %p211, %p212
      %p214 = scmp.ne.s32.totalorder %s206, %s209
      %p215 = scmp.eq.s32.totalorder %s48, 0
      %p216 = por %p214, %p215
      %p217 = scmp.ne.s32.totalorder %s206, %s209
      %p218 = scmp.eq.s32.totalorder %s53, 3
      %p219 = por %p217, %p218
      %p220 = scmp.ne.s32.totalorder %s209, %s210
      %p221 = scmp.eq.s32.totalorder %s53, 0
      %p222 = por %p220, %p221
      %p223 = scmp.ne.s32.totalorder %s209, %s210
      %p224 = scmp.eq.s32.totalorder %s54, 3
      %p225 = por %p223, %p224
      %p227 = scmp.ne.s32.totalorder %s210, %s226
      %p228 = scmp.eq.s32.totalorder %s54, 0
      %p229 = por %p227, %p228
      %s230 = ssub.s32 %s55, %s67
      %p231 = scmp.eq.s32.totalorder %s230, 0
      %s233 = sadd.s32 %s232, 1
      %s234 = scalar_select %p231, %s232, %s233
      %p237 = pneg %p231
      %p238 = scmp.eq.s32.totalorder %s48, 3
      %p239 = por %p237, %p238
      %p240 = scmp.ne.s32.totalorder %s232, %s235
      %p241 = scmp.eq.s32.totalorder %s48, 0
      %p242 = por %p240, %p241
      %p243 = scmp.ne.s32.totalorder %s232, %s235
      %p244 = scmp.eq.s32.totalorder %s53, 3
      %p245 = por %p243, %p244
      %p246 = scmp.ne.s32.totalorder %s235, %s236
      %p247 = scmp.eq.s32.totalorder %s53, 0
      %p248 = por %p246, %p247
      %p249 = scmp.ne.s32.totalorder %s235, %s236
      %p250 = scmp.eq.s32.totalorder %s54, 3
      %p251 = por %p249, %p250
      %p253 = scmp.ne.s32.totalorder %s236, %s252
      %p254 = scmp.eq.s32.totalorder %s54, 0
      %p255 = por %p253, %p254
      %s256 = ssub.s32 %s55, %s67
      %p257 = scmp.eq.s32.totalorder %s256, 0
      %s259 = sadd.s32 %s258, 1
      %s260 = scalar_select %p257, %s258, %s259
      %p263 = pneg %p257
      %p264 = scmp.eq.s32.totalorder %s48, 3
      %p265 = por %p263, %p264
      %p266 = scmp.ne.s32.totalorder %s258, %s261
      %p267 = scmp.eq.s32.totalorder %s48, 0
      %p268 = por %p266, %p267
      %p269 = scmp.ne.s32.totalorder %s258, %s261
      %p270 = scmp.eq.s32.totalorder %s53, 3
      %p271 = por %p269, %p270
      %p272 = scmp.ne.s32.totalorder %s261, %s262
      %p273 = scmp.eq.s32.totalorder %s53, 0
      %p274 = por %p272, %p273
      %p275 = scmp.ne.s32.totalorder %s261, %s262
      %p276 = scmp.eq.s32.totalorder %s54, 3
      %p277 = por %p275, %p276
      %p279 = scmp.ne.s32.totalorder %s262, %s278
      %p280 = scmp.eq.s32.totalorder %s54, 0
      %p281 = por %p279, %p280
      %s282 = ssub.s32 %s55, %s67
      %p283 = scmp.eq.s32.totalorder %s282, 0
      %s285 = sadd.s32 %s284, 1
      %s286 = scalar_select %p283, %s284, %s285
      %p289 = pneg %p283
      %p290 = scmp.eq.s32.totalorder %s48, 3
      %p291 = por %p289, %p290
      %p292 = scmp.ne.s32.totalorder %s284, %s287
      %p293 = scmp.eq.s32.totalorder %s48, 0
      %p294 = por %p292, %p293
      %p295 = scmp.ne.s32.totalorder %s284, %s287
      %p296 = scmp.eq.s32.totalorder %s53, 3
      %p297 = por %p295, %p296
      %p298 = scmp.ne.s32.totalorder %s287, %s288
      %p299 = scmp.eq.s32.totalorder %s53, 0
      %p300 = por %p298, %p299
      %p301 = scmp.ne.s32.totalorder %s287, %s288
      %p302 = scmp.eq.s32.totalorder %s54, 3
      %p303 = por %p301, %p302
      %p305 = scmp.ne.s32.totalorder %s288, %s304
      %p306 = scmp.eq.s32.totalorder %s54, 0
      %p307 = por %p305, %p306
      %s308 = ssub.s32 %s55, %s67
      %p309 = scmp.eq.s32.totalorder %s308, 0
      %s311 = sadd.s32 %s310, 1
      %s312 = scalar_select %p309, %s310, %s311
      %p315 = pneg %p309
      %p316 = scmp.eq.s32.totalorder %s48, 3
      %p317 = por %p315, %p316
      %p318 = scmp.ne.s32.totalorder %s310, %s313
      %p319 = scmp.eq.s32.totalorder %s48, 0
      %p320 = por %p318, %p319
      %p321 = scmp.ne.s32.totalorder %s310, %s313
      %p322 = scmp.eq.s32.totalorder %s53, 3
      %p323 = por %p321, %p322
      %p324 = scmp.ne.s32.totalorder %s313, %s314
      %p325 = scmp.eq.s32.totalorder %s53, 0
      %p326 = por %p324, %p325
      %p327 = scmp.ne.s32.totalorder %s313, %s314
      %p328 = scmp.eq.s32.totalorder %s54, 3
      %p329 = por %p327, %p328
      %p331 = scmp.ne.s32.totalorder %s314, %s330
      %p332 = scmp.eq.s32.totalorder %s54, 0
      %p333 = por %p331, %p332
      %s334 = ssub.s32 %s55, %s67
      %p335 = scmp.eq.s32.totalorder %s334, 0
      %s337 = sadd.s32 %s336, 1
      %s338 = scalar_select %p335, %s336, %s337
      %p341 = pneg %p335
      %p342 = scmp.eq.s32.totalorder %s48, 3
      %p343 = por %p341, %p342
      %p344 = scmp.ne.s32.totalorder %s336, %s339
      %p345 = scmp.eq.s32.totalorder %s48, 0
      %p346 = por %p344, %p345
      %p347 = scmp.ne.s32.totalorder %s336, %s339
      %p348 = scmp.eq.s32.totalorder %s53, 3
      %p349 = por %p347, %p348
      %p350 = scmp.ne.s32.totalorder %s339, %s340
      %p351 = scmp.eq.s32.totalorder %s53, 0
      %p352 = por %p350, %p351
      %p353 = scmp.ne.s32.totalorder %s339, %s340
      %p354 = scmp.eq.s32.totalorder %s54, 3
      %p355 = por %p353, %p354
      %p357 = scmp.ne.s32.totalorder %s340, %s356
      %p358 = scmp.eq.s32.totalorder %s54, 0
      %p359 = por %p357, %p358
      %s360 = ssub.s32 %s55, %s67
      %p361 = scmp.eq.s32.totalorder %s360, 0
      %s363 = sadd.s32 %s362, 1
      %s364 = scalar_select %p361, %s362, %s363
      %p367 = pneg %p361
      %p368 = scmp.eq.s32.totalorder %s48, 3
      %p369 = por %p367, %p368
      %p370 = scmp.ne.s32.totalorder %s362, %s365
      %p371 = scmp.eq.s32.totalorder %s48, 0
      %p372 = por %p370, %p371
      %p373 = scmp.ne.s32.totalorder %s362, %s365
      %p374 = scmp.eq.s32.totalorder %s53, 3
      %p375 = por %p373, %p374
      %p376 = scmp.ne.s32.totalorder %s365, %s366
      %p377 = scmp.eq.s32.totalorder %s53, 0
      %p378 = por %p376, %p377
      %p379 = scmp.ne.s32.totalorder %s365, %s366
      %p380 = scmp.eq.s32.totalorder %s54, 3
      %p381 = por %p379, %p380
      %p383 = scmp.ne.s32.totalorder %s366, %s382
      %p384 = scmp.eq.s32.totalorder %s54, 0
      %p385 = por %p383, %p384
      %s386 = ssub.s32 %s55, %s67
      %p387 = scmp.eq.s32.totalorder %s386, 0
      %s389 = sadd.s32 %s388, 1
      %s390 = scalar_select %p387, %s388, %s389
      %p393 = pneg %p387
      %p394 = scmp.eq.s32.totalorder %s48, 3
      %p395 = por %p393, %p394
      %p396 = scmp.ne.s32.totalorder %s388, %s391
      %p397 = scmp.eq.s32.totalorder %s48, 0
      %p398 = por %p396, %p397
      %p399 = scmp.ne.s32.totalorder %s388, %s391
      %p400 = scmp.eq.s32.totalorder %s53, 3
      %p401 = por %p399, %p400
      %p402 = scmp.ne.s32.totalorder %s391, %s392
      %p403 = scmp.eq.s32.totalorder %s53, 0
      %p404 = por %p402, %p403
      %p405 = scmp.ne.s32.totalorder %s391, %s392
      %p406 = scmp.eq.s32.totalorder %s54, 3
      %p407 = por %p405, %p406
      %p409 = scmp.ne.s32.totalorder %s392, %s408
      %p410 = scmp.eq.s32.totalorder %s54, 0
      %p411 = por %p409, %p410
      %s412 = ssub.s32 %s55, %s67
      %p413 = scmp.eq.s32.totalorder %s412, 0
      %s415 = sadd.s32 %s414, 1
      %s416 = scalar_select %p413, %s414, %s415
      %p419 = pneg %p413
      %p420 = scmp.eq.s32.totalorder %s48, 3
      %p421 = por %p419, %p420
      %p422 = scmp.ne.s32.totalorder %s414, %s417
      %p423 = scmp.eq.s32.totalorder %s48, 0
      %p424 = por %p422, %p423
      %p425 = scmp.ne.s32.totalorder %s414, %s417
      %p426 = scmp.eq.s32.totalorder %s53, 3
      %p427 = por %p425, %p426
      %p428 = scmp.ne.s32.totalorder %s417, %s418
      %p429 = scmp.eq.s32.totalorder %s53, 0
      %p430 = por %p428, %p429
      %p431 = scmp.ne.s32.totalorder %s417, %s418
      %p432 = scmp.eq.s32.totalorder %s54, 3
      %p433 = por %p431, %p432
      %p435 = scmp.ne.s32.totalorder %s418, %s434
      %p436 = scmp.eq.s32.totalorder %s54, 0
      %p437 = por %p435, %p436
      %s438 = ssub.s32 %s55, %s67
      %p439 = scmp.eq.s32.totalorder %s438, 0
      %s441 = sadd.s32 %s440, 1
      %s442 = scalar_select %p439, %s440, %s441
      %p445 = pneg %p439
      %p446 = scmp.eq.s32.totalorder %s48, 3
      %p447 = por %p445, %p446
      %p448 = scmp.ne.s32.totalorder %s440, %s443
      %p449 = scmp.eq.s32.totalorder %s48, 0
      %p450 = por %p448, %p449
      %p451 = scmp.ne.s32.totalorder %s440, %s443
      %p452 = scmp.eq.s32.totalorder %s53, 3
      %p453 = por %p451, %p452
      %p454 = scmp.ne.s32.totalorder %s443, %s444
      %p455 = scmp.eq.s32.totalorder %s53, 0
      %p456 = por %p454, %p455
      %p457 = scmp.ne.s32.totalorder %s443, %s444
      %p458 = scmp.eq.s32.totalorder %s54, 3
      %p459 = por %p457, %p458
      %p461 = scmp.ne.s32.totalorder %s444, %s460
      %p462 = scmp.eq.s32.totalorder %s54, 0
      %p463 = por %p461, %p462
      %s464 = ssub.s32 %s55, %s67
      %s465 = ssub.s32 %s56, %s63
      %s466 = sor.u32 %s464, %s465
      %p467 = scmp.eq.s32.totalorder %s466, 0
      %s469 = sadd.s32 %s468, 1
      %s470 = scalar_select %p467, %s468, %s469
      %p473 = pneg %p467
      %p474 = scmp.eq.s32.totalorder %s48, 3
      %p475 = por %p473, %p474
      %p476 = scmp.ne.s32.totalorder %s468, %s471
      %p477 = scmp.eq.s32.totalorder %s48, 0
      %p478 = por %p476, %p477
      %p479 = scmp.ne.s32.totalorder %s468, %s471
      %p480 = scmp.eq.s32.totalorder %s53, 3
      %p481 = por %p479, %p480
      %p482 = scmp.ne.s32.totalorder %s471, %s472
      %p483 = scmp.eq.s32.totalorder %s53, 0
      %p484 = por %p482, %p483
      %p485 = scmp.ne.s32.totalorder %s471, %s472
      %p486 = scmp.eq.s32.totalorder %s54, 3
      %p487 = por %p485, %p486
      %p489 = scmp.ne.s32.totalorder %s472, %s488
      %p490 = scmp.eq.s32.totalorder %s54, 0
      %p491 = por %p489, %p490
      %p492 = scmp.le.s32.totalorder 1, %s48
      %p493 = scmp.lt.s32.totalorder %s48, 5
      %p494 = pnand %p492, %p493
      %p495 = pneg %p494
      // Predicated region
      $region9: #{bit_mamsleep_forward.2} parent=5 // pred_check
        _
      $region10: #{bit_mamsleep_forward.2} parent=5 // pred_check_branch
        %497 = sbr.rel (%p494) target = $region12
      $region11: #{bit_mamsleep_forward.2} parent=5 // pred_region
        %s498 = ssub.s32 %s48, 1
        // Predicated region
        $region13: #{bit_mamsleep_forward.2} parent=11 // pred_check
          %p499 = pneg %p107
        $region14: #{bit_mamsleep_forward.2} parent=11 // pred_check_branch
          %501 = sbr.rel (%p499) target = $region16
        $region15: #{bit_mamsleep_forward.2} parent=11 // pred_region
          %s503 = ssub.s32 16, 16
          %504 = vsyncadd [#allocation14], %s503
          %s506 = sshll.u32 [#allocation13], 4
          %s507 = int_to_ptr.vmem [resolvable:$true] %s506
          %509 = dma.hbm_to_vmem [thread:$0]  %s1, 16, %s507, [#allocation14]
        $region16: #{bit_mamsleep_forward.2} parent=11 // pred_fallthru
          _
        // Predicated region
        $region17: #{bit_mamsleep_forward.2} parent=11 // pred_check
          %p510 = pneg %p128
        $region18: #{bit_mamsleep_forward.2} parent=11 // pred_check_branch
          %512 = sbr.rel (%p510) target = $region20
        $region19: #{bit_mamsleep_forward.2} parent=11 // pred_region
          %s514 = ssub.s32 16, 16
          %515 = vsyncadd [#allocation14], %s514
          %s517 = sshll.u32 [#allocation15], 4
          %s518 = int_to_ptr.vmem [resolvable:$true] %s517
          %520 = dma.hbm_to_vmem [thread:$0]  %s2, 16, %s518, [#allocation14]
        $region20: #{bit_mamsleep_forward.2} parent=11 // pred_fallthru
          _
        // Predicated region
        $region21: #{bit_mamsleep_forward.2} parent=11 // pred_check
          %p521 = pneg %p149
        $region22: #{bit_mamsleep_forward.2} parent=11 // pred_check_branch
          %523 = sbr.rel (%p521) target = $region24
        $region23: #{bit_mamsleep_forward.2} parent=11 // pred_region
          %s525 = ssub.s32 512, 512
          %526 = vsyncadd [#allocation17], %s525
          %s527 = sshll.u32 [#allocation16], 4
          %s528 = int_to_ptr.vmem [resolvable:$true] %s527
          %533 = dma.hbm_to_vmem [thread:$0]  %s3, 512, %s528, [#allocation17], 128, 128, 8
        $region24: #{bit_mamsleep_forward.2} parent=11 // pred_fallthru
          _
        // Predicated region
        $region25: #{bit_mamsleep_forward.2} parent=11 // pred_check
          %p534 = pneg %p170
        $region26: #{bit_mamsleep_forward.2} parent=11 // pred_check_branch
          %536 = sbr.rel (%p534) target = $region28
        $region27: #{bit_mamsleep_forward.2} parent=11 // pred_region
          %s538 = ssub.s32 16, 16
          %539 = vsyncadd [#allocation17], %s538
          %s541 = sshll.u32 [#allocation18], 4
          %s542 = int_to_ptr.vmem [resolvable:$true] %s541
          %544 = dma.hbm_to_vmem [thread:$0]  %s4, 16, %s542, [#allocation17]
        $region28: #{bit_mamsleep_forward.2} parent=11 // pred_fallthru
          _
      $region12: #{bit_mamsleep_forward.2} parent=5 // pred_fallthru
        _
      %p545 = scmp.lt.s32.totalorder %s48, 4
      // Predicated region
      $region29: #{bit_mamsleep_forward.2} parent=5 // pred_check
        %p546 = pneg %p545
      $region30: #{bit_mamsleep_forward.2} parent=5 // pred_check_branch
        %548 = sbr.rel (%p546) target = $region32
      $region31: #{bit_mamsleep_forward.2} parent=5 // pred_region
        // Predicated region
        $region33: #{bit_mamsleep_forward.2} parent=31 // pred_check
          %p549 = pneg %p80
        $region34: #{bit_mamsleep_forward.2} parent=31 // pred_check_branch
          %551 = sbr.rel (%p549) target = $region36
        $region35: #{bit_mamsleep_forward.2} parent=31 // pred_region
          %s552 = sand.u32 %s70, 1
          %s553 = scalar_lea.sflag [#allocation11], %s552
          %s554 = sand.u32 %s70, 1
          %s555 = smul.addr %s554, 8
          %s556 = scalar_lea.vmem [#allocation10], %s555
          %s558 = ssub.s32 128, 128
          %559 = vsyncadd %s553, %s558
          %s560 = smul.addr %s56, 128
          %s561 = scalar_lea.hbm %s0, %s560
          %s563 = sshll.u32 %s556, 4
          %s564 = int_to_ptr.vmem [resolvable:$true] %s563
          %566 = dma.hbm_to_vmem [thread:$0]  %s561, 128, %s564, %s553
        $region36: #{bit_mamsleep_forward.2} parent=31 // pred_fallthru
          _
        // Predicated region
        $region37: #{bit_mamsleep_forward.2} parent=31 // pred_check
          %p567 = pneg %p190
        $region38: #{bit_mamsleep_forward.2} parent=31 // pred_check_branch
          %569 = sbr.rel (%p567) target = $region40
        $region39: #{bit_mamsleep_forward.2} parent=31 // pred_region
          %s570 = sand.u32 %s48, 1
          %s571 = scalar_lea.sflag [#allocation20], %s570
          %s572 = sand.u32 %s180, 1
          %s573 = smul.addr %s572, 32
          %s574 = scalar_lea.vmem [#allocation19], %s573
          %s576 = ssub.s32 512, 512
          %577 = vsyncadd %s571, %s576
          %s578 = smul.addr %s55, 4
          %s579 = smul.addr %s578, 128
          %s580 = scalar_lea.hbm %s5, %s579
          %s581 = sshll.u32 %s574, 4
          %s582 = int_to_ptr.vmem [resolvable:$true] %s581
          %587 = dma.hbm_to_vmem [thread:$0]  %s580, 512, %s582, %s571, 128, 128, 8
        $region40: #{bit_mamsleep_forward.2} parent=31 // pred_fallthru
          _
        // Predicated region
        $region41: #{bit_mamsleep_forward.2} parent=31 // pred_check
          %p588 = pneg %p216
        $region42: #{bit_mamsleep_forward.2} parent=31 // pred_check_branch
          %590 = sbr.rel (%p588) target = $region44
        $region43: #{bit_mamsleep_forward.2} parent=31 // pred_region
          %s591 = sand.u32 %s48, 1
          %s592 = scalar_lea.sflag [#allocation20], %s591
          %s593 = sand.u32 %s206, 1
          %s594 = scalar_lea.vmem [#allocation21], %s593
          %s596 = ssub.s32 16, 16
          %597 = vsyncadd %s592, %s596
          %s598 = smul.addr %s55, 16
          %s599 = scalar_lea.hbm %s6, %s598
          %s601 = sshll.u32 %s594, 4
          %s602 = int_to_ptr.vmem [resolvable:$true] %s601
          %604 = dma.hbm_to_vmem [thread:$0]  %s599, 16, %s602, %s592
        $region44: #{bit_mamsleep_forward.2} parent=31 // pred_fallthru
          _
        // Predicated region
        $region45: #{bit_mamsleep_forward.2} parent=31 // pred_check
          %p605 = pneg %p242
        $region46: #{bit_mamsleep_forward.2} parent=31 // pred_check_branch
          %607 = sbr.rel (%p605) target = $region48
        $region47: #{bit_mamsleep_forward.2} parent=31 // pred_region
          %s608 = sand.u32 %s48, 1
          %s609 = scalar_lea.sflag [#allocation23], %s608
          %s610 = sand.u32 %s232, 1
          %s611 = smul.addr %s610, 32
          %s612 = scalar_lea.vmem [#allocation22], %s611
          %s614 = ssub.s32 512, 512
          %615 = vsyncadd %s609, %s614
          %s616 = smul.addr %s55, 4
          %s617 = smul.addr %s616, 128
          %s618 = scalar_lea.hbm %s7, %s617
          %s619 = sshll.u32 %s612, 4
          %s620 = int_to_ptr.vmem [resolvable:$true] %s619
          %625 = dma.hbm_to_vmem [thread:$0]  %s618, 512, %s620, %s609, 128, 128, 8
        $region48: #{bit_mamsleep_forward.2} parent=31 // pred_fallthru
          _
        // Predicated region
        $region49: #{bit_mamsleep_forward.2} parent=31 // pred_check
          %p626 = pneg %p268
        $region50: #{bit_mamsleep_forward.2} parent=31 // pred_check_branch
          %628 = sbr.rel (%p626) target = $region52
        $region51: #{bit_mamsleep_forward.2} parent=31 // pred_region
          %s629 = sand.u32 %s48, 1
          %s630 = scalar_lea.sflag [#allocation23], %s629
          %s631 = sand.u32 %s258, 1
          %s632 = smul.addr %s631, 4
          %s633 = scalar_lea.vmem [#allocation24], %s632
          %s635 = ssub.s32 64, 64
          %636 = vsyncadd %s630, %s635
          %s637 = smul.addr %s55, 64
          %s638 = scalar_lea.hbm %s8, %s637
          %s640 = sshll.u32 %s633, 4
          %s641 = int_to_ptr.vmem [resolvable:$true] %s640
          %643 = dma.hbm_to_vmem [thread:$0]  %s638, 64, %s641, %s630
        $region52: #{bit_mamsleep_forward.2} parent=31 // pred_fallthru
          _
        // Predicated region
        $region53: #{bit_mamsleep_forward.2} parent=31 // pred_check
          %p644 = pneg %p294
        $region54: #{bit_mamsleep_forward.2} parent=31 // pred_check_branch
          %646 = sbr.rel (%p644) target = $region56
        $region55: #{bit_mamsleep_forward.2} parent=31 // pred_region
          %s647 = sand.u32 %s48, 1
          %s648 = scalar_lea.sflag [#allocation26], %s647
          %s649 = sand.u32 %s284, 1
          %s650 = scalar_lea.vmem [#allocation25], %s649
          %s652 = ssub.s32 16, 16
          %653 = vsyncadd %s648, %s652
          %s654 = smul.addr %s55, 16
          %s655 = scalar_lea.hbm %s9, %s654
          %s657 = sshll.u32 %s650, 4
          %s658 = int_to_ptr.vmem [resolvable:$true] %s657
          %660 = dma.hbm_to_vmem [thread:$0]  %s655, 16, %s658, %s648
        $region56: #{bit_mamsleep_forward.2} parent=31 // pred_fallthru
          _
        // Predicated region
        $region57: #{bit_mamsleep_forward.2} parent=31 // pred_check
          %p661 = pneg %p320
        $region58: #{bit_mamsleep_forward.2} parent=31 // pred_check_branch
          %663 = sbr.rel (%p661) target = $region60
        $region59: #{bit_mamsleep_forward.2} parent=31 // pred_region
          %s664 = sand.u32 %s48, 1
          %s665 = scalar_lea.sflag [#allocation26], %s664
          %s666 = sand.u32 %s310, 1
          %s667 = smul.addr %s666, 64
          %s668 = scalar_lea.vmem [#allocation27], %s667
          %s670 = ssub.s32 1024, 1024
          %671 = vsyncadd %s665, %s670
          %s672 = smul.addr %s55, 8
          %s673 = smul.addr %s672, 128
          %s674 = scalar_lea.hbm %s10, %s673
          %s675 = sshll.u32 %s668, 4
          %s676 = int_to_ptr.vmem [resolvable:$true] %s675
          %681 = dma.hbm_to_vmem [thread:$0]  %s674, 1024, %s676, %s665, 128, 128, 8
        $region60: #{bit_mamsleep_forward.2} parent=31 // pred_fallthru
          _
        // Predicated region
        $region61: #{bit_mamsleep_forward.2} parent=31 // pred_check
          %p682 = pneg %p346
        $region62: #{bit_mamsleep_forward.2} parent=31 // pred_check_branch
          %684 = sbr.rel (%p682) target = $region64
        $region63: #{bit_mamsleep_forward.2} parent=31 // pred_region
          %s685 = sand.u32 %s48, 1
          %s686 = scalar_lea.sflag [#allocation29], %s685
          %s687 = sand.u32 %s336, 1
          %s688 = smul.addr %s687, 2
          %s689 = scalar_lea.vmem [#allocation28], %s688
          %s691 = ssub.s32 32, 32
          %692 = vsyncadd %s686, %s691
          %s693 = smul.addr %s55, 32
          %s694 = scalar_lea.hbm %s11, %s693
          %s696 = sshll.u32 %s689, 4
          %s697 = int_to_ptr.vmem [resolvable:$true] %s696
          %699 = dma.hbm_to_vmem [thread:$0]  %s694, 32, %s697, %s686
        $region64: #{bit_mamsleep_forward.2} parent=31 // pred_fallthru
          _
        // Predicated region
        $region65: #{bit_mamsleep_forward.2} parent=31 // pred_check
          %p700 = pneg %p372
        $region66: #{bit_mamsleep_forward.2} parent=31 // pred_check_branch
          %702 = sbr.rel (%p700) target = $region68
        $region67: #{bit_mamsleep_forward.2} parent=31 // pred_region
          %s703 = sand.u32 %s48, 1
          %s704 = scalar_lea.sflag [#allocation29], %s703
          %s705 = sand.u32 %s362, 1
          %s706 = scalar_lea.vmem [#allocation30], %s705
          %s708 = ssub.s32 16, 16
          %709 = vsyncadd %s704, %s708
          %s710 = smul.addr %s55, 16
          %s711 = scalar_lea.hbm %s12, %s710
          %s713 = sshll.u32 %s706, 4
          %s714 = int_to_ptr.vmem [resolvable:$true] %s713
          %716 = dma.hbm_to_vmem [thread:$0]  %s711, 16, %s714, %s704
        $region68: #{bit_mamsleep_forward.2} parent=31 // pred_fallthru
          _
        // Predicated region
        $region69: #{bit_mamsleep_forward.2} parent=31 // pred_check
          %p717 = pneg %p398
        $region70: #{bit_mamsleep_forward.2} parent=31 // pred_check_branch
          %719 = sbr.rel (%p717) target = $region72
        $region71: #{bit_mamsleep_forward.2} parent=31 // pred_region
          %s720 = sand.u32 %s48, 1
          %s721 = scalar_lea.sflag [#allocation32], %s720
          %s722 = sand.u32 %s388, 1
          %s723 = smul.addr %s722, 16
          %s724 = scalar_lea.vmem [#allocation31], %s723
          %s726 = ssub.s32 256, 256
          %727 = vsyncadd %s721, %s726
          %s728 = smul.addr %s55, 2
          %s729 = smul.addr %s728, 128
          %s730 = scalar_lea.hbm %s13, %s729
          %s731 = sshll.u32 %s724, 4
          %s732 = int_to_ptr.vmem [resolvable:$true] %s731
          %737 = dma.hbm_to_vmem [thread:$0]  %s730, 256, %s732, %s721, 128, 128, 8
        $region72: #{bit_mamsleep_forward.2} parent=31 // pred_fallthru
          _
        // Predicated region
        $region73: #{bit_mamsleep_forward.2} parent=31 // pred_check
          %p738 = pneg %p424
        $region74: #{bit_mamsleep_forward.2} parent=31 // pred_check_branch
          %740 = sbr.rel (%p738) target = $region76
        $region75: #{bit_mamsleep_forward.2} parent=31 // pred_region
          %s741 = sand.u32 %s48, 1
          %s742 = scalar_lea.sflag [#allocation32], %s741
          %s743 = sand.u32 %s414, 1
          %s744 = scalar_lea.vmem [#allocation33], %s743
          %s746 = ssub.s32 16, 16
          %747 = vsyncadd %s742, %s746
          %s748 = smul.addr %s55, 16
          %s749 = scalar_lea.hbm %s14, %s748
          %s751 = sshll.u32 %s744, 4
          %s752 = int_to_ptr.vmem [resolvable:$true] %s751
          %754 = dma.hbm_to_vmem [thread:$0]  %s749, 16, %s752, %s742
        $region76: #{bit_mamsleep_forward.2} parent=31 // pred_fallthru
          _
        // Predicated region
        $region77: #{bit_mamsleep_forward.2} parent=31 // pred_check
          %p755 = pneg %p450
        $region78: #{bit_mamsleep_forward.2} parent=31 // pred_check_branch
          %757 = sbr.rel (%p755) target = $region80
        $region79: #{bit_mamsleep_forward.2} parent=31 // pred_region
          %s758 = sand.u32 %s440, 1
          %s759 = scalar_lea.sflag [#allocation35], %s758
          %s760 = sand.u32 %s440, 1
          %s761 = smul.addr %s760, 64
          %s762 = scalar_lea.vmem [#allocation34], %s761
          %s764 = ssub.s32 1024, 1024
          %765 = vsyncadd %s759, %s764
          %s766 = smul.addr %s55, 8
          %s767 = smul.addr %s766, 128
          %s768 = scalar_lea.hbm %s15, %s767
          %s769 = sshll.u32 %s762, 4
          %s770 = int_to_ptr.vmem [resolvable:$true] %s769
          %775 = dma.hbm_to_vmem [thread:$0]  %s768, 1024, %s770, %s759, 128, 128, 8
        $region80: #{bit_mamsleep_forward.2} parent=31 // pred_fallthru
          _
      $region32: #{bit_mamsleep_forward.2} parent=5 // pred_fallthru
        _
      %p776 = scmp.le.s32.totalorder 1, %s48
      %p777 = scmp.lt.s32.totalorder %s48, 5
      %p778 = pnand %p776, %p777
      %p779 = pneg %p778
      // Predicated region
      $region81: #{bit_mamsleep_forward.2} parent=5 // pred_check
        _
      $region82: #{bit_mamsleep_forward.2} parent=5 // pred_check_branch
        %781 = sbr.rel (%p778) target = $region84
      $region83: #{bit_mamsleep_forward.2} parent=5 // pred_region
        %s782 = ssub.s32 %s48, 1
        %s783 = sand.u32 %s73, 1
        %s784 = scalar_lea.sflag [#allocation11], %s783
        %s785 = sand.u32 %s73, 1
        %s786 = smul.addr %s785, 8
        %s787 = scalar_lea.vmem [#allocation10], %s786
        // Predicated region
        $region85: #{bit_mamsleep_forward.2} parent=83 // pred_check
          %p788 = pneg %p86
        $region86: #{bit_mamsleep_forward.2} parent=83 // pred_check_branch
          %790 = sbr.rel (%p788) target = $region88
        $region87: #{bit_mamsleep_forward.2} parent=83 // pred_region
          %791 = dma.done %s784, 128
        $region88: #{bit_mamsleep_forward.2} parent=83 // pred_fallthru
          _
        // Predicated region
        $region89: #{bit_mamsleep_forward.2} parent=83 // pred_check
          %p792 = pneg %p107
        $region90: #{bit_mamsleep_forward.2} parent=83 // pred_check_branch
          %794 = sbr.rel (%p792) target = $region92
        $region91: #{bit_mamsleep_forward.2} parent=83 // pred_region
          %795 = dma.done [#allocation14], 16
        $region92: #{bit_mamsleep_forward.2} parent=83 // pred_fallthru
          _
        // Predicated region
        $region93: #{bit_mamsleep_forward.2} parent=83 // pred_check
          %p796 = pneg %p128
        $region94: #{bit_mamsleep_forward.2} parent=83 // pred_check_branch
          %798 = sbr.rel (%p796) target = $region96
        $region95: #{bit_mamsleep_forward.2} parent=83 // pred_region
          %799 = dma.done [#allocation14], 16
        $region96: #{bit_mamsleep_forward.2} parent=83 // pred_fallthru
          _
        // Predicated region
        $region97: #{bit_mamsleep_forward.2} parent=83 // pred_check
          %p800 = pneg %p149
        $region98: #{bit_mamsleep_forward.2} parent=83 // pred_check_branch
          %802 = sbr.rel (%p800) target = $region100
        $region99: #{bit_mamsleep_forward.2} parent=83 // pred_region
          %803 = dma.done [#allocation17], 512
        $region100: #{bit_mamsleep_forward.2} parent=83 // pred_fallthru
          _
        // Predicated region
        $region101: #{bit_mamsleep_forward.2} parent=83 // pred_check
          %p804 = pneg %p170
        $region102: #{bit_mamsleep_forward.2} parent=83 // pred_check_branch
          %806 = sbr.rel (%p804) target = $region104
        $region103: #{bit_mamsleep_forward.2} parent=83 // pred_region
          %807 = dma.done [#allocation17], 16
        $region104: #{bit_mamsleep_forward.2} parent=83 // pred_fallthru
          _
        %s808 = sand.u32 %s53, 1
        %s809 = scalar_lea.sflag [#allocation20], %s808
        %s810 = sand.u32 %s183, 1
        %s811 = smul.addr %s810, 32
        %s812 = scalar_lea.vmem [#allocation19], %s811
        // Predicated region
        $region105: #{bit_mamsleep_forward.2} parent=83 // pred_check
          %p813 = pneg %p196
        $region106: #{bit_mamsleep_forward.2} parent=83 // pred_check_branch
          %815 = sbr.rel (%p813) target = $region108
        $region107: #{bit_mamsleep_forward.2} parent=83 // pred_region
          %816 = dma.done %s809, 512
        $region108: #{bit_mamsleep_forward.2} parent=83 // pred_fallthru
          _
        %s817 = sand.u32 %s53, 1
        %s818 = scalar_lea.sflag [#allocation20], %s817
        %s819 = sand.u32 %s209, 1
        %s820 = scalar_lea.vmem [#allocation21], %s819
        // Predicated region
        $region109: #{bit_mamsleep_forward.2} parent=83 // pred_check
          %p821 = pneg %p222
        $region110: #{bit_mamsleep_forward.2} parent=83 // pred_check_branch
          %823 = sbr.rel (%p821) target = $region112
        $region111: #{bit_mamsleep_forward.2} parent=83 // pred_region
          %824 = dma.done %s818, 16
        $region112: #{bit_mamsleep_forward.2} parent=83 // pred_fallthru
          _
        %s825 = sand.u32 %s53, 1
        %s826 = scalar_lea.sflag [#allocation23], %s825
        %s827 = sand.u32 %s235, 1
        %s828 = smul.addr %s827, 32
        %s829 = scalar_lea.vmem [#allocation22], %s828
        // Predicated region
        $region113: #{bit_mamsleep_forward.2} parent=83 // pred_check
          %p830 = pneg %p248
        $region114: #{bit_mamsleep_forward.2} parent=83 // pred_check_branch
          %832 = sbr.rel (%p830) target = $region116
        $region115: #{bit_mamsleep_forward.2} parent=83 // pred_region
          %833 = dma.done %s826, 512
        $region116: #{bit_mamsleep_forward.2} parent=83 // pred_fallthru
          _
        %s834 = sand.u32 %s53, 1
        %s835 = scalar_lea.sflag [#allocation23], %s834
        %s836 = sand.u32 %s261, 1
        %s837 = smul.addr %s836, 4
        %s838 = scalar_lea.vmem [#allocation24], %s837
        // Predicated region
        $region117: #{bit_mamsleep_forward.2} parent=83 // pred_check
          %p839 = pneg %p274
        $region118: #{bit_mamsleep_forward.2} parent=83 // pred_check_branch
          %841 = sbr.rel (%p839) target = $region120
        $region119: #{bit_mamsleep_forward.2} parent=83 // pred_region
          %842 = dma.done %s835, 64
        $region120: #{bit_mamsleep_forward.2} parent=83 // pred_fallthru
          _
        %s843 = sand.u32 %s53, 1
        %s844 = scalar_lea.sflag [#allocation26], %s843
        %s845 = sand.u32 %s287, 1
        %s846 = scalar_lea.vmem [#allocation25], %s845
        // Predicated region
        $region121: #{bit_mamsleep_forward.2} parent=83 // pred_check
          %p847 = pneg %p300
        $region122: #{bit_mamsleep_forward.2} parent=83 // pred_check_branch
          %849 = sbr.rel (%p847) target = $region124
        $region123: #{bit_mamsleep_forward.2} parent=83 // pred_region
          %850 = dma.done %s844, 16
        $region124: #{bit_mamsleep_forward.2} parent=83 // pred_fallthru
          _
        %s851 = sand.u32 %s53, 1
        %s852 = scalar_lea.sflag [#allocation26], %s851
        %s853 = sand.u32 %s313, 1
        %s854 = smul.addr %s853, 64
        %s855 = scalar_lea.vmem [#allocation27], %s854
        // Predicated region
        $region125: #{bit_mamsleep_forward.2} parent=83 // pred_check
          %p856 = pneg %p326
        $region126: #{bit_mamsleep_forward.2} parent=83 // pred_check_branch
          %858 = sbr.rel (%p856) target = $region128
        $region127: #{bit_mamsleep_forward.2} parent=83 // pred_region
          %859 = dma.done %s852, 1024
        $region128: #{bit_mamsleep_forward.2} parent=83 // pred_fallthru
          _
        %s860 = sand.u32 %s53, 1
        %s861 = scalar_lea.sflag [#allocation29], %s860
        %s862 = sand.u32 %s339, 1
        %s863 = smul.addr %s862, 2
        %s864 = scalar_lea.vmem [#allocation28], %s863
        // Predicated region
        $region129: #{bit_mamsleep_forward.2} parent=83 // pred_check
          %p865 = pneg %p352
        $region130: #{bit_mamsleep_forward.2} parent=83 // pred_check_branch
          %867 = sbr.rel (%p865) target = $region132
        $region131: #{bit_mamsleep_forward.2} parent=83 // pred_region
          %868 = dma.done %s861, 32
        $region132: #{bit_mamsleep_forward.2} parent=83 // pred_fallthru
          _
        %s869 = sand.u32 %s53, 1
        %s870 = scalar_lea.sflag [#allocation29], %s869
        %s871 = sand.u32 %s365, 1
        %s872 = scalar_lea.vmem [#allocation30], %s871
        // Predicated region
        $region133: #{bit_mamsleep_forward.2} parent=83 // pred_check
          %p873 = pneg %p378
        $region134: #{bit_mamsleep_forward.2} parent=83 // pred_check_branch
          %875 = sbr.rel (%p873) target = $region136
        $region135: #{bit_mamsleep_forward.2} parent=83 // pred_region
          %876 = dma.done %s870, 16
        $region136: #{bit_mamsleep_forward.2} parent=83 // pred_fallthru
          _
        %s877 = sand.u32 %s53, 1
        %s878 = scalar_lea.sflag [#allocation32], %s877
        %s879 = sand.u32 %s391, 1
        %s880 = smul.addr %s879, 16
        %s881 = scalar_lea.vmem [#allocation31], %s880
        // Predicated region
        $region137: #{bit_mamsleep_forward.2} parent=83 // pred_check
          %p882 = pneg %p404
        $region138: #{bit_mamsleep_forward.2} parent=83 // pred_check_branch
          %884 = sbr.rel (%p882) target = $region140
        $region139: #{bit_mamsleep_forward.2} parent=83 // pred_region
          %885 = dma.done %s878, 256
        $region140: #{bit_mamsleep_forward.2} parent=83 // pred_fallthru
          _
        %s886 = sand.u32 %s53, 1
        %s887 = scalar_lea.sflag [#allocation32], %s886
        %s888 = sand.u32 %s417, 1
        %s889 = scalar_lea.vmem [#allocation33], %s888
        // Predicated region
        $region141: #{bit_mamsleep_forward.2} parent=83 // pred_check
          %p890 = pneg %p430
        $region142: #{bit_mamsleep_forward.2} parent=83 // pred_check_branch
          %892 = sbr.rel (%p890) target = $region144
        $region143: #{bit_mamsleep_forward.2} parent=83 // pred_region
          %893 = dma.done %s887, 16
        $region144: #{bit_mamsleep_forward.2} parent=83 // pred_fallthru
          _
        %s894 = sand.u32 %s443, 1
        %s895 = scalar_lea.sflag [#allocation35], %s894
        %s896 = sand.u32 %s443, 1
        %s897 = smul.addr %s896, 64
        %s898 = scalar_lea.vmem [#allocation34], %s897
        // Predicated region
        $region145: #{bit_mamsleep_forward.2} parent=83 // pred_check
          %p899 = pneg %p456
        $region146: #{bit_mamsleep_forward.2} parent=83 // pred_check_branch
          %901 = sbr.rel (%p899) target = $region148
        $region147: #{bit_mamsleep_forward.2} parent=83 // pred_region
          %902 = dma.done %s895, 1024
        $region148: #{bit_mamsleep_forward.2} parent=83 // pred_fallthru
          _
        %s903 = sand.u32 %s73, 1
        %s904 = scalar_lea.sflag [#allocation11], %s903
        %s905 = sand.u32 %s73, 1
        %s906 = smul.addr %s905, 8
        %s907 = scalar_lea.vmem [#allocation10], %s906
        %p908 = pneg %p86
        %p909 = pneg %p83
        %p910 = pneg %p107
        %p911 = pneg %p104
        %p912 = pneg %p128
        %p913 = pneg %p125
        %p914 = pneg %p149
        %p915 = pneg %p146
        %p916 = pneg %p170
        %p917 = pneg %p167
        %s918 = sand.u32 %s53, 1
        %s919 = scalar_lea.sflag [#allocation20], %s918
        %s920 = sand.u32 %s183, 1
        %s921 = smul.addr %s920, 32
        %s922 = scalar_lea.vmem [#allocation19], %s921
        %p923 = pneg %p196
        %p924 = pneg %p193
        %s925 = sand.u32 %s53, 1
        %s926 = scalar_lea.sflag [#allocation20], %s925
        %s927 = sand.u32 %s209, 1
        %s928 = scalar_lea.vmem [#allocation21], %s927
        %p929 = pneg %p222
        %p930 = pneg %p219
        %s931 = sand.u32 %s53, 1
        %s932 = scalar_lea.sflag [#allocation23], %s931
        %s933 = sand.u32 %s235, 1
        %s934 = smul.addr %s933, 32
        %s935 = scalar_lea.vmem [#allocation22], %s934
        %p936 = pneg %p248
        %p937 = pneg %p245
        %s938 = sand.u32 %s53, 1
        %s939 = scalar_lea.sflag [#allocation23], %s938
        %s940 = sand.u32 %s261, 1
        %s941 = smul.addr %s940, 4
        %s942 = scalar_lea.vmem [#allocation24], %s941
        %p943 = pneg %p274
        %p944 = pneg %p271
        %s945 = sand.u32 %s53, 1
        %s946 = scalar_lea.sflag [#allocation26], %s945
        %s947 = sand.u32 %s287, 1
        %s948 = scalar_lea.vmem [#allocation25], %s947
        %p949 = pneg %p300
        %p950 = pneg %p297
        %s951 = sand.u32 %s53, 1
        %s952 = scalar_lea.sflag [#allocation26], %s951
        %s953 = sand.u32 %s313, 1
        %s954 = smul.addr %s953, 64
        %s955 = scalar_lea.vmem [#allocation27], %s954
        %p956 = pneg %p326
        %p957 = pneg %p323
        %s958 = sand.u32 %s53, 1
        %s959 = scalar_lea.sflag [#allocation29], %s958
        %s960 = sand.u32 %s339, 1
        %s961 = smul.addr %s960, 2
        %s962 = scalar_lea.vmem [#allocation28], %s961
        %p963 = pneg %p352
        %p964 = pneg %p349
        %s965 = sand.u32 %s53, 1
        %s966 = scalar_lea.sflag [#allocation29], %s965
        %s967 = sand.u32 %s365, 1
        %s968 = scalar_lea.vmem [#allocation30], %s967
        %p969 = pneg %p378
        %p970 = pneg %p375
        %s971 = sand.u32 %s53, 1
        %s972 = scalar_lea.sflag [#allocation32], %s971
        %s973 = sand.u32 %s391, 1
        %s974 = smul.addr %s973, 16
        %s975 = scalar_lea.vmem [#allocation31], %s974
        %p976 = pneg %p404
        %p977 = pneg %p401
        %s978 = sand.u32 %s53, 1
        %s979 = scalar_lea.sflag [#allocation32], %s978
        %s980 = sand.u32 %s417, 1
        %s981 = scalar_lea.vmem [#allocation33], %s980
        %p982 = pneg %p430
        %p983 = pneg %p427
        %s984 = sand.u32 %s443, 1
        %s985 = scalar_lea.sflag [#allocation35], %s984
        %s986 = sand.u32 %s443, 1
        %s987 = smul.addr %s986, 64
        %s988 = scalar_lea.vmem [#allocation34], %s987
        %p989 = pneg %p456
        %p990 = pneg %p453
        %p991 = pneg %p484
        %p992 = pneg %p481
        %s993 = sand.u32 %s471, 1
        %s994 = scalar_lea.sflag [#allocation12], %s993
        %s995 = sand.u32 %s471, 1
        %s996 = smul.addr %s995, 8
        %s997 = scalar_lea.vmem [#allocation36], %s996
        %v998 = vld [vmem:[%s787] sm:$0xff]
        %v999 = vld [vmem:[#allocation13] sm:$0x1]
        %v1000 = vld [vmem:[#allocation15] sm:$0x1]
        %vm1001 = vcmask 261120
        %v1002 = vsel %vm1001, %v998, 0.0
        %1003 = vadd.xlane.f32.xlu0 %v1002
        %v1004 = vpop.xlane.xlu0 %1003
        %v1005 = vrcp.pop 32.0
        %v1006 = vmul.f32 %v1004, %v1005
        %v1007 = vsub.f32 %v998, %v1006
        %v1008 = vmul.f32 %v1007, %v1007
        %v1009 = vsel %vm1001, %v1008, 0.0
        %1010 = vadd.xlane.f32.xlu0 %v1009
        %v1011 = vpop.xlane.xlu0 %1010
        %v1012 = vmul.f32 %v1011, %v1005
        %v1013 = vadd.f32 %v1012, 1e-05
        %v1014 = vrsqrt.pop %v1013
        %v1015 = vmul.f32 %v1007, %v1014
        %v1017 = vlaneseq
        %v1018 = vshrl.u32 %v1017, 7
        %v1019 = vsub.s32 0, %v1018
        %v1020 = vrot.slane %v999, %v1019
        %v1022 = vmul.f32 %v1015, %v1020
        %v1024 = vlaneseq
        %v1025 = vshrl.u32 %v1024, 7
        %v1026 = vsub.s32 0, %v1025
        %v1027 = vrot.slane %v1000, %v1026
        %v1029 = vadd.f32 %v1022, %v1027
        %v1030 = vld [vmem:[#allocation16] sm:$0xff]
        %v1031 = vld [vmem:[#allocation16 + $0x8] sm:$0xff]
        %v1032 = vld [vmem:[#allocation16 + $0x10] sm:$0xff]
        %v1033 = vld [vmem:[#allocation16 + $0x18] sm:$0xff]
        %v1034 = vld [vmem:[#allocation18] sm:$0x1]
        %v1036 = vlaneseq
        %v1037 = vshrl.u32 %v1036, 7
        %v1038 = vsub.s32 0, %v1037
        %v1039 = vrot.slane %v1034, %v1038
        %v1042 = vsel %vm1001, %v1029, 0
        %1044 = vmatprep.subr.mxu0 0.0
        %1045 = vmatpush1.msra.mxu0 %v1030
        %1046 = vmatprep.subr.mxu0 0.0
        %1047 = vmatpush1.msra.mxu0 %v1031
        %1048 = vmatprep.subr.mxu0 0.0
        %1049 = vmatpush1.msra.mxu0 %v1032
        %1050 = vmatprep.subr.mxu0 0.0
        %1051 = vmatpush1.msra.mxu0 %v1033
        %1052 = vmatprep.subr.mxu0 0.0
        %1053 = vmatpush1.msra.mxu0 0.0
        %1054 = vmatprep.subr.mxu0 0.0
        %1055 = vmatpush1.msra.mxu0 0.0
        %1056 = vmatprep.subr.mxu0 0.0
        %1057 = vmatpush1.msra.mxu0 0.0
        %1058 = vmatprep.subr.mxu0 0.0
        %1059 = vmatpush1.msra.mxu0 0.0
        %1060 = vmatprep.subr.mxu0 0.0
        %1061 = vmatpush1.msra.mxu0 0.0
        %1062 = vmatprep.subr.mxu0 0.0
        %1063 = vmatpush1.msra.mxu0 0.0
        %1064 = vmatprep.subr.mxu0 0.0
        %1065 = vmatpush1.msra.mxu0 0.0
        %1066 = vmatprep.subr.mxu0 0.0
        %1067 = vmatpush1.msra.mxu0 0.0
        %1068 = vmatprep.subr.mxu0 0.0
        %1069 = vmatpush1.msra.mxu0 0.0
        %1070 = vmatprep.subr.mxu0 0.0
        %1071 = vmatpush1.msra.mxu0 0.0
        %1072 = vmatprep.subr.mxu0 0.0
        %1073 = vmatpush1.msra.mxu0 0.0
        %1074 = vmatprep.subr.mxu0 0.0
        %1075 = vmatpush1.msra.mxu0 0.0
        %1076 = vmatprep.subr.mxu0 0.0
        %1077 = vmatpush1.msra.mxu0 0.0
        %1078 = vmatprep.subr.mxu0 0.0
        %1079 = vmatpush1.msra.mxu0 0.0
        %1080 = vmatprep.subr.mxu0 0.0
        %1081 = vmatpush1.msra.mxu0 0.0
        %1082 = vmatprep.subr.mxu0 0.0
        %1083 = vmatpush1.msra.mxu0 0.0
        %1084 = vmatprep.subr.mxu0 0.0
        %1085 = vmatpush1.msra.mxu0 0.0
        %1086 = vmatprep.subr.mxu0 0.0
        %1087 = vmatpush1.msra.mxu0 0.0
        %1088 = vmatprep.subr.mxu0 0.0
        %1089 = vmatpush1.msra.mxu0 0.0
        %1090 = vmatprep.subr.mxu0 0.0
        %1091 = vmatpush1.msra.mxu0 0.0
        %1092 = vmatprep.subr.mxu0 0.0
        %1093 = vmatpush1.msra.mxu0 0.0
        %1094 = vmatprep.subr.mxu0 0.0
        %1095 = vmatpush1.msra.mxu0 0.0
        %1096 = vmatprep.subr.mxu0 0.0
        %1097 = vmatpush1.msra.mxu0 0.0
        %1098 = vmatprep.subr.mxu0 0.0
        %1099 = vmatpush1.msra.mxu0 0.0
        %1100 = vmatprep.subr.mxu0 0.0
        %1101 = vmatpush1.msra.mxu0 0.0
        %1102 = vmatprep.subr.mxu0 0.0
        %1103 = vmatpush1.msra.mxu0 0.0
        %1104 = vmatprep.subr.mxu0 0.0
        %1105 = vmatpush1.msra.mxu0 0.0
        %1106 = vmatprep.subr.mxu0 0.0
        %1107 = vmatpush1.msra.mxu0 0.0
        %1108 = vmatprep.mubr.f32.mxu0 0.0
        %1109 = vmatmul.mubr.f32.gmra.mrb[0].mxu0 %v1042
        %v1110 = vpop.f32.mrb[0].mxu0
        %v1111 = vadd.f32 %v1039, %v1110
        %v1112 = vpop.f32.mrb[0].mxu0
        %1113 = vdwg.mxu0
        %v1114 = vld [vmem:[%s812] sm:$0xff]
        %v1115 = vld [vmem:[%s812 + $0x8] sm:$0xff]
        %v1116 = vld [vmem:[%s812 + $0x10] sm:$0xff]
        %v1117 = vld [vmem:[%s812 + $0x18] sm:$0xff]
        %v1118 = vld [vmem:[%s820] sm:$0x1]
        %v1120 = vlaneseq
        %v1121 = vshrl.u32 %v1120, 7
        %v1122 = vsub.s32 0, %v1121
        %v1123 = vrot.slane %v1118, %v1122
        %v1126 = vsel %vm1001, %v1111, 0
        %1128 = vmatprep.subr.mxu0 0.0
        %1129 = vmatpush1.msra.mxu0 %v1114
        %1130 = vmatprep.subr.mxu0 0.0
        %1131 = vmatpush1.msra.mxu0 %v1115
        %1132 = vmatprep.subr.mxu0 0.0
        %1133 = vmatpush1.msra.mxu0 %v1116
        %1134 = vmatprep.subr.mxu0 0.0
        %1135 = vmatpush1.msra.mxu0 %v1117
        %1136 = vmatprep.subr.mxu0 0.0
        %1137 = vmatpush1.msra.mxu0 0.0
        %1138 = vmatprep.subr.mxu0 0.0
        %1139 = vmatpush1.msra.mxu0 0.0
        %1140 = vmatprep.subr.mxu0 0.0
        %1141 = vmatpush1.msra.mxu0 0.0
        %1142 = vmatprep.subr.mxu0 0.0
        %1143 = vmatpush1.msra.mxu0 0.0
        %1144 = vmatprep.subr.mxu0 0.0
        %1145 = vmatpush1.msra.mxu0 0.0
        %1146 = vmatprep.subr.mxu0 0.0
        %1147 = vmatpush1.msra.mxu0 0.0
        %1148 = vmatprep.subr.mxu0 0.0
        %1149 = vmatpush1.msra.mxu0 0.0
        %1150 = vmatprep.subr.mxu0 0.0
        %1151 = vmatpush1.msra.mxu0 0.0
        %1152 = vmatprep.subr.mxu0 0.0
        %1153 = vmatpush1.msra.mxu0 0.0
        %1154 = vmatprep.subr.mxu0 0.0
        %1155 = vmatpush1.msra.mxu0 0.0
        %1156 = vmatprep.subr.mxu0 0.0
        %1157 = vmatpush1.msra.mxu0 0.0
        %1158 = vmatprep.subr.mxu0 0.0
        %1159 = vmatpush1.msra.mxu0 0.0
        %1160 = vmatprep.subr.mxu0 0.0
        %1161 = vmatpush1.msra.mxu0 0.0
        %1162 = vmatprep.subr.mxu0 0.0
        %1163 = vmatpush1.msra.mxu0 0.0
        %1164 = vmatprep.subr.mxu0 0.0
        %1165 = vmatpush1.msra.mxu0 0.0
        %1166 = vmatprep.subr.mxu0 0.0
        %1167 = vmatpush1.msra.mxu0 0.0
        %1168 = vmatprep.subr.mxu0 0.0
        %1169 = vmatpush1.msra.mxu0 0.0
        %1170 = vmatprep.subr.mxu0 0.0
        %1171 = vmatpush1.msra.mxu0 0.0
        %1172 = vmatprep.subr.mxu0 0.0
        %1173 = vmatpush1.msra.mxu0 0.0
        %1174 = vmatprep.subr.mxu0 0.0
        %1175 = vmatpush1.msra.mxu0 0.0
        %1176 = vmatprep.subr.mxu0 0.0
        %1177 = vmatpush1.msra.mxu0 0.0
        %1178 = vmatprep.subr.mxu0 0.0
        %1179 = vmatpush1.msra.mxu0 0.0
        %1180 = vmatprep.subr.mxu0 0.0
        %1181 = vmatpush1.msra.mxu0 0.0
        %1182 = vmatprep.subr.mxu0 0.0
        %1183 = vmatpush1.msra.mxu0 0.0
        %1184 = vmatprep.subr.mxu0 0.0
        %1185 = vmatpush1.msra.mxu0 0.0
        %1186 = vmatprep.subr.mxu0 0.0
        %1187 = vmatpush1.msra.mxu0 0.0
        %1188 = vmatprep.subr.mxu0 0.0
        %1189 = vmatpush1.msra.mxu0 0.0
        %1190 = vmatprep.subr.mxu0 0.0
        %1191 = vmatpush1.msra.mxu0 0.0
        %1192 = vmatprep.mubr.f32.mxu0 0.0
        %1193 = vmatmul.mubr.f32.gmra.mrb[0].mxu0 %v1126
        %v1194 = vpop.f32.mrb[0].mxu0
        %v1195 = vadd.f32 %v1123, %v1194
        %v1196 = vpop.f32.mrb[0].mxu0
        %1197 = vdwg.mxu0
        %v1198 = vxor.u32 %v1195, 2147483648
        %v1199 = vmul.f32 %v1198, 1.442695
        %v1200 = vpow.pop %v1199
        %v1201 = vadd.f32 %v1200, 1.0
        %v1202 = vrcp.pop %v1201
        %v1203 = vmul.f32 1.0, %v1202
        %v1204 = vmul.f32 %v1195, %v1203
        %v1205 = vld [vmem:[%s829] sm:$0xff]
        %v1206 = vld [vmem:[%s829 + $0x8] sm:$0xff]
        %v1207 = vld [vmem:[%s829 + $0x10] sm:$0xff]
        %v1208 = vld [vmem:[%s829 + $0x18] sm:$0xff]
        %v1210 = vsel %vm1001, %v1204, 0
        %1212 = vmatprep.subr.mxu0 0.0
        %1213 = vmatpush1.msra.mxu0 %v1205
        %1214 = vmatprep.subr.mxu0 0.0
        %1215 = vmatpush1.msra.mxu0 %v1206
        %1216 = vmatprep.subr.mxu0 0.0
        %1217 = vmatpush1.msra.mxu0 %v1207
        %1218 = vmatprep.subr.mxu0 0.0
        %1219 = vmatpush1.msra.mxu0 %v1208
        %1220 = vmatprep.subr.mxu0 0.0
        %1221 = vmatpush1.msra.mxu0 0.0
        %1222 = vmatprep.subr.mxu0 0.0
        %1223 = vmatpush1.msra.mxu0 0.0
        %1224 = vmatprep.subr.mxu0 0.0
        %1225 = vmatpush1.msra.mxu0 0.0
        %1226 = vmatprep.subr.mxu0 0.0
        %1227 = vmatpush1.msra.mxu0 0.0
        %1228 = vmatprep.subr.mxu0 0.0
        %1229 = vmatpush1.msra.mxu0 0.0
        %1230 = vmatprep.subr.mxu0 0.0
        %1231 = vmatpush1.msra.mxu0 0.0
        %1232 = vmatprep.subr.mxu0 0.0
        %1233 = vmatpush1.msra.mxu0 0.0
        %1234 = vmatprep.subr.mxu0 0.0
        %1235 = vmatpush1.msra.mxu0 0.0
        %1236 = vmatprep.subr.mxu0 0.0
        %1237 = vmatpush1.msra.mxu0 0.0
        %1238 = vmatprep.subr.mxu0 0.0
        %1239 = vmatpush1.msra.mxu0 0.0
        %1240 = vmatprep.subr.mxu0 0.0
        %1241 = vmatpush1.msra.mxu0 0.0
        %1242 = vmatprep.subr.mxu0 0.0
        %1243 = vmatpush1.msra.mxu0 0.0
        %1244 = vmatprep.subr.mxu0 0.0
        %1245 = vmatpush1.msra.mxu0 0.0
        %1246 = vmatprep.subr.mxu0 0.0
        %1247 = vmatpush1.msra.mxu0 0.0
        %1248 = vmatprep.subr.mxu0 0.0
        %1249 = vmatpush1.msra.mxu0 0.0
        %1250 = vmatprep.subr.mxu0 0.0
        %1251 = vmatpush1.msra.mxu0 0.0
        %1252 = vmatprep.subr.mxu0 0.0
        %1253 = vmatpush1.msra.mxu0 0.0
        %1254 = vmatprep.subr.mxu0 0.0
        %1255 = vmatpush1.msra.mxu0 0.0
        %1256 = vmatprep.subr.mxu0 0.0
        %1257 = vmatpush1.msra.mxu0 0.0
        %1258 = vmatprep.subr.mxu0 0.0
        %1259 = vmatpush1.msra.mxu0 0.0
        %1260 = vmatprep.subr.mxu0 0.0
        %1261 = vmatpush1.msra.mxu0 0.0
        %1262 = vmatprep.subr.mxu0 0.0
        %1263 = vmatpush1.msra.mxu0 0.0
        %1264 = vmatprep.subr.mxu0 0.0
        %1265 = vmatpush1.msra.mxu0 0.0
        %1266 = vmatprep.subr.mxu0 0.0
        %1267 = vmatpush1.msra.mxu0 0.0
        %1268 = vmatprep.subr.mxu0 0.0
        %1269 = vmatpush1.msra.mxu0 0.0
        %1270 = vmatprep.subr.mxu0 0.0
        %1271 = vmatpush1.msra.mxu0 0.0
        %1272 = vmatprep.subr.mxu0 0.0
        %1273 = vmatpush1.msra.mxu0 0.0
        %1274 = vmatprep.subr.mxu0 0.0
        %1275 = vmatpush1.msra.mxu0 0.0
        %1276 = vmatprep.mubr.f32.mxu0 0.0
        %1277 = vmatmul.mubr.f32.gmra.mrb[0].mxu0 %v1210
        %v1278 = vpop.f32.mrb[0].mxu0
        %v1279 = vadd.f32 0.0, %v1278
        %v1280 = vpop.f32.mrb[0].mxu0
        %1281 = vdwg.mxu0
        %v1282 = vxor.u32 %v1279, 2147483648
        %v1283 = vmul.f32 %v1282, 1.442695
        %v1284 = vpow.pop %v1283
        %v1285 = vadd.f32 %v1284, 1.0
        %v1286 = vrcp.pop %v1285
        %v1287 = vmul.f32 1.0, %v1286
        %v1288 = vmul.f32 %v1279, %v1287
        %1290 = vrot.lane.b32.xlu0 %v1288, 64
        %v1291 = vpop.permute.xlu0 %1290
        %vm1293 = vcmask 523264
        %1294 = vst.msk [vmem:[#allocation6] sm:$0xff] %vm1293, %v1291
        %vm1295 = vcmask 518144
        %1296 = vst.msk [vmem:[#allocation2] sm:$0x7] %vm1295, 0.0
        %1297 = vst.msk [vmem:[#allocation2 + $0x3] sm:$0xff] %vm1293, %v1279
        %v1298 = vld [vmem:[%s838 + $0x3] sm:$0x1]
        %v1299 = vlaneseq
        %v1300 = vshrl.u32 %v1299, 7
        %v1301 = vsub.s32 0, %v1300
        %v1302 = vrot.slane %v1298, %v1301
        %v1303 = vmul.f32 %v1279, %v1302
        %v1304 = vld [vmem:[#allocation2] sm:$0xff]
        %v1305 = vld [vmem:[%s838] sm:$0x1]
        %v1306 = vlaneseq
        %v1307 = vshrl.u32 %v1306, 7
        %v1308 = vsub.s32 0, %v1307
        %v1309 = vrot.slane %v1305, %v1308
        %v1310 = vmul.f32 %v1304, %v1309
        %v1311 = vadd.f32 %v1303, %v1310
        %v1312 = vld [vmem:[#allocation2 + $0x1] sm:$0xff]
        %v1313 = vld [vmem:[%s838 + $0x1] sm:$0x1]
        %v1314 = vlaneseq
        %v1315 = vshrl.u32 %v1314, 7
        %v1316 = vsub.s32 0, %v1315
        %v1317 = vrot.slane %v1313, %v1316
        %v1318 = vmul.f32 %v1312, %v1317
        %v1319 = vadd.f32 %v1311, %v1318
        %v1320 = vld [vmem:[#allocation2 + $0x2] sm:$0xff]
        %v1321 = vld [vmem:[%s838 + $0x2] sm:$0x1]
        %v1322 = vlaneseq
        %v1323 = vshrl.u32 %v1322, 7
        %v1324 = vsub.s32 0, %v1323
        %v1325 = vrot.slane %v1321, %v1324
        %v1326 = vmul.f32 %v1320, %v1325
        %v1327 = vadd.f32 %v1319, %v1326
        %v1328 = vld [vmem:[%s846] sm:$0x1]
        %v1330 = vlaneseq
        %v1331 = vshrl.u32 %v1330, 7
        %v1332 = vsub.s32 0, %v1331
        %v1333 = vrot.slane %v1328, %v1332
        %v1335 = vadd.f32 %v1327, %v1333
        %v1336 = vxor.u32 %v1335, 2147483648
        %v1337 = vmul.f32 %v1336, 1.442695
        %v1338 = vpow.pop %v1337
        %v1339 = vadd.f32 %v1338, 1.0
        %v1340 = vrcp.pop %v1339
        %v1341 = vmul.f32 1.0, %v1340
        %v1342 = vmul.f32 %v1335, %v1341
        %1343 = vst.msk [vmem:[#allocation3] sm:$0xff] %vm1293, %v1342
        %v1344 = vld [vmem:[%s855] sm:$0xff]
        %v1345 = vld [vmem:[%s855 + $0x8] sm:$0xff]
        %v1346 = vld [vmem:[%s855 + $0x10] sm:$0xff]
        %v1347 = vld [vmem:[%s855 + $0x18] sm:$0xff]
        %v1348 = vld [vmem:[%s855 + $0x20] sm:$0xff]
        %v1349 = vld [vmem:[%s855 + $0x28] sm:$0xff]
        %v1350 = vld [vmem:[%s855 + $0x30] sm:$0xff]
        %v1351 = vld [vmem:[%s855 + $0x38] sm:$0xff]
        %v1353 = vsel %vm1293, %v1342, 0
        %1355 = vmatprep.subr.mxu0 0.0
        %1356 = vmatpush1.msra.mxu0 %v1344
        %1357 = vmatprep.subr.mxu0 0.0
        %1358 = vmatpush1.msra.mxu0 %v1345
        %1359 = vmatprep.subr.mxu0 0.0
        %1360 = vmatpush1.msra.mxu0 %v1346
        %1361 = vmatprep.subr.mxu0 0.0
        %1362 = vmatpush1.msra.mxu0 %v1347
        %1363 = vmatprep.subr.mxu0 0.0
        %1364 = vmatpush1.msra.mxu0 %v1348
        %1365 = vmatprep.subr.mxu0 0.0
        %1366 = vmatpush1.msra.mxu0 %v1349
        %1367 = vmatprep.subr.mxu0 0.0
        %1368 = vmatpush1.msra.mxu0 %v1350
        %1369 = vmatprep.subr.mxu0 0.0
        %1370 = vmatpush1.msra.mxu0 %v1351
        %1371 = vmatprep.subr.mxu0 0.0
        %1372 = vmatpush1.msra.mxu0 0.0
        %1373 = vmatprep.subr.mxu0 0.0
        %1374 = vmatpush1.msra.mxu0 0.0
        %1375 = vmatprep.subr.mxu0 0.0
        %1376 = vmatpush1.msra.mxu0 0.0
        %1377 = vmatprep.subr.mxu0 0.0
        %1378 = vmatpush1.msra.mxu0 0.0
        %1379 = vmatprep.subr.mxu0 0.0
        %1380 = vmatpush1.msra.mxu0 0.0
        %1381 = vmatprep.subr.mxu0 0.0
        %1382 = vmatpush1.msra.mxu0 0.0
        %1383 = vmatprep.subr.mxu0 0.0
        %1384 = vmatpush1.msra.mxu0 0.0
        %1385 = vmatprep.subr.mxu0 0.0
        %1386 = vmatpush1.msra.mxu0 0.0
        %1387 = vmatprep.subr.mxu0 0.0
        %1388 = vmatpush1.msra.mxu0 0.0
        %1389 = vmatprep.subr.mxu0 0.0
        %1390 = vmatpush1.msra.mxu0 0.0
        %1391 = vmatprep.subr.mxu0 0.0
        %1392 = vmatpush1.msra.mxu0 0.0
        %1393 = vmatprep.subr.mxu0 0.0
        %1394 = vmatpush1.msra.mxu0 0.0
        %1395 = vmatprep.subr.mxu0 0.0
        %1396 = vmatpush1.msra.mxu0 0.0
        %1397 = vmatprep.subr.mxu0 0.0
        %1398 = vmatpush1.msra.mxu0 0.0
        %1399 = vmatprep.subr.mxu0 0.0
        %1400 = vmatpush1.msra.mxu0 0.0
        %1401 = vmatprep.subr.mxu0 0.0
        %1402 = vmatpush1.msra.mxu0 0.0
        %1403 = vmatprep.subr.mxu0 0.0
        %1404 = vmatpush1.msra.mxu0 0.0
        %1405 = vmatprep.subr.mxu0 0.0
        %1406 = vmatpush1.msra.mxu0 0.0
        %1407 = vmatprep.subr.mxu0 0.0
        %1408 = vmatpush1.msra.mxu0 0.0
        %1409 = vmatprep.subr.mxu0 0.0
        %1410 = vmatpush1.msra.mxu0 0.0
        %1411 = vmatprep.subr.mxu0 0.0
        %1412 = vmatpush1.msra.mxu0 0.0
        %1413 = vmatprep.subr.mxu0 0.0
        %1414 = vmatpush1.msra.mxu0 0.0
        %1415 = vmatprep.subr.mxu0 0.0
        %1416 = vmatpush1.msra.mxu0 0.0
        %1417 = vmatprep.subr.mxu0 0.0
        %1418 = vmatpush1.msra.mxu0 0.0
        %1419 = vmatprep.mubr.f32.mxu0 0.0
        %1420 = vmatmul.mubr.f32.gmra.mrb[0].mxu0 %v1353
        %v1421 = vpop.f32.mrb[0].mxu0
        %v1422 = vadd.f32 0.0, %v1421
        %v1423 = vpop.f32.mrb[0].mxu0
        %1424 = vdwg.mxu0
        %1426 = vrot.lane.b32.xlu0 %v1422, 126
        %v1427 = vpop.permute.xlu0 %1426
        %1429 = vst.msk [vmem:[#allocation5] sm:$0xff] %vm1001, %v1427
        %v1430 = vld [vmem:[%s864] sm:$0x3]
        %v1431 = vld [vmem:[%s872] sm:$0x1]
        %v1433 = vlaneseq
        %v1434 = vshrl.u32 %v1433, 7
        %v1435 = vsub.s32 0, %v1434
        %v1436 = vrot.slane %v1431, %v1435
        %vm1438 = vcmask 15360
        %v1439 = vsel %vm1438, %v1422, 0
        %vm1441 = vcmask 1041408
        %v1443 = vsel %vm1441, %v1430, 0
        %1445 = vmatprep.subr.mxu0 0.0
        %1446 = vmatpush1.msra.mxu0 %v1443
        %1447 = vmatprep.subr.mxu0 0.0
        %1448 = vmatpush1.msra.mxu0 0.0
        %1449 = vmatprep.subr.mxu0 0.0
        %1450 = vmatpush1.msra.mxu0 0.0
        %1451 = vmatprep.subr.mxu0 0.0
        %1452 = vmatpush1.msra.mxu0 0.0
        %1453 = vmatprep.subr.mxu0 0.0
        %1454 = vmatpush1.msra.mxu0 0.0
        %1455 = vmatprep.subr.mxu0 0.0
        %1456 = vmatpush1.msra.mxu0 0.0
        %1457 = vmatprep.subr.mxu0 0.0
        %1458 = vmatpush1.msra.mxu0 0.0
        %1459 = vmatprep.subr.mxu0 0.0
        %1460 = vmatpush1.msra.mxu0 0.0
        %1461 = vmatprep.subr.mxu0 0.0
        %1462 = vmatpush1.msra.mxu0 0.0
        %1463 = vmatprep.subr.mxu0 0.0
        %1464 = vmatpush1.msra.mxu0 0.0
        %1465 = vmatprep.subr.mxu0 0.0
        %1466 = vmatpush1.msra.mxu0 0.0
        %1467 = vmatprep.subr.mxu0 0.0
        %1468 = vmatpush1.msra.mxu0 0.0
        %1469 = vmatprep.subr.mxu0 0.0
        %1470 = vmatpush1.msra.mxu0 0.0
        %1471 = vmatprep.subr.mxu0 0.0
        %1472 = vmatpush1.msra.mxu0 0.0
        %1473 = vmatprep.subr.mxu0 0.0
        %1474 = vmatpush1.msra.mxu0 0.0
        %1475 = vmatprep.subr.mxu0 0.0
        %1476 = vmatpush1.msra.mxu0 0.0
        %1477 = vmatprep.subr.mxu0 0.0
        %1478 = vmatpush1.msra.mxu0 0.0
        %1479 = vmatprep.subr.mxu0 0.0
        %1480 = vmatpush1.msra.mxu0 0.0
        %1481 = vmatprep.subr.mxu0 0.0
        %1482 = vmatpush1.msra.mxu0 0.0
        %1483 = vmatprep.subr.mxu0 0.0
        %1484 = vmatpush1.msra.mxu0 0.0
        %1485 = vmatprep.subr.mxu0 0.0
        %1486 = vmatpush1.msra.mxu0 0.0
        %1487 = vmatprep.subr.mxu0 0.0
        %1488 = vmatpush1.msra.mxu0 0.0
        %1489 = vmatprep.subr.mxu0 0.0
        %1490 = vmatpush1.msra.mxu0 0.0
        %1491 = vmatprep.subr.mxu0 0.0
        %1492 = vmatpush1.msra.mxu0 0.0
        %1493 = vmatprep.subr.mxu0 0.0
        %1494 = vmatpush1.msra.mxu0 0.0
        %1495 = vmatprep.subr.mxu0 0.0
        %1496 = vmatpush1.msra.mxu0 0.0
        %1497 = vmatprep.subr.mxu0 0.0
        %1498 = vmatpush1.msra.mxu0 0.0
        %1499 = vmatprep.subr.mxu0 0.0
        %1500 = vmatpush1.msra.mxu0 0.0
        %1501 = vmatprep.subr.mxu0 0.0
        %1502 = vmatpush1.msra.mxu0 0.0
        %1503 = vmatprep.subr.mxu0 0.0
        %1504 = vmatpush1.msra.mxu0 0.0
        %1505 = vmatprep.subr.mxu0 0.0
        %1506 = vmatpush1.msra.mxu0 0.0
        %1507 = vmatprep.subr.mxu0 0.0
        %1508 = vmatpush1.msra.mxu0 0.0
        %1509 = vmatprep.mubr.f32.mxu0 0.0
        %1510 = vmatmul.mubr.f32.gmra.mrb[0].mxu0 %v1439
        %v1511 = vpop.f32.mrb[0].mxu0
        %v1512 = vadd.f32 %v1436, %v1511
        %v1513 = vpop.f32.mrb[0].mxu0
        %1514 = vdwg.mxu0
        %v1515 = vmax.f32 %v1512, 0.0
        %vm1516 = vcmp.ne.f32.partialorder %v1512, %v1512
        %v1517 = vadd.f32 %v1512, 0.0
        %v1518 = vand.u32 2147483647, %v1512
        %v1519 = vsub.f32 0.0, %v1518
        %v1520 = vmul.f32 %v1519, 1.442695
        %v1521 = vpow.pop %v1520
        %v1522 = vadd.f32 %v1521, 1.0
        %v1523 = vlog2.pop %v1522
        %v1524 = vmul.f32 %v1523, 0.6931472
        %v1525 = vmul.f32 -0.5, %v1521
        %v1526 = vadd.f32 %v1525, 1.0
        %v1527 = vmul.f32 %v1526, %v1521
        %v1528 = vand.u32 2147483647, %v1521
        %vm1529 = vcmp.lt.f32.partialorder %v1528, 0.0004427343
        %v1530 = vsel %vm1529, %v1527, %v1524
        %v1531 = vadd.f32 %v1515, %v1530
        %v1532 = vsel %vm1516, %v1517, %v1531
        %1533 = vst.msk [vmem:[#allocation4] sm:$0xff] %vm1293, %v1532
        %v1534 = vld [vmem:[%s881] sm:$0xff]
        %v1535 = vld [vmem:[%s881 + $0x8] sm:$0xff]
        %v1536 = vmul.f32 %v1534, 1.442695
        %v1537 = vpow.pop %v1536
        %v1538 = vmul.f32 %v1535, 1.442695
        %v1539 = vpow.pop %v1538
        %v1540 = vsub.f32 0.0, %v1537
        %v1541 = vsub.f32 0.0, %v1539
        %v1542 = vld [vmem:[#allocation4] sm:$0xff]
        %v1543 = vld [vmem:[#allocation3] sm:$0xff]
        %v1544 = vld [vmem:[#allocation5] sm:$0xff]
        %v1545 = vmul.f32 %v1542, %v1543
        %1547 = vset.pattern.permute.xlu0 0
        %1548 = vperm.xlu0 %1547, %v1544
        %v1549 = vpop.permute.xlu0 %1548
        %v1551 = vmul.f32 %v1549, %v1545
        %v1553 = vcombine.high %v1551, %v1551
        %v1555 = vunpack.c.l.s4 1966171168
        %v1556 = vunpack.c.0.s8 %v1555
        %v1557 = vlaneseq
        %v1558 = vshrl.u32 %v1557, 7
        %v1559 = vsub.s32 %v1556, %v1558
        %v1560 = vrot.slane %v1551, %v1559
        %v1562 = vunpack.c.l.s4 1966171168
        %v1563 = vunpack.c.0.s8 %v1562
        %v1564 = vlaneseq
        %v1565 = vshrl.u32 %v1564, 7
        %v1566 = vsub.s32 %v1563, %v1565
        %v1567 = vrot.slane %v1553, %v1566
        %v1568 = vcombine.high %v1560, %v1560
        %v1569 = vcombine.high %v1567, %v1567
        %v1571 = vunpack.c.l.s4 1966171168
        %v1572 = vunpack.c.0.s8 %v1571
        %v1573 = vlaneseq
        %v1574 = vshrl.u32 %v1573, 7
        %v1575 = vsub.s32 %v1572, %v1574
        %v1576 = vrot.slane %v1560, %v1575
        %v1578 = vunpack.c.l.s4 1966171168
        %v1579 = vunpack.c.0.s8 %v1578
        %v1580 = vlaneseq
        %v1581 = vshrl.u32 %v1580, 7
        %v1582 = vsub.s32 %v1579, %v1581
        %v1583 = vrot.slane %v1567, %v1582
        %v1585 = vunpack.c.l.s4 1966171168
        %v1586 = vunpack.c.0.s8 %v1585
        %v1587 = vlaneseq
        %v1588 = vshrl.u32 %v1587, 7
        %v1589 = vsub.s32 %v1586, %v1588
        %v1590 = vrot.slane %v1568, %v1589
        %v1592 = vunpack.c.l.s4 1966171168
        %v1593 = vunpack.c.0.s8 %v1592
        %v1594 = vlaneseq
        %v1595 = vshrl.u32 %v1594, 7
        %v1596 = vsub.s32 %v1593, %v1595
        %v1597 = vrot.slane %v1569, %v1596
        %v1598 = vcombine.high %v1576, %v1576
        %v1599 = vcombine.high %v1583, %v1583
        %v1600 = vcombine.high %v1590, %v1590
        %v1601 = vcombine.high %v1597, %v1597
        %vm1610 = vcmask 516096
        %1611 = vst.msk [vmem:[#allocation8] sm:$0x1] %vm1610, %v1576
        %1612 = vst.msk [vmem:[#allocation8 + $0x10] sm:$0x1] %vm1610, %v1590
        %1613 = vst.msk [vmem:[#allocation8 + $0x20] sm:$0x1] %vm1610, %v1598
        %1614 = vst.msk [vmem:[#allocation8 + $0x30] sm:$0x1] %vm1610, %v1600
        %1615 = vst.msk [vmem:[#allocation8 + $0x40] sm:$0x1] %vm1610, %v1583
        %1616 = vst.msk [vmem:[#allocation8 + $0x50] sm:$0x1] %vm1610, %v1597
        %1617 = vst.msk [vmem:[#allocation8 + $0x60] sm:$0x1] %vm1610, %v1599
        %1618 = vst.msk [vmem:[#allocation8 + $0x70] sm:$0x1] %vm1610, %v1601
        %1619 = vset.pattern.permute.xlu0 1
        %1620 = vperm.xlu0 %1619, %v1544
        %v1621 = vpop.permute.xlu0 %1620
        %v1623 = vmul.f32 %v1621, %v1545
        %v1625 = vcombine.high %v1623, %v1623
        %v1627 = vunpack.c.l.s4 1966171168
        %v1628 = vunpack.c.0.s8 %v1627
        %v1629 = vlaneseq
        %v1630 = vshrl.u32 %v1629, 7
        %v1631 = vsub.s32 %v1628, %v1630
        %v1632 = vrot.slane %v1623, %v1631
        %v1634 = vunpack.c.l.s4 1966171168
        %v1635 = vunpack.c.0.s8 %v1634
        %v1636 = vlaneseq
        %v1637 = vshrl.u32 %v1636, 7
        %v1638 = vsub.s32 %v1635, %v1637
        %v1639 = vrot.slane %v1625, %v1638
        %v1640 = vcombine.high %v1632, %v1632
        %v1641 = vcombine.high %v1639, %v1639
        %v1643 = vunpack.c.l.s4 1966171168
        %v1644 = vunpack.c.0.s8 %v1643
        %v1645 = vlaneseq
        %v1646 = vshrl.u32 %v1645, 7
        %v1647 = vsub.s32 %v1644, %v1646
        %v1648 = vrot.slane %v1632, %v1647
        %v1650 = vunpack.c.l.s4 1966171168
        %v1651 = vunpack.c.0.s8 %v1650
        %v1652 = vlaneseq
        %v1653 = vshrl.u32 %v1652, 7
        %v1654 = vsub.s32 %v1651, %v1653
        %v1655 = vrot.slane %v1639, %v1654
        %v1657 = vunpack.c.l.s4 1966171168
        %v1658 = vunpack.c.0.s8 %v1657
        %v1659 = vlaneseq
        %v1660 = vshrl.u32 %v1659, 7
        %v1661 = vsub.s32 %v1658, %v1660
        %v1662 = vrot.slane %v1640, %v1661
        %v1664 = vunpack.c.l.s4 1966171168
        %v1665 = vunpack.c.0.s8 %v1664
        %v1666 = vlaneseq
        %v1667 = vshrl.u32 %v1666, 7
        %v1668 = vsub.s32 %v1665, %v1667
        %v1669 = vrot.slane %v1641, %v1668
        %v1670 = vcombine.high %v1648, %v1648
        %v1671 = vcombine.high %v1655, %v1655
        %v1672 = vcombine.high %v1662, %v1662
        %v1673 = vcombine.high %v1669, %v1669
        %1682 = vst.msk [vmem:[#allocation8 + $0x1] sm:$0x1] %vm1610, %v1648
        %1683 = vst.msk [vmem:[#allocation8 + $0x11] sm:$0x1] %vm1610, %v1662
        %1684 = vst.msk [vmem:[#allocation8 + $0x21] sm:$0x1] %vm1610, %v1670
        %1685 = vst.msk [vmem:[#allocation8 + $0x31] sm:$0x1] %vm1610, %v1672
        %1686 = vst.msk [vmem:[#allocation8 + $0x41] sm:$0x1] %vm1610, %v1655
        %1687 = vst.msk [vmem:[#allocation8 + $0x51] sm:$0x1] %vm1610, %v1669
        %1688 = vst.msk [vmem:[#allocation8 + $0x61] sm:$0x1] %vm1610, %v1671
        %1689 = vst.msk [vmem:[#allocation8 + $0x71] sm:$0x1] %vm1610, %v1673
        %1690 = vset.pattern.permute.xlu0 2
        %1691 = vperm.xlu0 %1690, %v1544
        %v1692 = vpop.permute.xlu0 %1691
        %v1694 = vmul.f32 %v1692, %v1545
        %v1696 = vcombine.high %v1694, %v1694
        %v1698 = vunpack.c.l.s4 1966171168
        %v1699 = vunpack.c.0.s8 %v1698
        %v1700 = vlaneseq
        %v1701 = vshrl.u32 %v1700, 7
        %v1702 = vsub.s32 %v1699, %v1701
        %v1703 = vrot.slane %v1694, %v1702
        %v1705 = vunpack.c.l.s4 1966171168
        %v1706 = vunpack.c.0.s8 %v1705
        %v1707 = vlaneseq
        %v1708 = vshrl.u32 %v1707, 7
        %v1709 = vsub.s32 %v1706, %v1708
        %v1710 = vrot.slane %v1696, %v1709
        %v1711 = vcombine.high %v1703, %v1703
        %v1712 = vcombine.high %v1710, %v1710
        %v1714 = vunpack.c.l.s4 1966171168
        %v1715 = vunpack.c.0.s8 %v1714
        %v1716 = vlaneseq
        %v1717 = vshrl.u32 %v1716, 7
        %v1718 = vsub.s32 %v1715, %v1717
        %v1719 = vrot.slane %v1703, %v1718
        %v1721 = vunpack.c.l.s4 1966171168
        %v1722 = vunpack.c.0.s8 %v1721
        %v1723 = vlaneseq
        %v1724 = vshrl.u32 %v1723, 7
        %v1725 = vsub.s32 %v1722, %v1724
        %v1726 = vrot.slane %v1710, %v1725
        %v1728 = vunpack.c.l.s4 1966171168
        %v1729 = vunpack.c.0.s8 %v1728
        %v1730 = vlaneseq
        %v1731 = vshrl.u32 %v1730, 7
        %v1732 = vsub.s32 %v1729, %v1731
        %v1733 = vrot.slane %v1711, %v1732
        %v1735 = vunpack.c.l.s4 1966171168
        %v1736 = vunpack.c.0.s8 %v1735
        %v1737 = vlaneseq
        %v1738 = vshrl.u32 %v1737, 7
        %v1739 = vsub.s32 %v1736, %v1738
        %v1740 = vrot.slane %v1712, %v1739
        %v1741 = vcombine.high %v1719, %v1719
        %v1742 = vcombine.high %v1726, %v1726
        %v1743 = vcombine.high %v1733, %v1733
        %v1744 = vcombine.high %v1740, %v1740
        %1753 = vst.msk [vmem:[#allocation8 + $0x2] sm:$0x1] %vm1610, %v1719
        %1754 = vst.msk [vmem:[#allocation8 + $0x12] sm:$0x1] %vm1610, %v1733
        %1755 = vst.msk [vmem:[#allocation8 + $0x22] sm:$0x1] %vm1610, %v1741
        %1756 = vst.msk [vmem:[#allocation8 + $0x32] sm:$0x1] %vm1610, %v1743
        %1757 = vst.msk [vmem:[#allocation8 + $0x42] sm:$0x1] %vm1610, %v1726
        %1758 = vst.msk [vmem:[#allocation8 + $0x52] sm:$0x1] %vm1610, %v1740
        %1759 = vst.msk [vmem:[#allocation8 + $0x62] sm:$0x1] %vm1610, %v1742
        %1760 = vst.msk [vmem:[#allocation8 + $0x72] sm:$0x1] %vm1610, %v1744
        %1761 = vset.pattern.permute.xlu0 3
        %1762 = vperm.xlu0 %1761, %v1544
        %v1763 = vpop.permute.xlu0 %1762
        %v1765 = vmul.f32 %v1763, %v1545
        %v1767 = vcombine.high %v1765, %v1765
        %v1769 = vunpack.c.l.s4 1966171168
        %v1770 = vunpack.c.0.s8 %v1769
        %v1771 = vlaneseq
        %v1772 = vshrl.u32 %v1771, 7
        %v1773 = vsub.s32 %v1770, %v1772
        %v1774 = vrot.slane %v1765, %v1773
        %v1776 = vunpack.c.l.s4 1966171168
        %v1777 = vunpack.c.0.s8 %v1776
        %v1778 = vlaneseq
        %v1779 = vshrl.u32 %v1778, 7
        %v1780 = vsub.s32 %v1777, %v1779
        %v1781 = vrot.slane %v1767, %v1780
        %v1782 = vcombine.high %v1774, %v1774
        %v1783 = vcombine.high %v1781, %v1781
        %v1785 = vunpack.c.l.s4 1966171168
        %v1786 = vunpack.c.0.s8 %v1785
        %v1787 = vlaneseq
        %v1788 = vshrl.u32 %v1787, 7
        %v1789 = vsub.s32 %v1786, %v1788
        %v1790 = vrot.slane %v1774, %v1789
        %v1792 = vunpack.c.l.s4 1966171168
        %v1793 = vunpack.c.0.s8 %v1792
        %v1794 = vlaneseq
        %v1795 = vshrl.u32 %v1794, 7
        %v1796 = vsub.s32 %v1793, %v1795
        %v1797 = vrot.slane %v1781, %v1796
        %v1799 = vunpack.c.l.s4 1966171168
        %v1800 = vunpack.c.0.s8 %v1799
        %v1801 = vlaneseq
        %v1802 = vshrl.u32 %v1801, 7
        %v1803 = vsub.s32 %v1800, %v1802
        %v1804 = vrot.slane %v1782, %v1803
        %v1806 = vunpack.c.l.s4 1966171168
        %v1807 = vunpack.c.0.s8 %v1806
        %v1808 = vlaneseq
        %v1809 = vshrl.u32 %v1808, 7
        %v1810 = vsub.s32 %v1807, %v1809
        %v1811 = vrot.slane %v1783, %v1810
        %v1812 = vcombine.high %v1790, %v1790
        %v1813 = vcombine.high %v1797, %v1797
        %v1814 = vcombine.high %v1804, %v1804
        %v1815 = vcombine.high %v1811, %v1811
        %1824 = vst.msk [vmem:[#allocation8 + $0x3] sm:$0x1] %vm1610, %v1790
        %1825 = vst.msk [vmem:[#allocation8 + $0x13] sm:$0x1] %vm1610, %v1804
        %1826 = vst.msk [vmem:[#allocation8 + $0x23] sm:$0x1] %vm1610, %v1812
        %1827 = vst.msk [vmem:[#allocation8 + $0x33] sm:$0x1] %vm1610, %v1814
        %1828 = vst.msk [vmem:[#allocation8 + $0x43] sm:$0x1] %vm1610, %v1797
        %1829 = vst.msk [vmem:[#allocation8 + $0x53] sm:$0x1] %vm1610, %v1811
        %1830 = vst.msk [vmem:[#allocation8 + $0x63] sm:$0x1] %vm1610, %v1813
        %1831 = vst.msk [vmem:[#allocation8 + $0x73] sm:$0x1] %vm1610, %v1815
        %1832 = vset.pattern.permute.xlu0 4
        %1833 = vperm.xlu0 %1832, %v1544
        %v1834 = vpop.permute.xlu0 %1833
        %v1836 = vmul.f32 %v1834, %v1545
        %v1838 = vcombine.high %v1836, %v1836
        %v1840 = vunpack.c.l.s4 1966171168
        %v1841 = vunpack.c.0.s8 %v1840
        %v1842 = vlaneseq
        %v1843 = vshrl.u32 %v1842, 7
        %v1844 = vsub.s32 %v1841, %v1843
        %v1845 = vrot.slane %v1836, %v1844
        %v1847 = vunpack.c.l.s4 1966171168
        %v1848 = vunpack.c.0.s8 %v1847
        %v1849 = vlaneseq
        %v1850 = vshrl.u32 %v1849, 7
        %v1851 = vsub.s32 %v1848, %v1850
        %v1852 = vrot.slane %v1838, %v1851
        %v1853 = vcombine.high %v1845, %v1845
        %v1854 = vcombine.high %v1852, %v1852
        %v1856 = vunpack.c.l.s4 1966171168
        %v1857 = vunpack.c.0.s8 %v1856
        %v1858 = vlaneseq
        %v1859 = vshrl.u32 %v1858, 7
        %v1860 = vsub.s32 %v1857, %v1859
        %v1861 = vrot.slane %v1845, %v1860
        %v1863 = vunpack.c.l.s4 1966171168
        %v1864 = vunpack.c.0.s8 %v1863
        %v1865 = vlaneseq
        %v1866 = vshrl.u32 %v1865, 7
        %v1867 = vsub.s32 %v1864, %v1866
        %v1868 = vrot.slane %v1852, %v1867
        %v1870 = vunpack.c.l.s4 1966171168
        %v1871 = vunpack.c.0.s8 %v1870
        %v1872 = vlaneseq
        %v1873 = vshrl.u32 %v1872, 7
        %v1874 = vsub.s32 %v1871, %v1873
        %v1875 = vrot.slane %v1853, %v1874
        %v1877 = vunpack.c.l.s4 1966171168
        %v1878 = vunpack.c.0.s8 %v1877
        %v1879 = vlaneseq
        %v1880 = vshrl.u32 %v1879, 7
        %v1881 = vsub.s32 %v1878, %v1880
        %v1882 = vrot.slane %v1854, %v1881
        %v1883 = vcombine.high %v1861, %v1861
        %v1884 = vcombine.high %v1868, %v1868
        %v1885 = vcombine.high %v1875, %v1875
        %v1886 = vcombine.high %v1882, %v1882
        %1895 = vst.msk [vmem:[#allocation8 + $0x4] sm:$0x1] %vm1610, %v1861
        %1896 = vst.msk [vmem:[#allocation8 + $0x14] sm:$0x1] %vm1610, %v1875
        %1897 = vst.msk [vmem:[#allocation8 + $0x24] sm:$0x1] %vm1610, %v1883
        %1898 = vst.msk [vmem:[#allocation8 + $0x34] sm:$0x1] %vm1610, %v1885
        %1899 = vst.msk [vmem:[#allocation8 + $0x44] sm:$0x1] %vm1610, %v1868
        %1900 = vst.msk [vmem:[#allocation8 + $0x54] sm:$0x1] %vm1610, %v1882
        %1901 = vst.msk [vmem:[#allocation8 + $0x64] sm:$0x1] %vm1610, %v1884
        %1902 = vst.msk [vmem:[#allocation8 + $0x74] sm:$0x1] %vm1610, %v1886
        %1903 = vset.pattern.permute.xlu0 5
        %1904 = vperm.xlu0 %1903, %v1544
        %v1905 = vpop.permute.xlu0 %1904
        %v1907 = vmul.f32 %v1905, %v1545
        %v1909 = vcombine.high %v1907, %v1907
        %v1911 = vunpack.c.l.s4 1966171168
        %v1912 = vunpack.c.0.s8 %v1911
        %v1913 = vlaneseq
        %v1914 = vshrl.u32 %v1913, 7
        %v1915 = vsub.s32 %v1912, %v1914
        %v1916 = vrot.slane %v1907, %v1915
        %v1918 = vunpack.c.l.s4 1966171168
        %v1919 = vunpack.c.0.s8 %v1918
        %v1920 = vlaneseq
        %v1921 = vshrl.u32 %v1920, 7
        %v1922 = vsub.s32 %v1919, %v1921
        %v1923 = vrot.slane %v1909, %v1922
        %v1924 = vcombine.high %v1916, %v1916
        %v1925 = vcombine.high %v1923, %v1923
        %v1927 = vunpack.c.l.s4 1966171168
        %v1928 = vunpack.c.0.s8 %v1927
        %v1929 = vlaneseq
        %v1930 = vshrl.u32 %v1929, 7
        %v1931 = vsub.s32 %v1928, %v1930
        %v1932 = vrot.slane %v1916, %v1931
        %v1934 = vunpack.c.l.s4 1966171168
        %v1935 = vunpack.c.0.s8 %v1934
        %v1936 = vlaneseq
        %v1937 = vshrl.u32 %v1936, 7
        %v1938 = vsub.s32 %v1935, %v1937
        %v1939 = vrot.slane %v1923, %v1938
        %v1941 = vunpack.c.l.s4 1966171168
        %v1942 = vunpack.c.0.s8 %v1941
        %v1943 = vlaneseq
        %v1944 = vshrl.u32 %v1943, 7
        %v1945 = vsub.s32 %v1942, %v1944
        %v1946 = vrot.slane %v1924, %v1945
        %v1948 = vunpack.c.l.s4 1966171168
        %v1949 = vunpack.c.0.s8 %v1948
        %v1950 = vlaneseq
        %v1951 = vshrl.u32 %v1950, 7
        %v1952 = vsub.s32 %v1949, %v1951
        %v1953 = vrot.slane %v1925, %v1952
        %v1954 = vcombine.high %v1932, %v1932
        %v1955 = vcombine.high %v1939, %v1939
        %v1956 = vcombine.high %v1946, %v1946
        %v1957 = vcombine.high %v1953, %v1953
        %1966 = vst.msk [vmem:[#allocation8 + $0x5] sm:$0x1] %vm1610, %v1932
        %1967 = vst.msk [vmem:[#allocation8 + $0x15] sm:$0x1] %vm1610, %v1946
        %1968 = vst.msk [vmem:[#allocation8 + $0x25] sm:$0x1] %vm1610, %v1954
        %1969 = vst.msk [vmem:[#allocation8 + $0x35] sm:$0x1] %vm1610, %v1956
        %1970 = vst.msk [vmem:[#allocation8 + $0x45] sm:$0x1] %vm1610, %v1939
        %1971 = vst.msk [vmem:[#allocation8 + $0x55] sm:$0x1] %vm1610, %v1953
        %1972 = vst.msk [vmem:[#allocation8 + $0x65] sm:$0x1] %vm1610, %v1955
        %1973 = vst.msk [vmem:[#allocation8 + $0x75] sm:$0x1] %vm1610, %v1957
        %1974 = vset.pattern.permute.xlu0 6
        %1975 = vperm.xlu0 %1974, %v1544
        %v1976 = vpop.permute.xlu0 %1975
        %v1978 = vmul.f32 %v1976, %v1545
        %v1980 = vcombine.high %v1978, %v1978
        %v1982 = vunpack.c.l.s4 1966171168
        %v1983 = vunpack.c.0.s8 %v1982
        %v1984 = vlaneseq
        %v1985 = vshrl.u32 %v1984, 7
        %v1986 = vsub.s32 %v1983, %v1985
        %v1987 = vrot.slane %v1978, %v1986
        %v1989 = vunpack.c.l.s4 1966171168
        %v1990 = vunpack.c.0.s8 %v1989
        %v1991 = vlaneseq
        %v1992 = vshrl.u32 %v1991, 7
        %v1993 = vsub.s32 %v1990, %v1992
        %v1994 = vrot.slane %v1980, %v1993
        %v1995 = vcombine.high %v1987, %v1987
        %v1996 = vcombine.high %v1994, %v1994
        %v1998 = vunpack.c.l.s4 1966171168
        %v1999 = vunpack.c.0.s8 %v1998
        %v2000 = vlaneseq
        %v2001 = vshrl.u32 %v2000, 7
        %v2002 = vsub.s32 %v1999, %v2001
        %v2003 = vrot.slane %v1987, %v2002
        %v2005 = vunpack.c.l.s4 1966171168
        %v2006 = vunpack.c.0.s8 %v2005
        %v2007 = vlaneseq
        %v2008 = vshrl.u32 %v2007, 7
        %v2009 = vsub.s32 %v2006, %v2008
        %v2010 = vrot.slane %v1994, %v2009
        %v2012 = vunpack.c.l.s4 1966171168
        %v2013 = vunpack.c.0.s8 %v2012
        %v2014 = vlaneseq
        %v2015 = vshrl.u32 %v2014, 7
        %v2016 = vsub.s32 %v2013, %v2015
        %v2017 = vrot.slane %v1995, %v2016
        %v2019 = vunpack.c.l.s4 1966171168
        %v2020 = vunpack.c.0.s8 %v2019
        %v2021 = vlaneseq
        %v2022 = vshrl.u32 %v2021, 7
        %v2023 = vsub.s32 %v2020, %v2022
        %v2024 = vrot.slane %v1996, %v2023
        %v2025 = vcombine.high %v2003, %v2003
        %v2026 = vcombine.high %v2010, %v2010
        %v2027 = vcombine.high %v2017, %v2017
        %v2028 = vcombine.high %v2024, %v2024
        %2037 = vst.msk [vmem:[#allocation8 + $0x6] sm:$0x1] %vm1610, %v2003
        %2038 = vst.msk [vmem:[#allocation8 + $0x16] sm:$0x1] %vm1610, %v2017
        %2039 = vst.msk [vmem:[#allocation8 + $0x26] sm:$0x1] %vm1610, %v2025
        %2040 = vst.msk [vmem:[#allocation8 + $0x36] sm:$0x1] %vm1610, %v2027
        %2041 = vst.msk [vmem:[#allocation8 + $0x46] sm:$0x1] %vm1610, %v2010
        %2042 = vst.msk [vmem:[#allocation8 + $0x56] sm:$0x1] %vm1610, %v2024
        %2043 = vst.msk [vmem:[#allocation8 + $0x66] sm:$0x1] %vm1610, %v2026
        %2044 = vst.msk [vmem:[#allocation8 + $0x76] sm:$0x1] %vm1610, %v2028
        %2045 = vset.pattern.permute.xlu0 7
        %2046 = vperm.xlu0 %2045, %v1544
        %v2047 = vpop.permute.xlu0 %2046
        %v2049 = vmul.f32 %v2047, %v1545
        %v2051 = vcombine.high %v2049, %v2049
        %v2053 = vunpack.c.l.s4 1966171168
        %v2054 = vunpack.c.0.s8 %v2053
        %v2055 = vlaneseq
        %v2056 = vshrl.u32 %v2055, 7
        %v2057 = vsub.s32 %v2054, %v2056
        %v2058 = vrot.slane %v2049, %v2057
        %v2060 = vunpack.c.l.s4 1966171168
        %v2061 = vunpack.c.0.s8 %v2060
        %v2062 = vlaneseq
        %v2063 = vshrl.u32 %v2062, 7
        %v2064 = vsub.s32 %v2061, %v2063
        %v2065 = vrot.slane %v2051, %v2064
        %v2066 = vcombine.high %v2058, %v2058
        %v2067 = vcombine.high %v2065, %v2065
        %v2069 = vunpack.c.l.s4 1966171168
        %v2070 = vunpack.c.0.s8 %v2069
        %v2071 = vlaneseq
        %v2072 = vshrl.u32 %v2071, 7
        %v2073 = vsub.s32 %v2070, %v2072
        %v2074 = vrot.slane %v2058, %v2073
        %v2076 = vunpack.c.l.s4 1966171168
        %v2077 = vunpack.c.0.s8 %v2076
        %v2078 = vlaneseq
        %v2079 = vshrl.u32 %v2078, 7
        %v2080 = vsub.s32 %v2077, %v2079
        %v2081 = vrot.slane %v2065, %v2080
        %v2083 = vunpack.c.l.s4 1966171168
        %v2084 = vunpack.c.0.s8 %v2083
        %v2085 = vlaneseq
        %v2086 = vshrl.u32 %v2085, 7
        %v2087 = vsub.s32 %v2084, %v2086
        %v2088 = vrot.slane %v2066, %v2087
        %v2090 = vunpack.c.l.s4 1966171168
        %v2091 = vunpack.c.0.s8 %v2090
        %v2092 = vlaneseq
        %v2093 = vshrl.u32 %v2092, 7
        %v2094 = vsub.s32 %v2091, %v2093
        %v2095 = vrot.slane %v2067, %v2094
        %v2096 = vcombine.high %v2074, %v2074
        %v2097 = vcombine.high %v2081, %v2081
        %v2098 = vcombine.high %v2088, %v2088
        %v2099 = vcombine.high %v2095, %v2095
        %2108 = vst.msk [vmem:[#allocation8 + $0x7] sm:$0x1] %vm1610, %v2074
        %2109 = vst.msk [vmem:[#allocation8 + $0x17] sm:$0x1] %vm1610, %v2088
        %2110 = vst.msk [vmem:[#allocation8 + $0x27] sm:$0x1] %vm1610, %v2096
        %2111 = vst.msk [vmem:[#allocation8 + $0x37] sm:$0x1] %vm1610, %v2098
        %2112 = vst.msk [vmem:[#allocation8 + $0x47] sm:$0x1] %vm1610, %v2081
        %2113 = vst.msk [vmem:[#allocation8 + $0x57] sm:$0x1] %vm1610, %v2095
        %2114 = vst.msk [vmem:[#allocation8 + $0x67] sm:$0x1] %vm1610, %v2097
        %2115 = vst.msk [vmem:[#allocation8 + $0x77] sm:$0x1] %vm1610, %v2099
        %2116 = vset.pattern.permute.xlu0 8
        %2117 = vperm.xlu0 %2116, %v1544
        %v2118 = vpop.permute.xlu0 %2117
        %v2120 = vmul.f32 %v2118, %v1545
        %v2122 = vcombine.high %v2120, %v2120
        %v2124 = vunpack.c.l.s4 1966171168
        %v2125 = vunpack.c.0.s8 %v2124
        %v2126 = vlaneseq
        %v2127 = vshrl.u32 %v2126, 7
        %v2128 = vsub.s32 %v2125, %v2127
        %v2129 = vrot.slane %v2120, %v2128
        %v2131 = vunpack.c.l.s4 1966171168
        %v2132 = vunpack.c.0.s8 %v2131
        %v2133 = vlaneseq
        %v2134 = vshrl.u32 %v2133, 7
        %v2135 = vsub.s32 %v2132, %v2134
        %v2136 = vrot.slane %v2122, %v2135
        %v2137 = vcombine.high %v2129, %v2129
        %v2138 = vcombine.high %v2136, %v2136
        %v2140 = vunpack.c.l.s4 1966171168
        %v2141 = vunpack.c.0.s8 %v2140
        %v2142 = vlaneseq
        %v2143 = vshrl.u32 %v2142, 7
        %v2144 = vsub.s32 %v2141, %v2143
        %v2145 = vrot.slane %v2129, %v2144
        %v2147 = vunpack.c.l.s4 1966171168
        %v2148 = vunpack.c.0.s8 %v2147
        %v2149 = vlaneseq
        %v2150 = vshrl.u32 %v2149, 7
        %v2151 = vsub.s32 %v2148, %v2150
        %v2152 = vrot.slane %v2136, %v2151
        %v2154 = vunpack.c.l.s4 1966171168
        %v2155 = vunpack.c.0.s8 %v2154
        %v2156 = vlaneseq
        %v2157 = vshrl.u32 %v2156, 7
        %v2158 = vsub.s32 %v2155, %v2157
        %v2159 = vrot.slane %v2137, %v2158
        %v2161 = vunpack.c.l.s4 1966171168
        %v2162 = vunpack.c.0.s8 %v2161
        %v2163 = vlaneseq
        %v2164 = vshrl.u32 %v2163, 7
        %v2165 = vsub.s32 %v2162, %v2164
        %v2166 = vrot.slane %v2138, %v2165
        %v2167 = vcombine.high %v2145, %v2145
        %v2168 = vcombine.high %v2152, %v2152
        %v2169 = vcombine.high %v2159, %v2159
        %v2170 = vcombine.high %v2166, %v2166
        %2179 = vst.msk [vmem:[#allocation8 + $0x8] sm:$0x1] %vm1610, %v2145
        %2180 = vst.msk [vmem:[#allocation8 + $0x18] sm:$0x1] %vm1610, %v2159
        %2181 = vst.msk [vmem:[#allocation8 + $0x28] sm:$0x1] %vm1610, %v2167
        %2182 = vst.msk [vmem:[#allocation8 + $0x38] sm:$0x1] %vm1610, %v2169
        %2183 = vst.msk [vmem:[#allocation8 + $0x48] sm:$0x1] %vm1610, %v2152
        %2184 = vst.msk [vmem:[#allocation8 + $0x58] sm:$0x1] %vm1610, %v2166
        %2185 = vst.msk [vmem:[#allocation8 + $0x68] sm:$0x1] %vm1610, %v2168
        %2186 = vst.msk [vmem:[#allocation8 + $0x78] sm:$0x1] %vm1610, %v2170
        %2187 = vset.pattern.permute.xlu0 9
        %2188 = vperm.xlu0 %2187, %v1544
        %v2189 = vpop.permute.xlu0 %2188
        %v2191 = vmul.f32 %v2189, %v1545
        %v2193 = vcombine.high %v2191, %v2191
        %v2195 = vunpack.c.l.s4 1966171168
        %v2196 = vunpack.c.0.s8 %v2195
        %v2197 = vlaneseq
        %v2198 = vshrl.u32 %v2197, 7
        %v2199 = vsub.s32 %v2196, %v2198
        %v2200 = vrot.slane %v2191, %v2199
        %v2202 = vunpack.c.l.s4 1966171168
        %v2203 = vunpack.c.0.s8 %v2202
        %v2204 = vlaneseq
        %v2205 = vshrl.u32 %v2204, 7
        %v2206 = vsub.s32 %v2203, %v2205
        %v2207 = vrot.slane %v2193, %v2206
        %v2208 = vcombine.high %v2200, %v2200
        %v2209 = vcombine.high %v2207, %v2207
        %v2211 = vunpack.c.l.s4 1966171168
        %v2212 = vunpack.c.0.s8 %v2211
        %v2213 = vlaneseq
        %v2214 = vshrl.u32 %v2213, 7
        %v2215 = vsub.s32 %v2212, %v2214
        %v2216 = vrot.slane %v2200, %v2215
        %v2218 = vunpack.c.l.s4 1966171168
        %v2219 = vunpack.c.0.s8 %v2218
        %v2220 = vlaneseq
        %v2221 = vshrl.u32 %v2220, 7
        %v2222 = vsub.s32 %v2219, %v2221
        %v2223 = vrot.slane %v2207, %v2222
        %v2225 = vunpack.c.l.s4 1966171168
        %v2226 = vunpack.c.0.s8 %v2225
        %v2227 = vlaneseq
        %v2228 = vshrl.u32 %v2227, 7
        %v2229 = vsub.s32 %v2226, %v2228
        %v2230 = vrot.slane %v2208, %v2229
        %v2232 = vunpack.c.l.s4 1966171168
        %v2233 = vunpack.c.0.s8 %v2232
        %v2234 = vlaneseq
        %v2235 = vshrl.u32 %v2234, 7
        %v2236 = vsub.s32 %v2233, %v2235
        %v2237 = vrot.slane %v2209, %v2236
        %v2238 = vcombine.high %v2216, %v2216
        %v2239 = vcombine.high %v2223, %v2223
        %v2240 = vcombine.high %v2230, %v2230
        %v2241 = vcombine.high %v2237, %v2237
        %2250 = vst.msk [vmem:[#allocation8 + $0x9] sm:$0x1] %vm1610, %v2216
        %2251 = vst.msk [vmem:[#allocation8 + $0x19] sm:$0x1] %vm1610, %v2230
        %2252 = vst.msk [vmem:[#allocation8 + $0x29] sm:$0x1] %vm1610, %v2238
        %2253 = vst.msk [vmem:[#allocation8 + $0x39] sm:$0x1] %vm1610, %v2240
        %2254 = vst.msk [vmem:[#allocation8 + $0x49] sm:$0x1] %vm1610, %v2223
        %2255 = vst.msk [vmem:[#allocation8 + $0x59] sm:$0x1] %vm1610, %v2237
        %2256 = vst.msk [vmem:[#allocation8 + $0x69] sm:$0x1] %vm1610, %v2239
        %2257 = vst.msk [vmem:[#allocation8 + $0x79] sm:$0x1] %vm1610, %v2241
        %2258 = vset.pattern.permute.xlu0 10
        %2259 = vperm.xlu0 %2258, %v1544
        %v2260 = vpop.permute.xlu0 %2259
        %v2262 = vmul.f32 %v2260, %v1545
        %v2264 = vcombine.high %v2262, %v2262
        %v2266 = vunpack.c.l.s4 1966171168
        %v2267 = vunpack.c.0.s8 %v2266
        %v2268 = vlaneseq
        %v2269 = vshrl.u32 %v2268, 7
        %v2270 = vsub.s32 %v2267, %v2269
        %v2271 = vrot.slane %v2262, %v2270
        %v2273 = vunpack.c.l.s4 1966171168
        %v2274 = vunpack.c.0.s8 %v2273
        %v2275 = vlaneseq
        %v2276 = vshrl.u32 %v2275, 7
        %v2277 = vsub.s32 %v2274, %v2276
        %v2278 = vrot.slane %v2264, %v2277
        %v2279 = vcombine.high %v2271, %v2271
        %v2280 = vcombine.high %v2278, %v2278
        %v2282 = vunpack.c.l.s4 1966171168
        %v2283 = vunpack.c.0.s8 %v2282
        %v2284 = vlaneseq
        %v2285 = vshrl.u32 %v2284, 7
        %v2286 = vsub.s32 %v2283, %v2285
        %v2287 = vrot.slane %v2271, %v2286
        %v2289 = vunpack.c.l.s4 1966171168
        %v2290 = vunpack.c.0.s8 %v2289
        %v2291 = vlaneseq
        %v2292 = vshrl.u32 %v2291, 7
        %v2293 = vsub.s32 %v2290, %v2292
        %v2294 = vrot.slane %v2278, %v2293
        %v2296 = vunpack.c.l.s4 1966171168
        %v2297 = vunpack.c.0.s8 %v2296
        %v2298 = vlaneseq
        %v2299 = vshrl.u32 %v2298, 7
        %v2300 = vsub.s32 %v2297, %v2299
        %v2301 = vrot.slane %v2279, %v2300
        %v2303 = vunpack.c.l.s4 1966171168
        %v2304 = vunpack.c.0.s8 %v2303
        %v2305 = vlaneseq
        %v2306 = vshrl.u32 %v2305, 7
        %v2307 = vsub.s32 %v2304, %v2306
        %v2308 = vrot.slane %v2280, %v2307
        %v2309 = vcombine.high %v2287, %v2287
        %v2310 = vcombine.high %v2294, %v2294
        %v2311 = vcombine.high %v2301, %v2301
        %v2312 = vcombine.high %v2308, %v2308
        %2321 = vst.msk [vmem:[#allocation8 + $0xa] sm:$0x1] %vm1610, %v2287
        %2322 = vst.msk [vmem:[#allocation8 + $0x1a] sm:$0x1] %vm1610, %v2301
        %2323 = vst.msk [vmem:[#allocation8 + $0x2a] sm:$0x1] %vm1610, %v2309
        %2324 = vst.msk [vmem:[#allocation8 + $0x3a] sm:$0x1] %vm1610, %v2311
        %2325 = vst.msk [vmem:[#allocation8 + $0x4a] sm:$0x1] %vm1610, %v2294
        %2326 = vst.msk [vmem:[#allocation8 + $0x5a] sm:$0x1] %vm1610, %v2308
        %2327 = vst.msk [vmem:[#allocation8 + $0x6a] sm:$0x1] %vm1610, %v2310
        %2328 = vst.msk [vmem:[#allocation8 + $0x7a] sm:$0x1] %vm1610, %v2312
        %2329 = vset.pattern.permute.xlu0 11
        %2330 = vperm.xlu0 %2329, %v1544
        %v2331 = vpop.permute.xlu0 %2330
        %v2333 = vmul.f32 %v2331, %v1545
        %v2335 = vcombine.high %v2333, %v2333
        %v2337 = vunpack.c.l.s4 1966171168
        %v2338 = vunpack.c.0.s8 %v2337
        %v2339 = vlaneseq
        %v2340 = vshrl.u32 %v2339, 7
        %v2341 = vsub.s32 %v2338, %v2340
        %v2342 = vrot.slane %v2333, %v2341
        %v2344 = vunpack.c.l.s4 1966171168
        %v2345 = vunpack.c.0.s8 %v2344
        %v2346 = vlaneseq
        %v2347 = vshrl.u32 %v2346, 7
        %v2348 = vsub.s32 %v2345, %v2347
        %v2349 = vrot.slane %v2335, %v2348
        %v2350 = vcombine.high %v2342, %v2342
        %v2351 = vcombine.high %v2349, %v2349
        %v2353 = vunpack.c.l.s4 1966171168
        %v2354 = vunpack.c.0.s8 %v2353
        %v2355 = vlaneseq
        %v2356 = vshrl.u32 %v2355, 7
        %v2357 = vsub.s32 %v2354, %v2356
        %v2358 = vrot.slane %v2342, %v2357
        %v2360 = vunpack.c.l.s4 1966171168
        %v2361 = vunpack.c.0.s8 %v2360
        %v2362 = vlaneseq
        %v2363 = vshrl.u32 %v2362, 7
        %v2364 = vsub.s32 %v2361, %v2363
        %v2365 = vrot.slane %v2349, %v2364
        %v2367 = vunpack.c.l.s4 1966171168
        %v2368 = vunpack.c.0.s8 %v2367
        %v2369 = vlaneseq
        %v2370 = vshrl.u32 %v2369, 7
        %v2371 = vsub.s32 %v2368, %v2370
        %v2372 = vrot.slane %v2350, %v2371
        %v2374 = vunpack.c.l.s4 1966171168
        %v2375 = vunpack.c.0.s8 %v2374
        %v2376 = vlaneseq
        %v2377 = vshrl.u32 %v2376, 7
        %v2378 = vsub.s32 %v2375, %v2377
        %v2379 = vrot.slane %v2351, %v2378
        %v2380 = vcombine.high %v2358, %v2358
        %v2381 = vcombine.high %v2365, %v2365
        %v2382 = vcombine.high %v2372, %v2372
        %v2383 = vcombine.high %v2379, %v2379
        %2392 = vst.msk [vmem:[#allocation8 + $0xb] sm:$0x1] %vm1610, %v2358
        %2393 = vst.msk [vmem:[#allocation8 + $0x1b] sm:$0x1] %vm1610, %v2372
        %2394 = vst.msk [vmem:[#allocation8 + $0x2b] sm:$0x1] %vm1610, %v2380
        %2395 = vst.msk [vmem:[#allocation8 + $0x3b] sm:$0x1] %vm1610, %v2382
        %2396 = vst.msk [vmem:[#allocation8 + $0x4b] sm:$0x1] %vm1610, %v2365
        %2397 = vst.msk [vmem:[#allocation8 + $0x5b] sm:$0x1] %vm1610, %v2379
        %2398 = vst.msk [vmem:[#allocation8 + $0x6b] sm:$0x1] %vm1610, %v2381
        %2399 = vst.msk [vmem:[#allocation8 + $0x7b] sm:$0x1] %vm1610, %v2383
        %2400 = vset.pattern.permute.xlu0 12
        %2401 = vperm.xlu0 %2400, %v1544
        %v2402 = vpop.permute.xlu0 %2401
        %v2404 = vmul.f32 %v2402, %v1545
        %v2406 = vcombine.high %v2404, %v2404
        %v2408 = vunpack.c.l.s4 1966171168
        %v2409 = vunpack.c.0.s8 %v2408
        %v2410 = vlaneseq
        %v2411 = vshrl.u32 %v2410, 7
        %v2412 = vsub.s32 %v2409, %v2411
        %v2413 = vrot.slane %v2404, %v2412
        %v2415 = vunpack.c.l.s4 1966171168
        %v2416 = vunpack.c.0.s8 %v2415
        %v2417 = vlaneseq
        %v2418 = vshrl.u32 %v2417, 7
        %v2419 = vsub.s32 %v2416, %v2418
        %v2420 = vrot.slane %v2406, %v2419
        %v2421 = vcombine.high %v2413, %v2413
        %v2422 = vcombine.high %v2420, %v2420
        %v2424 = vunpack.c.l.s4 1966171168
        %v2425 = vunpack.c.0.s8 %v2424
        %v2426 = vlaneseq
        %v2427 = vshrl.u32 %v2426, 7
        %v2428 = vsub.s32 %v2425, %v2427
        %v2429 = vrot.slane %v2413, %v2428
        %v2431 = vunpack.c.l.s4 1966171168
        %v2432 = vunpack.c.0.s8 %v2431
        %v2433 = vlaneseq
        %v2434 = vshrl.u32 %v2433, 7
        %v2435 = vsub.s32 %v2432, %v2434
        %v2436 = vrot.slane %v2420, %v2435
        %v2438 = vunpack.c.l.s4 1966171168
        %v2439 = vunpack.c.0.s8 %v2438
        %v2440 = vlaneseq
        %v2441 = vshrl.u32 %v2440, 7
        %v2442 = vsub.s32 %v2439, %v2441
        %v2443 = vrot.slane %v2421, %v2442
        %v2445 = vunpack.c.l.s4 1966171168
        %v2446 = vunpack.c.0.s8 %v2445
        %v2447 = vlaneseq
        %v2448 = vshrl.u32 %v2447, 7
        %v2449 = vsub.s32 %v2446, %v2448
        %v2450 = vrot.slane %v2422, %v2449
        %v2451 = vcombine.high %v2429, %v2429
        %v2452 = vcombine.high %v2436, %v2436
        %v2453 = vcombine.high %v2443, %v2443
        %v2454 = vcombine.high %v2450, %v2450
        %2463 = vst.msk [vmem:[#allocation8 + $0xc] sm:$0x1] %vm1610, %v2429
        %2464 = vst.msk [vmem:[#allocation8 + $0x1c] sm:$0x1] %vm1610, %v2443
        %2465 = vst.msk [vmem:[#allocation8 + $0x2c] sm:$0x1] %vm1610, %v2451
        %2466 = vst.msk [vmem:[#allocation8 + $0x3c] sm:$0x1] %vm1610, %v2453
        %2467 = vst.msk [vmem:[#allocation8 + $0x4c] sm:$0x1] %vm1610, %v2436
        %2468 = vst.msk [vmem:[#allocation8 + $0x5c] sm:$0x1] %vm1610, %v2450
        %2469 = vst.msk [vmem:[#allocation8 + $0x6c] sm:$0x1] %vm1610, %v2452
        %2470 = vst.msk [vmem:[#allocation8 + $0x7c] sm:$0x1] %vm1610, %v2454
        %2471 = vset.pattern.permute.xlu0 13
        %2472 = vperm.xlu0 %2471, %v1544
        %v2473 = vpop.permute.xlu0 %2472
        %v2475 = vmul.f32 %v2473, %v1545
        %v2477 = vcombine.high %v2475, %v2475
        %v2479 = vunpack.c.l.s4 1966171168
        %v2480 = vunpack.c.0.s8 %v2479
        %v2481 = vlaneseq
        %v2482 = vshrl.u32 %v2481, 7
        %v2483 = vsub.s32 %v2480, %v2482
        %v2484 = vrot.slane %v2475, %v2483
        %v2486 = vunpack.c.l.s4 1966171168
        %v2487 = vunpack.c.0.s8 %v2486
        %v2488 = vlaneseq
        %v2489 = vshrl.u32 %v2488, 7
        %v2490 = vsub.s32 %v2487, %v2489
        %v2491 = vrot.slane %v2477, %v2490
        %v2492 = vcombine.high %v2484, %v2484
        %v2493 = vcombine.high %v2491, %v2491
        %v2495 = vunpack.c.l.s4 1966171168
        %v2496 = vunpack.c.0.s8 %v2495
        %v2497 = vlaneseq
        %v2498 = vshrl.u32 %v2497, 7
        %v2499 = vsub.s32 %v2496, %v2498
        %v2500 = vrot.slane %v2484, %v2499
        %v2502 = vunpack.c.l.s4 1966171168
        %v2503 = vunpack.c.0.s8 %v2502
        %v2504 = vlaneseq
        %v2505 = vshrl.u32 %v2504, 7
        %v2506 = vsub.s32 %v2503, %v2505
        %v2507 = vrot.slane %v2491, %v2506
        %v2509 = vunpack.c.l.s4 1966171168
        %v2510 = vunpack.c.0.s8 %v2509
        %v2511 = vlaneseq
        %v2512 = vshrl.u32 %v2511, 7
        %v2513 = vsub.s32 %v2510, %v2512
        %v2514 = vrot.slane %v2492, %v2513
        %v2516 = vunpack.c.l.s4 1966171168
        %v2517 = vunpack.c.0.s8 %v2516
        %v2518 = vlaneseq
        %v2519 = vshrl.u32 %v2518, 7
        %v2520 = vsub.s32 %v2517, %v2519
        %v2521 = vrot.slane %v2493, %v2520
        %v2522 = vcombine.high %v2500, %v2500
        %v2523 = vcombine.high %v2507, %v2507
        %v2524 = vcombine.high %v2514, %v2514
        %v2525 = vcombine.high %v2521, %v2521
        %2534 = vst.msk [vmem:[#allocation8 + $0xd] sm:$0x1] %vm1610, %v2500
        %2535 = vst.msk [vmem:[#allocation8 + $0x1d] sm:$0x1] %vm1610, %v2514
        %2536 = vst.msk [vmem:[#allocation8 + $0x2d] sm:$0x1] %vm1610, %v2522
        %2537 = vst.msk [vmem:[#allocation8 + $0x3d] sm:$0x1] %vm1610, %v2524
        %2538 = vst.msk [vmem:[#allocation8 + $0x4d] sm:$0x1] %vm1610, %v2507
        %2539 = vst.msk [vmem:[#allocation8 + $0x5d] sm:$0x1] %vm1610, %v2521
        %2540 = vst.msk [vmem:[#allocation8 + $0x6d] sm:$0x1] %vm1610, %v2523
        %2541 = vst.msk [vmem:[#allocation8 + $0x7d] sm:$0x1] %vm1610, %v2525
        %2542 = vset.pattern.permute.xlu0 14
        %2543 = vperm.xlu0 %2542, %v1544
        %v2544 = vpop.permute.xlu0 %2543
        %v2546 = vmul.f32 %v2544, %v1545
        %v2548 = vcombine.high %v2546, %v2546
        %v2550 = vunpack.c.l.s4 1966171168
        %v2551 = vunpack.c.0.s8 %v2550
        %v2552 = vlaneseq
        %v2553 = vshrl.u32 %v2552, 7
        %v2554 = vsub.s32 %v2551, %v2553
        %v2555 = vrot.slane %v2546, %v2554
        %v2557 = vunpack.c.l.s4 1966171168
        %v2558 = vunpack.c.0.s8 %v2557
        %v2559 = vlaneseq
        %v2560 = vshrl.u32 %v2559, 7
        %v2561 = vsub.s32 %v2558, %v2560
        %v2562 = vrot.slane %v2548, %v2561
        %v2563 = vcombine.high %v2555, %v2555
        %v2564 = vcombine.high %v2562, %v2562
        %v2566 = vunpack.c.l.s4 1966171168
        %v2567 = vunpack.c.0.s8 %v2566
        %v2568 = vlaneseq
        %v2569 = vshrl.u32 %v2568, 7
        %v2570 = vsub.s32 %v2567, %v2569
        %v2571 = vrot.slane %v2555, %v2570
        %v2573 = vunpack.c.l.s4 1966171168
        %v2574 = vunpack.c.0.s8 %v2573
        %v2575 = vlaneseq
        %v2576 = vshrl.u32 %v2575, 7
        %v2577 = vsub.s32 %v2574, %v2576
        %v2578 = vrot.slane %v2562, %v2577
        %v2580 = vunpack.c.l.s4 1966171168
        %v2581 = vunpack.c.0.s8 %v2580
        %v2582 = vlaneseq
        %v2583 = vshrl.u32 %v2582, 7
        %v2584 = vsub.s32 %v2581, %v2583
        %v2585 = vrot.slane %v2563, %v2584
        %v2587 = vunpack.c.l.s4 1966171168
        %v2588 = vunpack.c.0.s8 %v2587
        %v2589 = vlaneseq
        %v2590 = vshrl.u32 %v2589, 7
        %v2591 = vsub.s32 %v2588, %v2590
        %v2592 = vrot.slane %v2564, %v2591
        %v2593 = vcombine.high %v2571, %v2571
        %v2594 = vcombine.high %v2578, %v2578
        %v2595 = vcombine.high %v2585, %v2585
        %v2596 = vcombine.high %v2592, %v2592
        %2605 = vst.msk [vmem:[#allocation8 + $0xe] sm:$0x1] %vm1610, %v2571
        %2606 = vst.msk [vmem:[#allocation8 + $0x1e] sm:$0x1] %vm1610, %v2585
        %2607 = vst.msk [vmem:[#allocation8 + $0x2e] sm:$0x1] %vm1610, %v2593
        %2608 = vst.msk [vmem:[#allocation8 + $0x3e] sm:$0x1] %vm1610, %v2595
        %2609 = vst.msk [vmem:[#allocation8 + $0x4e] sm:$0x1] %vm1610, %v2578
        %2610 = vst.msk [vmem:[#allocation8 + $0x5e] sm:$0x1] %vm1610, %v2592
        %2611 = vst.msk [vmem:[#allocation8 + $0x6e] sm:$0x1] %vm1610, %v2594
        %2612 = vst.msk [vmem:[#allocation8 + $0x7e] sm:$0x1] %vm1610, %v2596
        %2613 = vset.pattern.permute.xlu0 15
        %2614 = vperm.xlu0 %2613, %v1544
        %v2615 = vpop.permute.xlu0 %2614
        %v2617 = vmul.f32 %v2615, %v1545
        %v2619 = vcombine.high %v2617, %v2617
        %v2621 = vunpack.c.l.s4 1966171168
        %v2622 = vunpack.c.0.s8 %v2621
        %v2623 = vlaneseq
        %v2624 = vshrl.u32 %v2623, 7
        %v2625 = vsub.s32 %v2622, %v2624
        %v2626 = vrot.slane %v2617, %v2625
        %v2628 = vunpack.c.l.s4 1966171168
        %v2629 = vunpack.c.0.s8 %v2628
        %v2630 = vlaneseq
        %v2631 = vshrl.u32 %v2630, 7
        %v2632 = vsub.s32 %v2629, %v2631
        %v2633 = vrot.slane %v2619, %v2632
        %v2634 = vcombine.high %v2626, %v2626
        %v2635 = vcombine.high %v2633, %v2633
        %v2637 = vunpack.c.l.s4 1966171168
        %v2638 = vunpack.c.0.s8 %v2637
        %v2639 = vlaneseq
        %v2640 = vshrl.u32 %v2639, 7
        %v2641 = vsub.s32 %v2638, %v2640
        %v2642 = vrot.slane %v2626, %v2641
        %v2644 = vunpack.c.l.s4 1966171168
        %v2645 = vunpack.c.0.s8 %v2644
        %v2646 = vlaneseq
        %v2647 = vshrl.u32 %v2646, 7
        %v2648 = vsub.s32 %v2645, %v2647
        %v2649 = vrot.slane %v2633, %v2648
        %v2651 = vunpack.c.l.s4 1966171168
        %v2652 = vunpack.c.0.s8 %v2651
        %v2653 = vlaneseq
        %v2654 = vshrl.u32 %v2653, 7
        %v2655 = vsub.s32 %v2652, %v2654
        %v2656 = vrot.slane %v2634, %v2655
        %v2658 = vunpack.c.l.s4 1966171168
        %v2659 = vunpack.c.0.s8 %v2658
        %v2660 = vlaneseq
        %v2661 = vshrl.u32 %v2660, 7
        %v2662 = vsub.s32 %v2659, %v2661
        %v2663 = vrot.slane %v2635, %v2662
        %v2664 = vcombine.high %v2642, %v2642
        %v2665 = vcombine.high %v2649, %v2649
        %v2666 = vcombine.high %v2656, %v2656
        %v2667 = vcombine.high %v2663, %v2663
        %2676 = vst.msk [vmem:[#allocation8 + $0xf] sm:$0x1] %vm1610, %v2642
        %2677 = vst.msk [vmem:[#allocation8 + $0x1f] sm:$0x1] %vm1610, %v2656
        %2678 = vst.msk [vmem:[#allocation8 + $0x2f] sm:$0x1] %vm1610, %v2664
        %2679 = vst.msk [vmem:[#allocation8 + $0x3f] sm:$0x1] %vm1610, %v2666
        %2680 = vst.msk [vmem:[#allocation8 + $0x4f] sm:$0x1] %vm1610, %v2649
        %2681 = vst.msk [vmem:[#allocation8 + $0x5f] sm:$0x1] %vm1610, %v2663
        %2682 = vst.msk [vmem:[#allocation8 + $0x6f] sm:$0x1] %vm1610, %v2665
        %2683 = vst.msk [vmem:[#allocation8 + $0x7f] sm:$0x1] %vm1610, %v2667
        %v2684 = vlaneseq
        %v2685 = vshrl.u32 %v2684, 7
        %v2686 = vsub.s32 0, %v2685
        %v2687 = vrot.slane %v1542, %v2686
        %v2688 = vmul.f32 %v1540, %v2687
        %v2689 = vmul.f32 %v1541, %v2687
        %v2690 = vmul.f32 %v2688, 1.442695
        %v2691 = vpow.pop %v2690
        %v2692 = vmul.f32 %v2689, 1.442695
        %v2693 = vpow.pop %v2692
        %v2694 = vmul.f32 %v2691, 0.0
        %v2695 = vmul.f32 %v2693, 0.0
        %v2696 = vld [vmem:[#allocation8] sm:$0xff]
        %v2697 = vld [vmem:[#allocation8 + $0x8] sm:$0xff]
        %v2698 = vadd.f32 %v2694, %v2696
        %v2699 = vadd.f32 %v2695, %v2697
        %v2702 = vcombine.high %v2698, %v2698
        %v2704 = vunpack.c.l.s4 1966171168
        %v2705 = vunpack.c.0.s8 %v2704
        %v2706 = vlaneseq
        %v2707 = vshrl.u32 %v2706, 7
        %v2708 = vsub.s32 %v2705, %v2707
        %v2709 = vrot.slane %v2698, %v2708
        %v2711 = vunpack.c.l.s4 1966171168
        %v2712 = vunpack.c.0.s8 %v2711
        %v2713 = vlaneseq
        %v2714 = vshrl.u32 %v2713, 7
        %v2715 = vsub.s32 %v2712, %v2714
        %v2716 = vrot.slane %v2702, %v2715
        %v2717 = vcombine.high %v2709, %v2709
        %v2718 = vcombine.high %v2716, %v2716
        %v2720 = vunpack.c.l.s4 1966171168
        %v2721 = vunpack.c.0.s8 %v2720
        %v2722 = vlaneseq
        %v2723 = vshrl.u32 %v2722, 7
        %v2724 = vsub.s32 %v2721, %v2723
        %v2725 = vrot.slane %v2709, %v2724
        %v2727 = vunpack.c.l.s4 1966171168
        %v2728 = vunpack.c.0.s8 %v2727
        %v2729 = vlaneseq
        %v2730 = vshrl.u32 %v2729, 7
        %v2731 = vsub.s32 %v2728, %v2730
        %v2732 = vrot.slane %v2716, %v2731
        %v2734 = vunpack.c.l.s4 1966171168
        %v2735 = vunpack.c.0.s8 %v2734
        %v2736 = vlaneseq
        %v2737 = vshrl.u32 %v2736, 7
        %v2738 = vsub.s32 %v2735, %v2737
        %v2739 = vrot.slane %v2717, %v2738
        %v2741 = vunpack.c.l.s4 1966171168
        %v2742 = vunpack.c.0.s8 %v2741
        %v2743 = vlaneseq
        %v2744 = vshrl.u32 %v2743, 7
        %v2745 = vsub.s32 %v2742, %v2744
        %v2746 = vrot.slane %v2718, %v2745
        %v2747 = vcombine.high %v2725, %v2725
        %v2748 = vcombine.high %v2732, %v2732
        %v2749 = vcombine.high %v2739, %v2739
        %v2750 = vcombine.high %v2746, %v2746
        %v2751 = vcombine.high %v2699, %v2699
        %v2753 = vunpack.c.l.s4 1966171168
        %v2754 = vunpack.c.0.s8 %v2753
        %v2755 = vlaneseq
        %v2756 = vshrl.u32 %v2755, 7
        %v2757 = vsub.s32 %v2754, %v2756
        %v2758 = vrot.slane %v2699, %v2757
        %v2760 = vunpack.c.l.s4 1966171168
        %v2761 = vunpack.c.0.s8 %v2760
        %v2762 = vlaneseq
        %v2763 = vshrl.u32 %v2762, 7
        %v2764 = vsub.s32 %v2761, %v2763
        %v2765 = vrot.slane %v2751, %v2764
        %v2766 = vcombine.high %v2758, %v2758
        %v2767 = vcombine.high %v2765, %v2765
        %v2769 = vunpack.c.l.s4 1966171168
        %v2770 = vunpack.c.0.s8 %v2769
        %v2771 = vlaneseq
        %v2772 = vshrl.u32 %v2771, 7
        %v2773 = vsub.s32 %v2770, %v2772
        %v2774 = vrot.slane %v2758, %v2773
        %v2776 = vunpack.c.l.s4 1966171168
        %v2777 = vunpack.c.0.s8 %v2776
        %v2778 = vlaneseq
        %v2779 = vshrl.u32 %v2778, 7
        %v2780 = vsub.s32 %v2777, %v2779
        %v2781 = vrot.slane %v2765, %v2780
        %v2783 = vunpack.c.l.s4 1966171168
        %v2784 = vunpack.c.0.s8 %v2783
        %v2785 = vlaneseq
        %v2786 = vshrl.u32 %v2785, 7
        %v2787 = vsub.s32 %v2784, %v2786
        %v2788 = vrot.slane %v2766, %v2787
        %v2790 = vunpack.c.l.s4 1966171168
        %v2791 = vunpack.c.0.s8 %v2790
        %v2792 = vlaneseq
        %v2793 = vshrl.u32 %v2792, 7
        %v2794 = vsub.s32 %v2791, %v2793
        %v2795 = vrot.slane %v2767, %v2794
        %v2796 = vcombine.high %v2774, %v2774
        %v2797 = vcombine.high %v2781, %v2781
        %v2798 = vcombine.high %v2788, %v2788
        %v2799 = vcombine.high %v2795, %v2795
        %2816 = vst.msk [vmem:[#allocation9] sm:$0x1] %vm1610, %v2725
        %2817 = vst.msk [vmem:[#allocation9 + $0x8] sm:$0x1] %vm1610, %v2739
        %2818 = vst.msk [vmem:[#allocation9 + $0x10] sm:$0x1] %vm1610, %v2747
        %2819 = vst.msk [vmem:[#allocation9 + $0x18] sm:$0x1] %vm1610, %v2749
        %2820 = vst.msk [vmem:[#allocation9 + $0x20] sm:$0x1] %vm1610, %v2732
        %2821 = vst.msk [vmem:[#allocation9 + $0x28] sm:$0x1] %vm1610, %v2746
        %2822 = vst.msk [vmem:[#allocation9 + $0x30] sm:$0x1] %vm1610, %v2748
        %2823 = vst.msk [vmem:[#allocation9 + $0x38] sm:$0x1] %vm1610, %v2750
        %2824 = vst.msk [vmem:[#allocation9 + $0x40] sm:$0x1] %vm1610, %v2774
        %2825 = vst.msk [vmem:[#allocation9 + $0x48] sm:$0x1] %vm1610, %v2788
        %2826 = vst.msk [vmem:[#allocation9 + $0x50] sm:$0x1] %vm1610, %v2796
        %2827 = vst.msk [vmem:[#allocation9 + $0x58] sm:$0x1] %vm1610, %v2798
        %2828 = vst.msk [vmem:[#allocation9 + $0x60] sm:$0x1] %vm1610, %v2781
        %2829 = vst.msk [vmem:[#allocation9 + $0x68] sm:$0x1] %vm1610, %v2795
        %2830 = vst.msk [vmem:[#allocation9 + $0x70] sm:$0x1] %vm1610, %v2797
        %2831 = vst.msk [vmem:[#allocation9 + $0x78] sm:$0x1] %vm1610, %v2799
        %v2832 = vlaneseq
        %v2833 = vshrl.u32 %v2832, 7
        %v2834 = vsub.s32 1, %v2833
        %v2835 = vrot.slane %v1542, %v2834
        %v2836 = vmul.f32 %v1540, %v2835
        %v2837 = vmul.f32 %v1541, %v2835
        %v2838 = vmul.f32 %v2836, 1.442695
        %v2839 = vpow.pop %v2838
        %v2840 = vmul.f32 %v2837, 1.442695
        %v2841 = vpow.pop %v2840
        %v2842 = vmul.f32 %v2839, %v2698
        %v2843 = vmul.f32 %v2841, %v2699
        %s2844 = scalar_lea.vmem [#allocation8], 16
        %v2845 = vld [vmem:[%s2844] sm:$0xff]
        %v2846 = vld [vmem:[%s2844 + $0x8] sm:$0xff]
        %v2847 = vadd.f32 %v2842, %v2845
        %v2848 = vadd.f32 %v2843, %v2846
        %v2851 = vcombine.high %v2847, %v2847
        %v2853 = vunpack.c.l.s4 1966171168
        %v2854 = vunpack.c.0.s8 %v2853
        %v2855 = vlaneseq
        %v2856 = vshrl.u32 %v2855, 7
        %v2857 = vsub.s32 %v2854, %v2856
        %v2858 = vrot.slane %v2847, %v2857
        %v2860 = vunpack.c.l.s4 1966171168
        %v2861 = vunpack.c.0.s8 %v2860
        %v2862 = vlaneseq
        %v2863 = vshrl.u32 %v2862, 7
        %v2864 = vsub.s32 %v2861, %v2863
        %v2865 = vrot.slane %v2851, %v2864
        %v2866 = vcombine.high %v2858, %v2858
        %v2867 = vcombine.high %v2865, %v2865
        %v2869 = vunpack.c.l.s4 1966171168
        %v2870 = vunpack.c.0.s8 %v2869
        %v2871 = vlaneseq
        %v2872 = vshrl.u32 %v2871, 7
        %v2873 = vsub.s32 %v2870, %v2872
        %v2874 = vrot.slane %v2858, %v2873
        %v2876 = vunpack.c.l.s4 1966171168
        %v2877 = vunpack.c.0.s8 %v2876
        %v2878 = vlaneseq
        %v2879 = vshrl.u32 %v2878, 7
        %v2880 = vsub.s32 %v2877, %v2879
        %v2881 = vrot.slane %v2865, %v2880
        %v2883 = vunpack.c.l.s4 1966171168
        %v2884 = vunpack.c.0.s8 %v2883
        %v2885 = vlaneseq
        %v2886 = vshrl.u32 %v2885, 7
        %v2887 = vsub.s32 %v2884, %v2886
        %v2888 = vrot.slane %v2866, %v2887
        %v2890 = vunpack.c.l.s4 1966171168
        %v2891 = vunpack.c.0.s8 %v2890
        %v2892 = vlaneseq
        %v2893 = vshrl.u32 %v2892, 7
        %v2894 = vsub.s32 %v2891, %v2893
        %v2895 = vrot.slane %v2867, %v2894
        %v2896 = vcombine.high %v2874, %v2874
        %v2897 = vcombine.high %v2881, %v2881
        %v2898 = vcombine.high %v2888, %v2888
        %v2899 = vcombine.high %v2895, %v2895
        %v2900 = vcombine.high %v2848, %v2848
        %v2902 = vunpack.c.l.s4 1966171168
        %v2903 = vunpack.c.0.s8 %v2902
        %v2904 = vlaneseq
        %v2905 = vshrl.u32 %v2904, 7
        %v2906 = vsub.s32 %v2903, %v2905
        %v2907 = vrot.slane %v2848, %v2906
        %v2909 = vunpack.c.l.s4 1966171168
        %v2910 = vunpack.c.0.s8 %v2909
        %v2911 = vlaneseq
        %v2912 = vshrl.u32 %v2911, 7
        %v2913 = vsub.s32 %v2910, %v2912
        %v2914 = vrot.slane %v2900, %v2913
        %v2915 = vcombine.high %v2907, %v2907
        %v2916 = vcombine.high %v2914, %v2914
        %v2918 = vunpack.c.l.s4 1966171168
        %v2919 = vunpack.c.0.s8 %v2918
        %v2920 = vlaneseq
        %v2921 = vshrl.u32 %v2920, 7
        %v2922 = vsub.s32 %v2919, %v2921
        %v2923 = vrot.slane %v2907, %v2922
        %v2925 = vunpack.c.l.s4 1966171168
        %v2926 = vunpack.c.0.s8 %v2925
        %v2927 = vlaneseq
        %v2928 = vshrl.u32 %v2927, 7
        %v2929 = vsub.s32 %v2926, %v2928
        %v2930 = vrot.slane %v2914, %v2929
        %v2932 = vunpack.c.l.s4 1966171168
        %v2933 = vunpack.c.0.s8 %v2932
        %v2934 = vlaneseq
        %v2935 = vshrl.u32 %v2934, 7
        %v2936 = vsub.s32 %v2933, %v2935
        %v2937 = vrot.slane %v2915, %v2936
        %v2939 = vunpack.c.l.s4 1966171168
        %v2940 = vunpack.c.0.s8 %v2939
        %v2941 = vlaneseq
        %v2942 = vshrl.u32 %v2941, 7
        %v2943 = vsub.s32 %v2940, %v2942
        %v2944 = vrot.slane %v2916, %v2943
        %v2945 = vcombine.high %v2923, %v2923
        %v2946 = vcombine.high %v2930, %v2930
        %v2947 = vcombine.high %v2937, %v2937
        %v2948 = vcombine.high %v2944, %v2944
        %2965 = vst.msk [vmem:[#allocation9 + $0x1] sm:$0x1] %vm1610, %v2874
        %2966 = vst.msk [vmem:[#allocation9 + $0x9] sm:$0x1] %vm1610, %v2888
        %2967 = vst.msk [vmem:[#allocation9 + $0x11] sm:$0x1] %vm1610, %v2896
        %2968 = vst.msk [vmem:[#allocation9 + $0x19] sm:$0x1] %vm1610, %v2898
        %2969 = vst.msk [vmem:[#allocation9 + $0x21] sm:$0x1] %vm1610, %v2881
        %2970 = vst.msk [vmem:[#allocation9 + $0x29] sm:$0x1] %vm1610, %v2895
        %2971 = vst.msk [vmem:[#allocation9 + $0x31] sm:$0x1] %vm1610, %v2897
        %2972 = vst.msk [vmem:[#allocation9 + $0x39] sm:$0x1] %vm1610, %v2899
        %2973 = vst.msk [vmem:[#allocation9 + $0x41] sm:$0x1] %vm1610, %v2923
        %2974 = vst.msk [vmem:[#allocation9 + $0x49] sm:$0x1] %vm1610, %v2937
        %2975 = vst.msk [vmem:[#allocation9 + $0x51] sm:$0x1] %vm1610, %v2945
        %2976 = vst.msk [vmem:[#allocation9 + $0x59] sm:$0x1] %vm1610, %v2947
        %2977 = vst.msk [vmem:[#allocation9 + $0x61] sm:$0x1] %vm1610, %v2930
        %2978 = vst.msk [vmem:[#allocation9 + $0x69] sm:$0x1] %vm1610, %v2944
        %2979 = vst.msk [vmem:[#allocation9 + $0x71] sm:$0x1] %vm1610, %v2946
        %2980 = vst.msk [vmem:[#allocation9 + $0x79] sm:$0x1] %vm1610, %v2948
        %v2981 = vlaneseq
        %v2982 = vshrl.u32 %v2981, 7
        %v2983 = vsub.s32 2, %v2982
        %v2984 = vrot.slane %v1542, %v2983
        %v2985 = vmul.f32 %v1540, %v2984
        %v2986 = vmul.f32 %v1541, %v2984
        %v2987 = vmul.f32 %v2985, 1.442695
        %v2988 = vpow.pop %v2987
        %v2989 = vmul.f32 %v2986, 1.442695
        %v2990 = vpow.pop %v2989
        %v2991 = vmul.f32 %v2988, %v2847
        %v2992 = vmul.f32 %v2990, %v2848
        %s2993 = scalar_lea.vmem [#allocation8], 32
        %v2994 = vld [vmem:[%s2993] sm:$0xff]
        %v2995 = vld [vmem:[%s2993 + $0x8] sm:$0xff]
        %v2996 = vadd.f32 %v2991, %v2994
        %v2997 = vadd.f32 %v2992, %v2995
        %v3000 = vcombine.high %v2996, %v2996
        %v3002 = vunpack.c.l.s4 1966171168
        %v3003 = vunpack.c.0.s8 %v3002
        %v3004 = vlaneseq
        %v3005 = vshrl.u32 %v3004, 7
        %v3006 = vsub.s32 %v3003, %v3005
        %v3007 = vrot.slane %v2996, %v3006
        %v3009 = vunpack.c.l.s4 1966171168
        %v3010 = vunpack.c.0.s8 %v3009
        %v3011 = vlaneseq
        %v3012 = vshrl.u32 %v3011, 7
        %v3013 = vsub.s32 %v3010, %v3012
        %v3014 = vrot.slane %v3000, %v3013
        %v3015 = vcombine.high %v3007, %v3007
        %v3016 = vcombine.high %v3014, %v3014
        %v3018 = vunpack.c.l.s4 1966171168
        %v3019 = vunpack.c.0.s8 %v3018
        %v3020 = vlaneseq
        %v3021 = vshrl.u32 %v3020, 7
        %v3022 = vsub.s32 %v3019, %v3021
        %v3023 = vrot.slane %v3007, %v3022
        %v3025 = vunpack.c.l.s4 1966171168
        %v3026 = vunpack.c.0.s8 %v3025
        %v3027 = vlaneseq
        %v3028 = vshrl.u32 %v3027, 7
        %v3029 = vsub.s32 %v3026, %v3028
        %v3030 = vrot.slane %v3014, %v3029
        %v3032 = vunpack.c.l.s4 1966171168
        %v3033 = vunpack.c.0.s8 %v3032
        %v3034 = vlaneseq
        %v3035 = vshrl.u32 %v3034, 7
        %v3036 = vsub.s32 %v3033, %v3035
        %v3037 = vrot.slane %v3015, %v3036
        %v3039 = vunpack.c.l.s4 1966171168
        %v3040 = vunpack.c.0.s8 %v3039
        %v3041 = vlaneseq
        %v3042 = vshrl.u32 %v3041, 7
        %v3043 = vsub.s32 %v3040, %v3042
        %v3044 = vrot.slane %v3016, %v3043
        %v3045 = vcombine.high %v3023, %v3023
        %v3046 = vcombine.high %v3030, %v3030
        %v3047 = vcombine.high %v3037, %v3037
        %v3048 = vcombine.high %v3044, %v3044
        %v3049 = vcombine.high %v2997, %v2997
        %v3051 = vunpack.c.l.s4 1966171168
        %v3052 = vunpack.c.0.s8 %v3051
        %v3053 = vlaneseq
        %v3054 = vshrl.u32 %v3053, 7
        %v3055 = vsub.s32 %v3052, %v3054
        %v3056 = vrot.slane %v2997, %v3055
        %v3058 = vunpack.c.l.s4 1966171168
        %v3059 = vunpack.c.0.s8 %v3058
        %v3060 = vlaneseq
        %v3061 = vshrl.u32 %v3060, 7
        %v3062 = vsub.s32 %v3059, %v3061
        %v3063 = vrot.slane %v3049, %v3062
        %v3064 = vcombine.high %v3056, %v3056
        %v3065 = vcombine.high %v3063, %v3063
        %v3067 = vunpack.c.l.s4 1966171168
        %v3068 = vunpack.c.0.s8 %v3067
        %v3069 = vlaneseq
        %v3070 = vshrl.u32 %v3069, 7
        %v3071 = vsub.s32 %v3068, %v3070
        %v3072 = vrot.slane %v3056, %v3071
        %v3074 = vunpack.c.l.s4 1966171168
        %v3075 = vunpack.c.0.s8 %v3074
        %v3076 = vlaneseq
        %v3077 = vshrl.u32 %v3076, 7
        %v3078 = vsub.s32 %v3075, %v3077
        %v3079 = vrot.slane %v3063, %v3078
        %v3081 = vunpack.c.l.s4 1966171168
        %v3082 = vunpack.c.0.s8 %v3081
        %v3083 = vlaneseq
        %v3084 = vshrl.u32 %v3083, 7
        %v3085 = vsub.s32 %v3082, %v3084
        %v3086 = vrot.slane %v3064, %v3085
        %v3088 = vunpack.c.l.s4 1966171168
        %v3089 = vunpack.c.0.s8 %v3088
        %v3090 = vlaneseq
        %v3091 = vshrl.u32 %v3090, 7
        %v3092 = vsub.s32 %v3089, %v3091
        %v3093 = vrot.slane %v3065, %v3092
        %v3094 = vcombine.high %v3072, %v3072
        %v3095 = vcombine.high %v3079, %v3079
        %v3096 = vcombine.high %v3086, %v3086
        %v3097 = vcombine.high %v3093, %v3093
        %3114 = vst.msk [vmem:[#allocation9 + $0x2] sm:$0x1] %vm1610, %v3023
        %3115 = vst.msk [vmem:[#allocation9 + $0xa] sm:$0x1] %vm1610, %v3037
        %3116 = vst.msk [vmem:[#allocation9 + $0x12] sm:$0x1] %vm1610, %v3045
        %3117 = vst.msk [vmem:[#allocation9 + $0x1a] sm:$0x1] %vm1610, %v3047
        %3118 = vst.msk [vmem:[#allocation9 + $0x22] sm:$0x1] %vm1610, %v3030
        %3119 = vst.msk [vmem:[#allocation9 + $0x2a] sm:$0x1] %vm1610, %v3044
        %3120 = vst.msk [vmem:[#allocation9 + $0x32] sm:$0x1] %vm1610, %v3046
        %3121 = vst.msk [vmem:[#allocation9 + $0x3a] sm:$0x1] %vm1610, %v3048
        %3122 = vst.msk [vmem:[#allocation9 + $0x42] sm:$0x1] %vm1610, %v3072
        %3123 = vst.msk [vmem:[#allocation9 + $0x4a] sm:$0x1] %vm1610, %v3086
        %3124 = vst.msk [vmem:[#allocation9 + $0x52] sm:$0x1] %vm1610, %v3094
        %3125 = vst.msk [vmem:[#allocation9 + $0x5a] sm:$0x1] %vm1610, %v3096
        %3126 = vst.msk [vmem:[#allocation9 + $0x62] sm:$0x1] %vm1610, %v3079
        %3127 = vst.msk [vmem:[#allocation9 + $0x6a] sm:$0x1] %vm1610, %v3093
        %3128 = vst.msk [vmem:[#allocation9 + $0x72] sm:$0x1] %vm1610, %v3095
        %3129 = vst.msk [vmem:[#allocation9 + $0x7a] sm:$0x1] %vm1610, %v3097
        %v3130 = vlaneseq
        %v3131 = vshrl.u32 %v3130, 7
        %v3132 = vsub.s32 3, %v3131
        %v3133 = vrot.slane %v1542, %v3132
        %v3134 = vmul.f32 %v1540, %v3133
        %v3135 = vmul.f32 %v1541, %v3133
        %v3136 = vmul.f32 %v3134, 1.442695
        %v3137 = vpow.pop %v3136
        %v3138 = vmul.f32 %v3135, 1.442695
        %v3139 = vpow.pop %v3138
        %v3140 = vmul.f32 %v3137, %v2996
        %v3141 = vmul.f32 %v3139, %v2997
        %s3142 = scalar_lea.vmem [#allocation8], 48
        %v3143 = vld [vmem:[%s3142] sm:$0xff]
        %v3144 = vld [vmem:[%s3142 + $0x8] sm:$0xff]
        %v3145 = vadd.f32 %v3140, %v3143
        %v3146 = vadd.f32 %v3141, %v3144
        %v3149 = vcombine.high %v3145, %v3145
        %v3151 = vunpack.c.l.s4 1966171168
        %v3152 = vunpack.c.0.s8 %v3151
        %v3153 = vlaneseq
        %v3154 = vshrl.u32 %v3153, 7
        %v3155 = vsub.s32 %v3152, %v3154
        %v3156 = vrot.slane %v3145, %v3155
        %v3158 = vunpack.c.l.s4 1966171168
        %v3159 = vunpack.c.0.s8 %v3158
        %v3160 = vlaneseq
        %v3161 = vshrl.u32 %v3160, 7
        %v3162 = vsub.s32 %v3159, %v3161
        %v3163 = vrot.slane %v3149, %v3162
        %v3164 = vcombine.high %v3156, %v3156
        %v3165 = vcombine.high %v3163, %v3163
        %v3167 = vunpack.c.l.s4 1966171168
        %v3168 = vunpack.c.0.s8 %v3167
        %v3169 = vlaneseq
        %v3170 = vshrl.u32 %v3169, 7
        %v3171 = vsub.s32 %v3168, %v3170
        %v3172 = vrot.slane %v3156, %v3171
        %v3174 = vunpack.c.l.s4 1966171168
        %v3175 = vunpack.c.0.s8 %v3174
        %v3176 = vlaneseq
        %v3177 = vshrl.u32 %v3176, 7
        %v3178 = vsub.s32 %v3175, %v3177
        %v3179 = vrot.slane %v3163, %v3178
        %v3181 = vunpack.c.l.s4 1966171168
        %v3182 = vunpack.c.0.s8 %v3181
        %v3183 = vlaneseq
        %v3184 = vshrl.u32 %v3183, 7
        %v3185 = vsub.s32 %v3182, %v3184
        %v3186 = vrot.slane %v3164, %v3185
        %v3188 = vunpack.c.l.s4 1966171168
        %v3189 = vunpack.c.0.s8 %v3188
        %v3190 = vlaneseq
        %v3191 = vshrl.u32 %v3190, 7
        %v3192 = vsub.s32 %v3189, %v3191
        %v3193 = vrot.slane %v3165, %v3192
        %v3194 = vcombine.high %v3172, %v3172
        %v3195 = vcombine.high %v3179, %v3179
        %v3196 = vcombine.high %v3186, %v3186
        %v3197 = vcombine.high %v3193, %v3193
        %v3198 = vcombine.high %v3146, %v3146
        %v3200 = vunpack.c.l.s4 1966171168
        %v3201 = vunpack.c.0.s8 %v3200
        %v3202 = vlaneseq
        %v3203 = vshrl.u32 %v3202, 7
        %v3204 = vsub.s32 %v3201, %v3203
        %v3205 = vrot.slane %v3146, %v3204
        %v3207 = vunpack.c.l.s4 1966171168
        %v3208 = vunpack.c.0.s8 %v3207
        %v3209 = vlaneseq
        %v3210 = vshrl.u32 %v3209, 7
        %v3211 = vsub.s32 %v3208, %v3210
        %v3212 = vrot.slane %v3198, %v3211
        %v3213 = vcombine.high %v3205, %v3205
        %v3214 = vcombine.high %v3212, %v3212
        %v3216 = vunpack.c.l.s4 1966171168
        %v3217 = vunpack.c.0.s8 %v3216
        %v3218 = vlaneseq
        %v3219 = vshrl.u32 %v3218, 7
        %v3220 = vsub.s32 %v3217, %v3219
        %v3221 = vrot.slane %v3205, %v3220
        %v3223 = vunpack.c.l.s4 1966171168
        %v3224 = vunpack.c.0.s8 %v3223
        %v3225 = vlaneseq
        %v3226 = vshrl.u32 %v3225, 7
        %v3227 = vsub.s32 %v3224, %v3226
        %v3228 = vrot.slane %v3212, %v3227
        %v3230 = vunpack.c.l.s4 1966171168
        %v3231 = vunpack.c.0.s8 %v3230
        %v3232 = vlaneseq
        %v3233 = vshrl.u32 %v3232, 7
        %v3234 = vsub.s32 %v3231, %v3233
        %v3235 = vrot.slane %v3213, %v3234
        %v3237 = vunpack.c.l.s4 1966171168
        %v3238 = vunpack.c.0.s8 %v3237
        %v3239 = vlaneseq
        %v3240 = vshrl.u32 %v3239, 7
        %v3241 = vsub.s32 %v3238, %v3240
        %v3242 = vrot.slane %v3214, %v3241
        %v3243 = vcombine.high %v3221, %v3221
        %v3244 = vcombine.high %v3228, %v3228
        %v3245 = vcombine.high %v3235, %v3235
        %v3246 = vcombine.high %v3242, %v3242
        %3263 = vst.msk [vmem:[#allocation9 + $0x3] sm:$0x1] %vm1610, %v3172
        %3264 = vst.msk [vmem:[#allocation9 + $0xb] sm:$0x1] %vm1610, %v3186
        %3265 = vst.msk [vmem:[#allocation9 + $0x13] sm:$0x1] %vm1610, %v3194
        %3266 = vst.msk [vmem:[#allocation9 + $0x1b] sm:$0x1] %vm1610, %v3196
        %3267 = vst.msk [vmem:[#allocation9 + $0x23] sm:$0x1] %vm1610, %v3179
        %3268 = vst.msk [vmem:[#allocation9 + $0x2b] sm:$0x1] %vm1610, %v3193
        %3269 = vst.msk [vmem:[#allocation9 + $0x33] sm:$0x1] %vm1610, %v3195
        %3270 = vst.msk [vmem:[#allocation9 + $0x3b] sm:$0x1] %vm1610, %v3197
        %3271 = vst.msk [vmem:[#allocation9 + $0x43] sm:$0x1] %vm1610, %v3221
        %3272 = vst.msk [vmem:[#allocation9 + $0x4b] sm:$0x1] %vm1610, %v3235
        %3273 = vst.msk [vmem:[#allocation9 + $0x53] sm:$0x1] %vm1610, %v3243
        %3274 = vst.msk [vmem:[#allocation9 + $0x5b] sm:$0x1] %vm1610, %v3245
        %3275 = vst.msk [vmem:[#allocation9 + $0x63] sm:$0x1] %vm1610, %v3228
        %3276 = vst.msk [vmem:[#allocation9 + $0x6b] sm:$0x1] %vm1610, %v3242
        %3277 = vst.msk [vmem:[#allocation9 + $0x73] sm:$0x1] %vm1610, %v3244
        %3278 = vst.msk [vmem:[#allocation9 + $0x7b] sm:$0x1] %vm1610, %v3246
        %v3279 = vlaneseq
        %v3280 = vshrl.u32 %v3279, 7
        %v3281 = vsub.s32 4, %v3280
        %v3282 = vrot.slane %v1542, %v3281
        %v3283 = vmul.f32 %v1540, %v3282
        %v3284 = vmul.f32 %v1541, %v3282
        %v3285 = vmul.f32 %v3283, 1.442695
        %v3286 = vpow.pop %v3285
        %v3287 = vmul.f32 %v3284, 1.442695
        %v3288 = vpow.pop %v3287
        %v3289 = vmul.f32 %v3286, %v3145
        %v3290 = vmul.f32 %v3288, %v3146
        %s3291 = scalar_lea.vmem [#allocation8], 64
        %v3292 = vld [vmem:[%s3291] sm:$0xff]
        %v3293 = vld [vmem:[%s3291 + $0x8] sm:$0xff]
        %v3294 = vadd.f32 %v3289, %v3292
        %v3295 = vadd.f32 %v3290, %v3293
        %v3298 = vcombine.high %v3294, %v3294
        %v3300 = vunpack.c.l.s4 1966171168
        %v3301 = vunpack.c.0.s8 %v3300
        %v3302 = vlaneseq
        %v3303 = vshrl.u32 %v3302, 7
        %v3304 = vsub.s32 %v3301, %v3303
        %v3305 = vrot.slane %v3294, %v3304
        %v3307 = vunpack.c.l.s4 1966171168
        %v3308 = vunpack.c.0.s8 %v3307
        %v3309 = vlaneseq
        %v3310 = vshrl.u32 %v3309, 7
        %v3311 = vsub.s32 %v3308, %v3310
        %v3312 = vrot.slane %v3298, %v3311
        %v3313 = vcombine.high %v3305, %v3305
        %v3314 = vcombine.high %v3312, %v3312
        %v3316 = vunpack.c.l.s4 1966171168
        %v3317 = vunpack.c.0.s8 %v3316
        %v3318 = vlaneseq
        %v3319 = vshrl.u32 %v3318, 7
        %v3320 = vsub.s32 %v3317, %v3319
        %v3321 = vrot.slane %v3305, %v3320
        %v3323 = vunpack.c.l.s4 1966171168
        %v3324 = vunpack.c.0.s8 %v3323
        %v3325 = vlaneseq
        %v3326 = vshrl.u32 %v3325, 7
        %v3327 = vsub.s32 %v3324, %v3326
        %v3328 = vrot.slane %v3312, %v3327
        %v3330 = vunpack.c.l.s4 1966171168
        %v3331 = vunpack.c.0.s8 %v3330
        %v3332 = vlaneseq
        %v3333 = vshrl.u32 %v3332, 7
        %v3334 = vsub.s32 %v3331, %v3333
        %v3335 = vrot.slane %v3313, %v3334
        %v3337 = vunpack.c.l.s4 1966171168
        %v3338 = vunpack.c.0.s8 %v3337
        %v3339 = vlaneseq
        %v3340 = vshrl.u32 %v3339, 7
        %v3341 = vsub.s32 %v3338, %v3340
        %v3342 = vrot.slane %v3314, %v3341
        %v3343 = vcombine.high %v3321, %v3321
        %v3344 = vcombine.high %v3328, %v3328
        %v3345 = vcombine.high %v3335, %v3335
        %v3346 = vcombine.high %v3342, %v3342
        %v3347 = vcombine.high %v3295, %v3295
        %v3349 = vunpack.c.l.s4 1966171168
        %v3350 = vunpack.c.0.s8 %v3349
        %v3351 = vlaneseq
        %v3352 = vshrl.u32 %v3351, 7
        %v3353 = vsub.s32 %v3350, %v3352
        %v3354 = vrot.slane %v3295, %v3353
        %v3356 = vunpack.c.l.s4 1966171168
        %v3357 = vunpack.c.0.s8 %v3356
        %v3358 = vlaneseq
        %v3359 = vshrl.u32 %v3358, 7
        %v3360 = vsub.s32 %v3357, %v3359
        %v3361 = vrot.slane %v3347, %v3360
        %v3362 = vcombine.high %v3354, %v3354
        %v3363 = vcombine.high %v3361, %v3361
        %v3365 = vunpack.c.l.s4 1966171168
        %v3366 = vunpack.c.0.s8 %v3365
        %v3367 = vlaneseq
        %v3368 = vshrl.u32 %v3367, 7
        %v3369 = vsub.s32 %v3366, %v3368
        %v3370 = vrot.slane %v3354, %v3369
        %v3372 = vunpack.c.l.s4 1966171168
        %v3373 = vunpack.c.0.s8 %v3372
        %v3374 = vlaneseq
        %v3375 = vshrl.u32 %v3374, 7
        %v3376 = vsub.s32 %v3373, %v3375
        %v3377 = vrot.slane %v3361, %v3376
        %v3379 = vunpack.c.l.s4 1966171168
        %v3380 = vunpack.c.0.s8 %v3379
        %v3381 = vlaneseq
        %v3382 = vshrl.u32 %v3381, 7
        %v3383 = vsub.s32 %v3380, %v3382
        %v3384 = vrot.slane %v3362, %v3383
        %v3386 = vunpack.c.l.s4 1966171168
        %v3387 = vunpack.c.0.s8 %v3386
        %v3388 = vlaneseq
        %v3389 = vshrl.u32 %v3388, 7
        %v3390 = vsub.s32 %v3387, %v3389
        %v3391 = vrot.slane %v3363, %v3390
        %v3392 = vcombine.high %v3370, %v3370
        %v3393 = vcombine.high %v3377, %v3377
        %v3394 = vcombine.high %v3384, %v3384
        %v3395 = vcombine.high %v3391, %v3391
        %3412 = vst.msk [vmem:[#allocation9 + $0x4] sm:$0x1] %vm1610, %v3321
        %3413 = vst.msk [vmem:[#allocation9 + $0xc] sm:$0x1] %vm1610, %v3335
        %3414 = vst.msk [vmem:[#allocation9 + $0x14] sm:$0x1] %vm1610, %v3343
        %3415 = vst.msk [vmem:[#allocation9 + $0x1c] sm:$0x1] %vm1610, %v3345
        %3416 = vst.msk [vmem:[#allocation9 + $0x24] sm:$0x1] %vm1610, %v3328
        %3417 = vst.msk [vmem:[#allocation9 + $0x2c] sm:$0x1] %vm1610, %v3342
        %3418 = vst.msk [vmem:[#allocation9 + $0x34] sm:$0x1] %vm1610, %v3344
        %3419 = vst.msk [vmem:[#allocation9 + $0x3c] sm:$0x1] %vm1610, %v3346
        %3420 = vst.msk [vmem:[#allocation9 + $0x44] sm:$0x1] %vm1610, %v3370
        %3421 = vst.msk [vmem:[#allocation9 + $0x4c] sm:$0x1] %vm1610, %v3384
        %3422 = vst.msk [vmem:[#allocation9 + $0x54] sm:$0x1] %vm1610, %v3392
        %3423 = vst.msk [vmem:[#allocation9 + $0x5c] sm:$0x1] %vm1610, %v3394
        %3424 = vst.msk [vmem:[#allocation9 + $0x64] sm:$0x1] %vm1610, %v3377
        %3425 = vst.msk [vmem:[#allocation9 + $0x6c] sm:$0x1] %vm1610, %v3391
        %3426 = vst.msk [vmem:[#allocation9 + $0x74] sm:$0x1] %vm1610, %v3393
        %3427 = vst.msk [vmem:[#allocation9 + $0x7c] sm:$0x1] %vm1610, %v3395
        %v3428 = vlaneseq
        %v3429 = vshrl.u32 %v3428, 7
        %v3430 = vsub.s32 5, %v3429
        %v3431 = vrot.slane %v1542, %v3430
        %v3432 = vmul.f32 %v1540, %v3431
        %v3433 = vmul.f32 %v1541, %v3431
        %v3434 = vmul.f32 %v3432, 1.442695
        %v3435 = vpow.pop %v3434
        %v3436 = vmul.f32 %v3433, 1.442695
        %v3437 = vpow.pop %v3436
        %v3438 = vmul.f32 %v3435, %v3294
        %v3439 = vmul.f32 %v3437, %v3295
        %s3440 = scalar_lea.vmem [#allocation8], 80
        %v3441 = vld [vmem:[%s3440] sm:$0xff]
        %v3442 = vld [vmem:[%s3440 + $0x8] sm:$0xff]
        %v3443 = vadd.f32 %v3438, %v3441
        %v3444 = vadd.f32 %v3439, %v3442
        %v3447 = vcombine.high %v3443, %v3443
        %v3449 = vunpack.c.l.s4 1966171168
        %v3450 = vunpack.c.0.s8 %v3449
        %v3451 = vlaneseq
        %v3452 = vshrl.u32 %v3451, 7
        %v3453 = vsub.s32 %v3450, %v3452
        %v3454 = vrot.slane %v3443, %v3453
        %v3456 = vunpack.c.l.s4 1966171168
        %v3457 = vunpack.c.0.s8 %v3456
        %v3458 = vlaneseq
        %v3459 = vshrl.u32 %v3458, 7
        %v3460 = vsub.s32 %v3457, %v3459
        %v3461 = vrot.slane %v3447, %v3460
        %v3462 = vcombine.high %v3454, %v3454
        %v3463 = vcombine.high %v3461, %v3461
        %v3465 = vunpack.c.l.s4 1966171168
        %v3466 = vunpack.c.0.s8 %v3465
        %v3467 = vlaneseq
        %v3468 = vshrl.u32 %v3467, 7
        %v3469 = vsub.s32 %v3466, %v3468
        %v3470 = vrot.slane %v3454, %v3469
        %v3472 = vunpack.c.l.s4 1966171168
        %v3473 = vunpack.c.0.s8 %v3472
        %v3474 = vlaneseq
        %v3475 = vshrl.u32 %v3474, 7
        %v3476 = vsub.s32 %v3473, %v3475
        %v3477 = vrot.slane %v3461, %v3476
        %v3479 = vunpack.c.l.s4 1966171168
        %v3480 = vunpack.c.0.s8 %v3479
        %v3481 = vlaneseq
        %v3482 = vshrl.u32 %v3481, 7
        %v3483 = vsub.s32 %v3480, %v3482
        %v3484 = vrot.slane %v3462, %v3483
        %v3486 = vunpack.c.l.s4 1966171168
        %v3487 = vunpack.c.0.s8 %v3486
        %v3488 = vlaneseq
        %v3489 = vshrl.u32 %v3488, 7
        %v3490 = vsub.s32 %v3487, %v3489
        %v3491 = vrot.slane %v3463, %v3490
        %v3492 = vcombine.high %v3470, %v3470
        %v3493 = vcombine.high %v3477, %v3477
        %v3494 = vcombine.high %v3484, %v3484
        %v3495 = vcombine.high %v3491, %v3491
        %v3496 = vcombine.high %v3444, %v3444
        %v3498 = vunpack.c.l.s4 1966171168
        %v3499 = vunpack.c.0.s8 %v3498
        %v3500 = vlaneseq
        %v3501 = vshrl.u32 %v3500, 7
        %v3502 = vsub.s32 %v3499, %v3501
        %v3503 = vrot.slane %v3444, %v3502
        %v3505 = vunpack.c.l.s4 1966171168
        %v3506 = vunpack.c.0.s8 %v3505
        %v3507 = vlaneseq
        %v3508 = vshrl.u32 %v3507, 7
        %v3509 = vsub.s32 %v3506, %v3508
        %v3510 = vrot.slane %v3496, %v3509
        %v3511 = vcombine.high %v3503, %v3503
        %v3512 = vcombine.high %v3510, %v3510
        %v3514 = vunpack.c.l.s4 1966171168
        %v3515 = vunpack.c.0.s8 %v3514
        %v3516 = vlaneseq
        %v3517 = vshrl.u32 %v3516, 7
        %v3518 = vsub.s32 %v3515, %v3517
        %v3519 = vrot.slane %v3503, %v3518
        %v3521 = vunpack.c.l.s4 1966171168
        %v3522 = vunpack.c.0.s8 %v3521
        %v3523 = vlaneseq
        %v3524 = vshrl.u32 %v3523, 7
        %v3525 = vsub.s32 %v3522, %v3524
        %v3526 = vrot.slane %v3510, %v3525
        %v3528 = vunpack.c.l.s4 1966171168
        %v3529 = vunpack.c.0.s8 %v3528
        %v3530 = vlaneseq
        %v3531 = vshrl.u32 %v3530, 7
        %v3532 = vsub.s32 %v3529, %v3531
        %v3533 = vrot.slane %v3511, %v3532
        %v3535 = vunpack.c.l.s4 1966171168
        %v3536 = vunpack.c.0.s8 %v3535
        %v3537 = vlaneseq
        %v3538 = vshrl.u32 %v3537, 7
        %v3539 = vsub.s32 %v3536, %v3538
        %v3540 = vrot.slane %v3512, %v3539
        %v3541 = vcombine.high %v3519, %v3519
        %v3542 = vcombine.high %v3526, %v3526
        %v3543 = vcombine.high %v3533, %v3533
        %v3544 = vcombine.high %v3540, %v3540
        %3561 = vst.msk [vmem:[#allocation9 + $0x5] sm:$0x1] %vm1610, %v3470
        %3562 = vst.msk [vmem:[#allocation9 + $0xd] sm:$0x1] %vm1610, %v3484
        %3563 = vst.msk [vmem:[#allocation9 + $0x15] sm:$0x1] %vm1610, %v3492
        %3564 = vst.msk [vmem:[#allocation9 + $0x1d] sm:$0x1] %vm1610, %v3494
        %3565 = vst.msk [vmem:[#allocation9 + $0x25] sm:$0x1] %vm1610, %v3477
        %3566 = vst.msk [vmem:[#allocation9 + $0x2d] sm:$0x1] %vm1610, %v3491
        %3567 = vst.msk [vmem:[#allocation9 + $0x35] sm:$0x1] %vm1610, %v3493
        %3568 = vst.msk [vmem:[#allocation9 + $0x3d] sm:$0x1] %vm1610, %v3495
        %3569 = vst.msk [vmem:[#allocation9 + $0x45] sm:$0x1] %vm1610, %v3519
        %3570 = vst.msk [vmem:[#allocation9 + $0x4d] sm:$0x1] %vm1610, %v3533
        %3571 = vst.msk [vmem:[#allocation9 + $0x55] sm:$0x1] %vm1610, %v3541
        %3572 = vst.msk [vmem:[#allocation9 + $0x5d] sm:$0x1] %vm1610, %v3543
        %3573 = vst.msk [vmem:[#allocation9 + $0x65] sm:$0x1] %vm1610, %v3526
        %3574 = vst.msk [vmem:[#allocation9 + $0x6d] sm:$0x1] %vm1610, %v3540
        %3575 = vst.msk [vmem:[#allocation9 + $0x75] sm:$0x1] %vm1610, %v3542
        %3576 = vst.msk [vmem:[#allocation9 + $0x7d] sm:$0x1] %vm1610, %v3544
        %v3577 = vlaneseq
        %v3578 = vshrl.u32 %v3577, 7
        %v3579 = vsub.s32 6, %v3578
        %v3580 = vrot.slane %v1542, %v3579
        %v3581 = vmul.f32 %v1540, %v3580
        %v3582 = vmul.f32 %v1541, %v3580
        %v3583 = vmul.f32 %v3581, 1.442695
        %v3584 = vpow.pop %v3583
        %v3585 = vmul.f32 %v3582, 1.442695
        %v3586 = vpow.pop %v3585
        %v3587 = vmul.f32 %v3584, %v3443
        %v3588 = vmul.f32 %v3586, %v3444
        %s3589 = scalar_lea.vmem [#allocation8], 96
        %v3590 = vld [vmem:[%s3589] sm:$0xff]
        %v3591 = vld [vmem:[%s3589 + $0x8] sm:$0xff]
        %v3592 = vadd.f32 %v3587, %v3590
        %v3593 = vadd.f32 %v3588, %v3591
        %v3596 = vcombine.high %v3592, %v3592
        %v3598 = vunpack.c.l.s4 1966171168
        %v3599 = vunpack.c.0.s8 %v3598
        %v3600 = vlaneseq
        %v3601 = vshrl.u32 %v3600, 7
        %v3602 = vsub.s32 %v3599, %v3601
        %v3603 = vrot.slane %v3592, %v3602
        %v3605 = vunpack.c.l.s4 1966171168
        %v3606 = vunpack.c.0.s8 %v3605
        %v3607 = vlaneseq
        %v3608 = vshrl.u32 %v3607, 7
        %v3609 = vsub.s32 %v3606, %v3608
        %v3610 = vrot.slane %v3596, %v3609
        %v3611 = vcombine.high %v3603, %v3603
        %v3612 = vcombine.high %v3610, %v3610
        %v3614 = vunpack.c.l.s4 1966171168
        %v3615 = vunpack.c.0.s8 %v3614
        %v3616 = vlaneseq
        %v3617 = vshrl.u32 %v3616, 7
        %v3618 = vsub.s32 %v3615, %v3617
        %v3619 = vrot.slane %v3603, %v3618
        %v3621 = vunpack.c.l.s4 1966171168
        %v3622 = vunpack.c.0.s8 %v3621
        %v3623 = vlaneseq
        %v3624 = vshrl.u32 %v3623, 7
        %v3625 = vsub.s32 %v3622, %v3624
        %v3626 = vrot.slane %v3610, %v3625
        %v3628 = vunpack.c.l.s4 1966171168
        %v3629 = vunpack.c.0.s8 %v3628
        %v3630 = vlaneseq
        %v3631 = vshrl.u32 %v3630, 7
        %v3632 = vsub.s32 %v3629, %v3631
        %v3633 = vrot.slane %v3611, %v3632
        %v3635 = vunpack.c.l.s4 1966171168
        %v3636 = vunpack.c.0.s8 %v3635
        %v3637 = vlaneseq
        %v3638 = vshrl.u32 %v3637, 7
        %v3639 = vsub.s32 %v3636, %v3638
        %v3640 = vrot.slane %v3612, %v3639
        %v3641 = vcombine.high %v3619, %v3619
        %v3642 = vcombine.high %v3626, %v3626
        %v3643 = vcombine.high %v3633, %v3633
        %v3644 = vcombine.high %v3640, %v3640
        %v3645 = vcombine.high %v3593, %v3593
        %v3647 = vunpack.c.l.s4 1966171168
        %v3648 = vunpack.c.0.s8 %v3647
        %v3649 = vlaneseq
        %v3650 = vshrl.u32 %v3649, 7
        %v3651 = vsub.s32 %v3648, %v3650
        %v3652 = vrot.slane %v3593, %v3651
        %v3654 = vunpack.c.l.s4 1966171168
        %v3655 = vunpack.c.0.s8 %v3654
        %v3656 = vlaneseq
        %v3657 = vshrl.u32 %v3656, 7
        %v3658 = vsub.s32 %v3655, %v3657
        %v3659 = vrot.slane %v3645, %v3658
        %v3660 = vcombine.high %v3652, %v3652
        %v3661 = vcombine.high %v3659, %v3659
        %v3663 = vunpack.c.l.s4 1966171168
        %v3664 = vunpack.c.0.s8 %v3663
        %v3665 = vlaneseq
        %v3666 = vshrl.u32 %v3665, 7
        %v3667 = vsub.s32 %v3664, %v3666
        %v3668 = vrot.slane %v3652, %v3667
        %v3670 = vunpack.c.l.s4 1966171168
        %v3671 = vunpack.c.0.s8 %v3670
        %v3672 = vlaneseq
        %v3673 = vshrl.u32 %v3672, 7
        %v3674 = vsub.s32 %v3671, %v3673
        %v3675 = vrot.slane %v3659, %v3674
        %v3677 = vunpack.c.l.s4 1966171168
        %v3678 = vunpack.c.0.s8 %v3677
        %v3679 = vlaneseq
        %v3680 = vshrl.u32 %v3679, 7
        %v3681 = vsub.s32 %v3678, %v3680
        %v3682 = vrot.slane %v3660, %v3681
        %v3684 = vunpack.c.l.s4 1966171168
        %v3685 = vunpack.c.0.s8 %v3684
        %v3686 = vlaneseq
        %v3687 = vshrl.u32 %v3686, 7
        %v3688 = vsub.s32 %v3685, %v3687
        %v3689 = vrot.slane %v3661, %v3688
        %v3690 = vcombine.high %v3668, %v3668
        %v3691 = vcombine.high %v3675, %v3675
        %v3692 = vcombine.high %v3682, %v3682
        %v3693 = vcombine.high %v3689, %v3689
        %3710 = vst.msk [vmem:[#allocation9 + $0x6] sm:$0x1] %vm1610, %v3619
        %3711 = vst.msk [vmem:[#allocation9 + $0xe] sm:$0x1] %vm1610, %v3633
        %3712 = vst.msk [vmem:[#allocation9 + $0x16] sm:$0x1] %vm1610, %v3641
        %3713 = vst.msk [vmem:[#allocation9 + $0x1e] sm:$0x1] %vm1610, %v3643
        %3714 = vst.msk [vmem:[#allocation9 + $0x26] sm:$0x1] %vm1610, %v3626
        %3715 = vst.msk [vmem:[#allocation9 + $0x2e] sm:$0x1] %vm1610, %v3640
        %3716 = vst.msk [vmem:[#allocation9 + $0x36] sm:$0x1] %vm1610, %v3642
        %3717 = vst.msk [vmem:[#allocation9 + $0x3e] sm:$0x1] %vm1610, %v3644
        %3718 = vst.msk [vmem:[#allocation9 + $0x46] sm:$0x1] %vm1610, %v3668
        %3719 = vst.msk [vmem:[#allocation9 + $0x4e] sm:$0x1] %vm1610, %v3682
        %3720 = vst.msk [vmem:[#allocation9 + $0x56] sm:$0x1] %vm1610, %v3690
        %3721 = vst.msk [vmem:[#allocation9 + $0x5e] sm:$0x1] %vm1610, %v3692
        %3722 = vst.msk [vmem:[#allocation9 + $0x66] sm:$0x1] %vm1610, %v3675
        %3723 = vst.msk [vmem:[#allocation9 + $0x6e] sm:$0x1] %vm1610, %v3689
        %3724 = vst.msk [vmem:[#allocation9 + $0x76] sm:$0x1] %vm1610, %v3691
        %3725 = vst.msk [vmem:[#allocation9 + $0x7e] sm:$0x1] %vm1610, %v3693
        %v3726 = vlaneseq
        %v3727 = vshrl.u32 %v3726, 7
        %v3728 = vsub.s32 7, %v3727
        %v3729 = vrot.slane %v1542, %v3728
        %v3730 = vmul.f32 %v1540, %v3729
        %v3731 = vmul.f32 %v1541, %v3729
        %v3732 = vmul.f32 %v3730, 1.442695
        %v3733 = vpow.pop %v3732
        %v3734 = vmul.f32 %v3731, 1.442695
        %v3735 = vpow.pop %v3734
        %v3736 = vmul.f32 %v3733, %v3592
        %v3737 = vmul.f32 %v3735, %v3593
        %s3738 = scalar_lea.vmem [#allocation8], 112
        %v3739 = vld [vmem:[%s3738] sm:$0xff]
        %v3740 = vld [vmem:[%s3738 + $0x8] sm:$0xff]
        %v3741 = vadd.f32 %v3736, %v3739
        %v3742 = vadd.f32 %v3737, %v3740
        %v3745 = vcombine.high %v3741, %v3741
        %v3747 = vunpack.c.l.s4 1966171168
        %v3748 = vunpack.c.0.s8 %v3747
        %v3749 = vlaneseq
        %v3750 = vshrl.u32 %v3749, 7
        %v3751 = vsub.s32 %v3748, %v3750
        %v3752 = vrot.slane %v3741, %v3751
        %v3754 = vunpack.c.l.s4 1966171168
        %v3755 = vunpack.c.0.s8 %v3754
        %v3756 = vlaneseq
        %v3757 = vshrl.u32 %v3756, 7
        %v3758 = vsub.s32 %v3755, %v3757
        %v3759 = vrot.slane %v3745, %v3758
        %v3760 = vcombine.high %v3752, %v3752
        %v3761 = vcombine.high %v3759, %v3759
        %v3763 = vunpack.c.l.s4 1966171168
        %v3764 = vunpack.c.0.s8 %v3763
        %v3765 = vlaneseq
        %v3766 = vshrl.u32 %v3765, 7
        %v3767 = vsub.s32 %v3764, %v3766
        %v3768 = vrot.slane %v3752, %v3767
        %v3770 = vunpack.c.l.s4 1966171168
        %v3771 = vunpack.c.0.s8 %v3770
        %v3772 = vlaneseq
        %v3773 = vshrl.u32 %v3772, 7
        %v3774 = vsub.s32 %v3771, %v3773
        %v3775 = vrot.slane %v3759, %v3774
        %v3777 = vunpack.c.l.s4 1966171168
        %v3778 = vunpack.c.0.s8 %v3777
        %v3779 = vlaneseq
        %v3780 = vshrl.u32 %v3779, 7
        %v3781 = vsub.s32 %v3778, %v3780
        %v3782 = vrot.slane %v3760, %v3781
        %v3784 = vunpack.c.l.s4 1966171168
        %v3785 = vunpack.c.0.s8 %v3784
        %v3786 = vlaneseq
        %v3787 = vshrl.u32 %v3786, 7
        %v3788 = vsub.s32 %v3785, %v3787
        %v3789 = vrot.slane %v3761, %v3788
        %v3790 = vcombine.high %v3768, %v3768
        %v3791 = vcombine.high %v3775, %v3775
        %v3792 = vcombine.high %v3782, %v3782
        %v3793 = vcombine.high %v3789, %v3789
        %v3794 = vcombine.high %v3742, %v3742
        %v3796 = vunpack.c.l.s4 1966171168
        %v3797 = vunpack.c.0.s8 %v3796
        %v3798 = vlaneseq
        %v3799 = vshrl.u32 %v3798, 7
        %v3800 = vsub.s32 %v3797, %v3799
        %v3801 = vrot.slane %v3742, %v3800
        %v3803 = vunpack.c.l.s4 1966171168
        %v3804 = vunpack.c.0.s8 %v3803
        %v3805 = vlaneseq
        %v3806 = vshrl.u32 %v3805, 7
        %v3807 = vsub.s32 %v3804, %v3806
        %v3808 = vrot.slane %v3794, %v3807
        %v3809 = vcombine.high %v3801, %v3801
        %v3810 = vcombine.high %v3808, %v3808
        %v3812 = vunpack.c.l.s4 1966171168
        %v3813 = vunpack.c.0.s8 %v3812
        %v3814 = vlaneseq
        %v3815 = vshrl.u32 %v3814, 7
        %v3816 = vsub.s32 %v3813, %v3815
        %v3817 = vrot.slane %v3801, %v3816
        %v3819 = vunpack.c.l.s4 1966171168
        %v3820 = vunpack.c.0.s8 %v3819
        %v3821 = vlaneseq
        %v3822 = vshrl.u32 %v3821, 7
        %v3823 = vsub.s32 %v3820, %v3822
        %v3824 = vrot.slane %v3808, %v3823
        %v3826 = vunpack.c.l.s4 1966171168
        %v3827 = vunpack.c.0.s8 %v3826
        %v3828 = vlaneseq
        %v3829 = vshrl.u32 %v3828, 7
        %v3830 = vsub.s32 %v3827, %v3829
        %v3831 = vrot.slane %v3809, %v3830
        %v3833 = vunpack.c.l.s4 1966171168
        %v3834 = vunpack.c.0.s8 %v3833
        %v3835 = vlaneseq
        %v3836 = vshrl.u32 %v3835, 7
        %v3837 = vsub.s32 %v3834, %v3836
        %v3838 = vrot.slane %v3810, %v3837
        %v3839 = vcombine.high %v3817, %v3817
        %v3840 = vcombine.high %v3824, %v3824
        %v3841 = vcombine.high %v3831, %v3831
        %v3842 = vcombine.high %v3838, %v3838
        %3859 = vst.msk [vmem:[#allocation9 + $0x7] sm:$0x1] %vm1610, %v3768
        %3860 = vst.msk [vmem:[#allocation9 + $0xf] sm:$0x1] %vm1610, %v3782
        %3861 = vst.msk [vmem:[#allocation9 + $0x17] sm:$0x1] %vm1610, %v3790
        %3862 = vst.msk [vmem:[#allocation9 + $0x1f] sm:$0x1] %vm1610, %v3792
        %3863 = vst.msk [vmem:[#allocation9 + $0x27] sm:$0x1] %vm1610, %v3775
        %3864 = vst.msk [vmem:[#allocation9 + $0x2f] sm:$0x1] %vm1610, %v3789
        %3865 = vst.msk [vmem:[#allocation9 + $0x37] sm:$0x1] %vm1610, %v3791
        %3866 = vst.msk [vmem:[#allocation9 + $0x3f] sm:$0x1] %vm1610, %v3793
        %3867 = vst.msk [vmem:[#allocation9 + $0x47] sm:$0x1] %vm1610, %v3817
        %3868 = vst.msk [vmem:[#allocation9 + $0x4f] sm:$0x1] %vm1610, %v3831
        %3869 = vst.msk [vmem:[#allocation9 + $0x57] sm:$0x1] %vm1610, %v3839
        %3870 = vst.msk [vmem:[#allocation9 + $0x5f] sm:$0x1] %vm1610, %v3841
        %3871 = vst.msk [vmem:[#allocation9 + $0x67] sm:$0x1] %vm1610, %v3824
        %3872 = vst.msk [vmem:[#allocation9 + $0x6f] sm:$0x1] %vm1610, %v3838
        %3873 = vst.msk [vmem:[#allocation9 + $0x77] sm:$0x1] %vm1610, %v3840
        %3874 = vst.msk [vmem:[#allocation9 + $0x7f] sm:$0x1] %vm1610, %v3842
        %v3875 = vld [vmem:[#allocation9] sm:$0xff]
        %3876 = vset.pattern.permute.xlu0 16
        %3877 = vperm.xlu0 %3876, %v1544
        %v3878 = vpop.permute.xlu0 %3877
        %v3880 = vmul.f32 %v3878, %v3875
        %v3881 = vadd.f32 %v3880, 0.0
        %s3882 = scalar_lea.vmem [#allocation9], 8
        %v3883 = vld [vmem:[%s3882] sm:$0xff]
        %3884 = vset.pattern.permute.xlu0 17
        %3885 = vperm.xlu0 %3884, %v1544
        %v3886 = vpop.permute.xlu0 %3885
        %v3888 = vmul.f32 %v3886, %v3883
        %v3889 = vadd.f32 %v3881, %v3888
        %s3890 = scalar_lea.vmem [#allocation9], 16
        %v3891 = vld [vmem:[%s3890] sm:$0xff]
        %3892 = vset.pattern.permute.xlu0 18
        %3893 = vperm.xlu0 %3892, %v1544
        %v3894 = vpop.permute.xlu0 %3893
        %v3896 = vmul.f32 %v3894, %v3891
        %v3897 = vadd.f32 %v3889, %v3896
        %s3898 = scalar_lea.vmem [#allocation9], 24
        %v3899 = vld [vmem:[%s3898] sm:$0xff]
        %3900 = vset.pattern.permute.xlu0 19
        %3901 = vperm.xlu0 %3900, %v1544
        %v3902 = vpop.permute.xlu0 %3901
        %v3904 = vmul.f32 %v3902, %v3899
        %v3905 = vadd.f32 %v3897, %v3904
        %s3906 = scalar_lea.vmem [#allocation9], 32
        %v3907 = vld [vmem:[%s3906] sm:$0xff]
        %3908 = vset.pattern.permute.xlu0 20
        %3909 = vperm.xlu0 %3908, %v1544
        %v3910 = vpop.permute.xlu0 %3909
        %v3912 = vmul.f32 %v3910, %v3907
        %v3913 = vadd.f32 %v3905, %v3912
        %s3914 = scalar_lea.vmem [#allocation9], 40
        %v3915 = vld [vmem:[%s3914] sm:$0xff]
        %3916 = vset.pattern.permute.xlu0 21
        %3917 = vperm.xlu0 %3916, %v1544
        %v3918 = vpop.permute.xlu0 %3917
        %v3920 = vmul.f32 %v3918, %v3915
        %v3921 = vadd.f32 %v3913, %v3920
        %s3922 = scalar_lea.vmem [#allocation9], 48
        %v3923 = vld [vmem:[%s3922] sm:$0xff]
        %3924 = vset.pattern.permute.xlu0 22
        %3925 = vperm.xlu0 %3924, %v1544
        %v3926 = vpop.permute.xlu0 %3925
        %v3928 = vmul.f32 %v3926, %v3923
        %v3929 = vadd.f32 %v3921, %v3928
        %s3930 = scalar_lea.vmem [#allocation9], 56
        %v3931 = vld [vmem:[%s3930] sm:$0xff]
        %3932 = vset.pattern.permute.xlu0 23
        %3933 = vperm.xlu0 %3932, %v1544
        %v3934 = vpop.permute.xlu0 %3933
        %v3936 = vmul.f32 %v3934, %v3931
        %v3937 = vadd.f32 %v3929, %v3936
        %s3938 = scalar_lea.vmem [#allocation9], 64
        %v3939 = vld [vmem:[%s3938] sm:$0xff]
        %3940 = vset.pattern.permute.xlu0 24
        %3941 = vperm.xlu0 %3940, %v1544
        %v3942 = vpop.permute.xlu0 %3941
        %v3944 = vmul.f32 %v3942, %v3939
        %v3945 = vadd.f32 %v3937, %v3944
        %s3946 = scalar_lea.vmem [#allocation9], 72
        %v3947 = vld [vmem:[%s3946] sm:$0xff]
        %3948 = vset.pattern.permute.xlu0 25
        %3949 = vperm.xlu0 %3948, %v1544
        %v3950 = vpop.permute.xlu0 %3949
        %v3952 = vmul.f32 %v3950, %v3947
        %v3953 = vadd.f32 %v3945, %v3952
        %s3954 = scalar_lea.vmem [#allocation9], 80
        %v3955 = vld [vmem:[%s3954] sm:$0xff]
        %3956 = vset.pattern.permute.xlu0 26
        %3957 = vperm.xlu0 %3956, %v1544
        %v3958 = vpop.permute.xlu0 %3957
        %v3960 = vmul.f32 %v3958, %v3955
        %v3961 = vadd.f32 %v3953, %v3960
        %s3962 = scalar_lea.vmem [#allocation9], 88
        %v3963 = vld [vmem:[%s3962] sm:$0xff]
        %3964 = vset.pattern.permute.xlu0 27
        %3965 = vperm.xlu0 %3964, %v1544
        %v3966 = vpop.permute.xlu0 %3965
        %v3968 = vmul.f32 %v3966, %v3963
        %v3969 = vadd.f32 %v3961, %v3968
        %s3970 = scalar_lea.vmem [#allocation9], 96
        %v3971 = vld [vmem:[%s3970] sm:$0xff]
        %3972 = vset.pattern.permute.xlu0 28
        %3973 = vperm.xlu0 %3972, %v1544
        %v3974 = vpop.permute.xlu0 %3973
        %v3976 = vmul.f32 %v3974, %v3971
        %v3977 = vadd.f32 %v3969, %v3976
        %s3978 = scalar_lea.vmem [#allocation9], 104
        %v3979 = vld [vmem:[%s3978] sm:$0xff]
        %3980 = vset.pattern.permute.xlu0 29
        %3981 = vperm.xlu0 %3980, %v1544
        %v3982 = vpop.permute.xlu0 %3981
        %v3984 = vmul.f32 %v3982, %v3979
        %v3985 = vadd.f32 %v3977, %v3984
        %s3986 = scalar_lea.vmem [#allocation9], 112
        %v3987 = vld [vmem:[%s3986] sm:$0xff]
        %3988 = vset.pattern.permute.xlu0 30
        %3989 = vperm.xlu0 %3988, %v1544
        %v3990 = vpop.permute.xlu0 %3989
        %v3992 = vmul.f32 %v3990, %v3987
        %v3993 = vadd.f32 %v3985, %v3992
        %s3994 = scalar_lea.vmem [#allocation9], 120
        %v3995 = vld [vmem:[%s3994] sm:$0xff]
        %3996 = vset.pattern.permute.xlu0 31
        %3997 = vperm.xlu0 %3996, %v1544
        %v3998 = vpop.permute.xlu0 %3997
        %v4000 = vmul.f32 %v3998, %v3995
        %v4001 = vadd.f32 %v3993, %v4000
        %4002 = vst.msk [vmem:[#allocation7] sm:$0xff] %vm1293, %v4001
        %v4003 = vld [vmem:[#allocation7] sm:$0xff]
        %v4004 = vld [vmem:[#allocation3] sm:$0xff]
        %v4005 = vld [vmem:[%s889] sm:$0x1]
        %v4007 = vlaneseq
        %v4008 = vshrl.u32 %v4007, 7
        %v4009 = vsub.s32 0, %v4008
        %v4010 = vrot.slane %v4005, %v4009
        %v4012 = vmul.f32 %v4004, %v4010
        %v4013 = vadd.f32 %v4003, %v4012
        %v4014 = vld [vmem:[#allocation6] sm:$0xff]
        %v4015 = vmul.f32 %v4013, %v4014
        %v4016 = vld [vmem:[%s898] sm:$0xff]
        %v4017 = vld [vmem:[%s898 + $0x8] sm:$0xff]
        %v4018 = vld [vmem:[%s898 + $0x10] sm:$0xff]
        %v4019 = vld [vmem:[%s898 + $0x18] sm:$0xff]
        %v4020 = vld [vmem:[%s898 + $0x20] sm:$0xff]
        %v4021 = vld [vmem:[%s898 + $0x28] sm:$0xff]
        %v4022 = vld [vmem:[%s898 + $0x30] sm:$0xff]
        %v4023 = vld [vmem:[%s898 + $0x38] sm:$0xff]
        %v4025 = vsel %vm1293, %v4015, 0
        %4027 = vmatprep.subr.mxu0 0.0
        %4028 = vmatpush1.msra.mxu0 %v4016
        %4029 = vmatprep.subr.mxu0 0.0
        %4030 = vmatpush1.msra.mxu0 %v4017
        %4031 = vmatprep.subr.mxu0 0.0
        %4032 = vmatpush1.msra.mxu0 %v4018
        %4033 = vmatprep.subr.mxu0 0.0
        %4034 = vmatpush1.msra.mxu0 %v4019
        %4035 = vmatprep.subr.mxu0 0.0
        %4036 = vmatpush1.msra.mxu0 %v4020
        %4037 = vmatprep.subr.mxu0 0.0
        %4038 = vmatpush1.msra.mxu0 %v4021
        %4039 = vmatprep.subr.mxu0 0.0
        %4040 = vmatpush1.msra.mxu0 %v4022
        %4041 = vmatprep.subr.mxu0 0.0
        %4042 = vmatpush1.msra.mxu0 %v4023
        %4043 = vmatprep.subr.mxu0 0.0
        %4044 = vmatpush1.msra.mxu0 0.0
        %4045 = vmatprep.subr.mxu0 0.0
        %4046 = vmatpush1.msra.mxu0 0.0
        %4047 = vmatprep.subr.mxu0 0.0
        %4048 = vmatpush1.msra.mxu0 0.0
        %4049 = vmatprep.subr.mxu0 0.0
        %4050 = vmatpush1.msra.mxu0 0.0
        %4051 = vmatprep.subr.mxu0 0.0
        %4052 = vmatpush1.msra.mxu0 0.0
        %4053 = vmatprep.subr.mxu0 0.0
        %4054 = vmatpush1.msra.mxu0 0.0
        %4055 = vmatprep.subr.mxu0 0.0
        %4056 = vmatpush1.msra.mxu0 0.0
        %4057 = vmatprep.subr.mxu0 0.0
        %4058 = vmatpush1.msra.mxu0 0.0
        %4059 = vmatprep.subr.mxu0 0.0
        %4060 = vmatpush1.msra.mxu0 0.0
        %4061 = vmatprep.subr.mxu0 0.0
        %4062 = vmatpush1.msra.mxu0 0.0
        %4063 = vmatprep.subr.mxu0 0.0
        %4064 = vmatpush1.msra.mxu0 0.0
        %4065 = vmatprep.subr.mxu0 0.0
        %4066 = vmatpush1.msra.mxu0 0.0
        %4067 = vmatprep.subr.mxu0 0.0
        %4068 = vmatpush1.msra.mxu0 0.0
        %4069 = vmatprep.subr.mxu0 0.0
        %4070 = vmatpush1.msra.mxu0 0.0
        %4071 = vmatprep.subr.mxu0 0.0
        %4072 = vmatpush1.msra.mxu0 0.0
        %4073 = vmatprep.subr.mxu0 0.0
        %4074 = vmatpush1.msra.mxu0 0.0
        %4075 = vmatprep.subr.mxu0 0.0
        %4076 = vmatpush1.msra.mxu0 0.0
        %4077 = vmatprep.subr.mxu0 0.0
        %4078 = vmatpush1.msra.mxu0 0.0
        %4079 = vmatprep.subr.mxu0 0.0
        %4080 = vmatpush1.msra.mxu0 0.0
        %4081 = vmatprep.subr.mxu0 0.0
        %4082 = vmatpush1.msra.mxu0 0.0
        %4083 = vmatprep.subr.mxu0 0.0
        %4084 = vmatpush1.msra.mxu0 0.0
        %4085 = vmatprep.subr.mxu0 0.0
        %4086 = vmatpush1.msra.mxu0 0.0
        %4087 = vmatprep.subr.mxu0 0.0
        %4088 = vmatpush1.msra.mxu0 0.0
        %4089 = vmatprep.subr.mxu0 0.0
        %4090 = vmatpush1.msra.mxu0 0.0
        %4091 = vmatprep.mubr.f32.mxu0 0.0
        %4092 = vmatmul.mubr.f32.gmra.mrb[0].mxu0 %v4025
        %v4093 = vpop.f32.mrb[0].mxu0
        %v4094 = vadd.f32 0.0, %v4093
        %v4095 = vpop.f32.mrb[0].mxu0
        %4096 = vdwg.mxu0
        %4097 = vst.msk [vmem:[%s997] sm:$0xff] %vm1001, %v4094
        %s4098 = sand.u32 %s471, 1
        %s4099 = scalar_lea.sflag [#allocation12], %s4098
        %s4100 = sand.u32 %s471, 1
        %s4101 = smul.addr %s4100, 8
        %s4102 = scalar_lea.vmem [#allocation36], %s4101
        // Predicated region
        $region149: #{bit_mamsleep_forward.2} parent=83 // pred_check
          %p4103 = pneg %p481
        $region150: #{bit_mamsleep_forward.2} parent=83 // pred_check_branch
          %4105 = sbr.rel (%p4103) target = $region152
        $region151: #{bit_mamsleep_forward.2} parent=83 // pred_region
          %s4107 = ssub.s32 128, 128
          %4108 = vsyncadd %s4099, %s4107
          %s4109 = smul.addr %s57, 2
          %s4110 = sadd.s32 %s58, %s4109
          %s4111 = smul.addr %s4110, 128
          %s4112 = scalar_lea.hbm %s16, %s4111
          %s4114 = sshll.u32 %s4102, 4
          %s4115 = int_to_ptr.vmem [resolvable:$true] %s4114
          %4117 = dma.vmem_to_hbm [thread:$0]  %s4115, 128, %s4112, %s4099
        $region152: #{bit_mamsleep_forward.2} parent=83 // pred_fallthru
          _
      $region84: #{bit_mamsleep_forward.2} parent=5 // pred_fallthru
        _
      %p4118 = scmp.le.s32.totalorder 2, %s48
      // Predicated region
      $region153: #{bit_mamsleep_forward.2} parent=5 // pred_check
        %p4119 = pneg %p4118
      $region154: #{bit_mamsleep_forward.2} parent=5 // pred_check_branch
        %4121 = sbr.rel (%p4119) target = $region156
      $region155: #{bit_mamsleep_forward.2} parent=5 // pred_region
        %s4122 = ssub.s32 %s48, 2
        // Predicated region
        $region157: #{bit_mamsleep_forward.2} parent=155 // pred_check
          %p4123 = pneg %p487
        $region158: #{bit_mamsleep_forward.2} parent=155 // pred_check_branch
          %4125 = sbr.rel (%p4123) target = $region160
        $region159: #{bit_mamsleep_forward.2} parent=155 // pred_region
          %s4126 = sand.u32 %s472, 1
          %s4127 = scalar_lea.sflag [#allocation12], %s4126
          %s4128 = sand.u32 %s472, 1
          %s4129 = smul.addr %s4128, 8
          %s4130 = scalar_lea.vmem [#allocation36], %s4129
          %4131 = dma.done %s4127, 128
        $region160: #{bit_mamsleep_forward.2} parent=155 // pred_fallthru
          _
      $region156: #{bit_mamsleep_forward.2} parent=5 // pred_fallthru
        _
    $region6: #{bit_mamsleep_forward.2} parent=1 // loop_footer
      %s52 = sadd.s32 1, %s48
    $region7: #{bit_mamsleep_forward.2} parent=1 // loop_footer_branch
      %47 = sbr.rel target = $region3
    $region8: #{bit_mamsleep_forward.2} parent=1 // loop_exit
      _
    %4132 = vsyncpa [#allocation11], 1
    %s4133 = scalar_lea.sflag [#allocation11], 1
    %4134 = vsyncpa %s4133, 1
    %4135 = vsyncpa [#allocation14], 1
    %4136 = vsyncpa [#allocation17], 1
    %4137 = vsyncpa [#allocation20], 1
    %s4138 = scalar_lea.sflag [#allocation20], 1
    %4139 = vsyncpa %s4138, 1
    %4140 = vsyncpa [#allocation23], 1
    %s4141 = scalar_lea.sflag [#allocation23], 1
    %4142 = vsyncpa %s4141, 1
    %4143 = vsyncpa [#allocation26], 1
    %s4144 = scalar_lea.sflag [#allocation26], 1
    %4145 = vsyncpa %s4144, 1
    %4146 = vsyncpa [#allocation29], 1
    %s4147 = scalar_lea.sflag [#allocation29], 1
    %4148 = vsyncpa %s4147, 1
    %4149 = vsyncpa [#allocation32], 1
    %s4150 = scalar_lea.sflag [#allocation32], 1
    %4151 = vsyncpa %s4150, 1
    %4152 = vsyncpa [#allocation35], 1
    %s4153 = scalar_lea.sflag [#allocation35], 1
    %4154 = vsyncpa %s4153, 1
    %4155 = vsyncpa [#allocation12], 1
    %s4156 = scalar_lea.sflag [#allocation12], 1
    %4157 = vsyncpa %s4156, 1

</llo_original>
